<compile_context>
chip_gen: v5e
topology: v5e:2x2
jax: 0.10.0
libtpu: 0.0.40
codegen_flags: <defaults>
</compile_context>

<pallas_src>
import functools

import numpy as np

import jax
import jax.numpy as jnp
from jax.experimental import pallas as pl
from jax.experimental.pallas import tpu as pltpu


# ----------------------------------------------------------------------------
# Pallas kernels
# ----------------------------------------------------------------------------
def _conv_relu_pool_kernel(x_ref, w_ref, b_ref, ph_ref, pw_ref, o_ref, *, H):
    """Fused 3x3 same-conv + bias + ReLU + 2x2 max-pool for one image.

    x_ref  : (H+2, (W+2)*Cin)       padded input rows, lanes = (w, cin)  [bf16]
    w_ref  : (3, (W+2)*Cin, W*Cout) banded (Toeplitz) conv weights / kh  [bf16]
    b_ref  : (1, W*Cout)            bias tiled across w                  [f32]
    ph_ref : (2, Ho, H)             even/odd row selectors (0/1)         [bf16]
    pw_ref : (2, W*Cout, Lo)        even/odd channel-block selectors     [bf16]
    o_ref  : (Ho, Lo)               pooled output (zero border optionally
                                    baked in by the selectors)           [bf16]
    """
    N = w_ref.shape[2]                          # W * Cout
    acc = jnp.zeros((H, N), jnp.float32)
    for kh in range(3):                         # conv = 3 banded matmuls
        acc = acc + jnp.dot(x_ref[pl.ds(kh, H), :], w_ref[kh],
                            preferred_element_type=jnp.float32)
    y = jnp.maximum(acc + b_ref[...], 0.0).astype(jnp.bfloat16)

    # 2x2 max-pool: max of even/odd row selections, then even/odd col blocks.
    rows = jnp.maximum(
        jnp.dot(ph_ref[0], y, preferred_element_type=jnp.float32),
        jnp.dot(ph_ref[1], y, preferred_element_type=jnp.float32),
    ).astype(jnp.bfloat16)
    out = jnp.maximum(
        jnp.dot(rows, pw_ref[0], preferred_element_type=jnp.float32),
        jnp.dot(rows, pw_ref[1], preferred_element_type=jnp.float32),
    )
    o_ref[...] = out.astype(o_ref.dtype)


def _fc_fused_kernel(x_ref, w1_ref, b1_ref, w2_ref, b2_ref, o_ref):
    """out = relu(x @ w1 + b1) @ w2 + b2 — both FC layers in one kernel."""
    h = jnp.dot(x_ref[...], w1_ref[...], preferred_element_type=jnp.float32)
    h = jnp.maximum(h + b1_ref[...], 0.0).astype(jnp.bfloat16)
    o = jnp.dot(h, w2_ref[...], preferred_element_type=jnp.float32)
    o_ref[...] = (o + b2_ref[...]).astype(o_ref.dtype)


# ----------------------------------------------------------------------------
# pallas_call wrappers
# ----------------------------------------------------------------------------
def conv_relu_pool(x, tw, b_row, ph, pw, *, H):
    """x: (B, H+2, (W+2)*Cin) bf16 -> (B, Ho, Lo) bf16 in one pallas_call."""
    B, Hin, Lin = x.shape
    N = tw.shape[2]
    Ho, Lo = ph.shape[1], pw.shape[2]
    flops = 2 * B * (3 * H * Lin * N + 2 * Ho * H * N + 2 * Ho * N * Lo)
    bytes_accessed = (x.size * 2 + tw.size * 2 + ph.size * 2 + pw.size * 2
                      + b_row.size * 4 + B * Ho * Lo * 2)
    kernel = functools.partial(_conv_relu_pool_kernel, H=H)
    return pl.pallas_call(
        kernel,
        grid=(B,),
        out_shape=jax.ShapeDtypeStruct((B, Ho, Lo), jnp.bfloat16),
        in_specs=[
            pl.BlockSpec((None, Hin, Lin), lambda b: (b, 0, 0)),
            pl.BlockSpec(tw.shape, lambda b: (0, 0, 0)),      # resident weights
            pl.BlockSpec(b_row.shape, lambda b: (0, 0)),      # resident bias
            pl.BlockSpec(ph.shape, lambda b: (0, 0, 0)),      # resident selectors
            pl.BlockSpec(pw.shape, lambda b: (0, 0, 0)),
        ],
        out_specs=pl.BlockSpec((None, Ho, Lo), lambda b: (b, 0, 0)),
        compiler_params=pltpu.CompilerParams(
            dimension_semantics=("parallel",),
            vmem_limit_bytes=32 * 1024 * 1024,
        ),
        cost_estimate=pl.CostEstimate(flops=flops, transcendentals=0,
                                      bytes_accessed=bytes_accessed),
    )(x, tw, b_row, ph, pw)


def fc_fused(x, w1, b1_row, w2, b2_row, *, tile_m=512):
    """(B,K) bf16 -> (B,N2) f32; fc1+ReLU+fc2 fused, M tiled, weights resident."""
    B, K = x.shape
    N1 = w1.shape[1]
    N2 = w2.shape[1]
    tm = min(tile_m, B)
    flops = 2 * B * (K * N1 + N1 * N2)
    bytes_accessed = x.size * 2 + w1.size * 2 + w2.size * 2 + B * N2 * 4
    return pl.pallas_call(
        _fc_fused_kernel,
        grid=(pl.cdiv(B, tm),),
        out_shape=jax.ShapeDtypeStruct((B, N2), jnp.float32),
        in_specs=[
            pl.BlockSpec((tm, K), lambda i: (i, 0)),
            pl.BlockSpec((K, N1), lambda i: (0, 0)),          # resident
            pl.BlockSpec((1, N1), lambda i: (0, 0)),
            pl.BlockSpec((N1, N2), lambda i: (0, 0)),         # resident
            pl.BlockSpec((1, N2), lambda i: (0, 0)),
        ],
        out_specs=pl.BlockSpec((tm, N2), lambda i: (i, 0)),
        compiler_params=pltpu.CompilerParams(
            dimension_semantics=("parallel",),
            vmem_limit_bytes=32 * 1024 * 1024,
        ),
        cost_estimate=pl.CostEstimate(flops=flops, transcendentals=0,
                                      bytes_accessed=bytes_accessed),
    )(x, w1, b1_row, w2, b2_row)


# ----------------------------------------------------------------------------
# One-time parameter preparation (outside jit): PyTorch layout -> kernel layout
# ----------------------------------------------------------------------------
def _build_conv_toeplitz(w_oihw, W):
    """PyTorch (Cout, Cin, 3, 3) -> banded (3, (W+2)*Cin, W*Cout) bf16 so that
    conv output row h (lanes = (w, cout)) = sum_kh x_pad[h+kh, :] @ T[kh]."""
    w = np.asarray(w_oihw, np.float32)
    Cout, Cin, KH, KW = w.shape
    T = np.zeros((KH, (W + 2) * Cin, W * Cout), np.float32)
    for kh in range(KH):
        for kw in range(KW):
            blk = w[:, :, kh, kw].T                     # (Cin, Cout)
            for ww in range(W):
                r0 = (ww + kw) * Cin
                c0 = ww * Cout
                T[kh, r0:r0 + Cin, c0:c0 + Cout] = blk
    return jnp.asarray(T, jnp.bfloat16)


def _build_pool_selectors(H, W, Cout, pad_out):
    """0/1 matrices implementing the 2x2 max-pool as selection matmuls.
    If pad_out, a zero border is emitted so the result is directly the next
    conv's zero-padded input."""
    Ho, Wo = H // 2, W // 2
    pr = 1 if pad_out else 0
    ph = np.zeros((2, Ho + 2 * pr, H), np.float32)
    for j in range(Ho):
        ph[0, j + pr, 2 * j] = 1.0
        ph[1, j + pr, 2 * j + 1] = 1.0
    pw = np.zeros((2, W * Cout, (Wo + 2 * pr) * Cout), np.float32)
    for j in range(Wo):
        for c in range(Cout):
            pw[0, (2 * j) * Cout + c, (j + pr) * Cout + c] = 1.0
            pw[1, (2 * j + 1) * Cout + c, (j + pr) * Cout + c] = 1.0
    return jnp.asarray(ph, jnp.bfloat16), jnp.asarray(pw, jnp.bfloat16)


def _flatten_perm(Ho, Wo, C):
    """Map our (h, w, c) flatten index -> PyTorch (c, h, w) flatten index."""
    t = np.empty(Ho * Wo * C, np.int64)
    for h in range(Ho):
        for w in range(Wo):
            for c in range(C):
                t[h * Wo * C + w * C + c] = c * Ho * Wo + h * Wo + w
    return t


def prepare_params(params):
    kp = {}
    # conv1: 28x28, 1->16, output carries the zero border for conv2.
    kp["t1"] = _build_conv_toeplitz(params["w1"], W=28)
    kp["b1r"] = jnp.tile(jnp.asarray(params["b1"], jnp.float32), 28).reshape(1, -1)
    kp["ph1"], kp["pw1"] = _build_pool_selectors(28, 28, 16, pad_out=True)
    # conv2: 14x14, 16->32, unpadded output.
    kp["t2"] = _build_conv_toeplitz(params["w2"], W=14)
    kp["b2r"] = jnp.tile(jnp.asarray(params["b2"], jnp.float32), 14).reshape(1, -1)
    kp["ph2"], kp["pw2"] = _build_pool_selectors(14, 14, 32, pad_out=False)
    # FC: bake the PyTorch NCHW-flatten permutation into fc1's weight rows.
    perm = _flatten_perm(7, 7, 32)
    kp["wfc1"] = jnp.asarray(np.asarray(params["wfc1"], np.float32)[perm, :],
                             jnp.bfloat16)
    kp["b1fc"] = jnp.asarray(params["bfc1"], jnp.float32).reshape(1, -1)
    kp["wfc2"] = jnp.asarray(params["wfc2"], jnp.bfloat16)
    kp["b2fc"] = jnp.asarray(params["bfc2"], jnp.float32).reshape(1, -1)
    return kp


# ----------------------------------------------------------------------------
# Parameters (PyTorch-equivalent layouts) and forward pass
# ----------------------------------------------------------------------------
def init_params(key):
    ks = jax.random.split(key, 8)
    scale = 0.05
    return {
        "w1": scale * jax.random.normal(ks[0], (16, 1, 3, 3), jnp.float32),
        "b1": scale * jax.random.normal(ks[1], (16,), jnp.float32),
        "w2": scale * jax.random.normal(ks[2], (32, 16, 3, 3), jnp.float32),
        "b2": scale * jax.random.normal(ks[3], (32,), jnp.float32),
        # FC weights stored as (in, out); rows in PyTorch (c, h, w) flatten order.
        "wfc1": scale * jax.random.normal(ks[4], (7 * 7 * 32, 64), jnp.float32),
        "bfc1": scale * jax.random.normal(ks[5], (64,), jnp.float32),
        "wfc2": scale * jax.random.normal(ks[6], (64, 3), jnp.float32),
        "bfc2": scale * jax.random.normal(ks[7], (3,), jnp.float32),
    }


def mycnn_forward(x_nchw, kp):
    B = x_nchw.shape[0]
    # NCHW (B,1,28,28) -> NHWC -> zero-pad -> (B, 30, 30*Cin) lane layout.
    x = jnp.transpose(x_nchw, (0, 2, 3, 1)).astype(jnp.bfloat16)
    x = jnp.pad(x, ((0, 0), (1, 1), (1, 1), (0, 0)))
    x = x.reshape(B, 30, 30 * 1)

    # conv1 + ReLU + pool -> (B, 16, 16*16): already conv2's padded input.
    y1 = conv_relu_pool(x, kp["t1"], kp["b1r"], kp["ph1"], kp["pw1"], H=28)
    # conv2 + ReLU + pool -> (B, 7, 7*32).
    y2 = conv_relu_pool(y1, kp["t2"], kp["b2r"], kp["ph2"], kp["pw2"], H=14)

    # Flatten ((h, w, c) order; fc1 rows were pre-permuted to match PyTorch).
    flat = y2.reshape(B, 7 * 7 * 32)
    return fc_fused(flat, kp["wfc1"], kp["b1fc"], kp["wfc2"], kp["b2fc"])


if __name__ == "__main__":
    key = jax.random.PRNGKey(0)
    k_params, k_x = jax.random.split(key)
    params = init_params(k_params)
    kparams = prepare_params(params)          # one-time layout prep (not jitted)
    # 28x28 single-channel input is required by the module (7*7*32 after pools).
    x = jax.random.normal(k_x, (2, 1, 28, 28), jnp.float32)

    fwd = jax.jit(mycnn_forward)
    out = fwd(x, kparams)
    jax.block_until_ready(out)
    assert out.shape == (2, 3) and out.dtype == jnp.float32
    print("KERNEL_OK")
</pallas_src>

<mosaic_0001>
module attributes {stable_mosaic.version = 11 : i64} {
  func.func @_conv_relu_pool_kernel(%arg0: i32, %arg1: memref<1x30x30xbf16, #tpu.memory_space<vmem>>, %arg2: memref<3x30x448xbf16, #tpu.memory_space<vmem>>, %arg3: memref<1x448xf32, #tpu.memory_space<vmem>>, %arg4: memref<2x16x28xbf16, #tpu.memory_space<vmem>>, %arg5: memref<2x448x256xbf16, #tpu.memory_space<vmem>>, %arg6: memref<1x16x256xbf16, #tpu.memory_space<vmem>>) attributes {dimension_semantics = [#tpu.dimension_semantics<parallel>], iteration_bounds = array<i64: 2>, scalar_prefetch = 0 : i64, scratch_operands = 0 : i64, tpu.core_type = #tpu.core_type<tc>, window_params = [{transform_indices = @transform_0, window_bounds = array<i64: 1, 30, 30>}, {pipeline_mode = #tpu.pipeline_mode<synchronous>, transform_indices = @transform_1, window_bounds = array<i64: 3, 30, 448>}, {pipeline_mode = #tpu.pipeline_mode<synchronous>, transform_indices = @transform_2, window_bounds = array<i64: 1, 448>}, {pipeline_mode = #tpu.pipeline_mode<synchronous>, transform_indices = @transform_3, window_bounds = array<i64: 2, 16, 28>}, {pipeline_mode = #tpu.pipeline_mode<synchronous>, transform_indices = @transform_4, window_bounds = array<i64: 2, 448, 256>}, {transform_indices = @transform_5, window_bounds = array<i64: 1, 16, 256>}]} {
    %cst = arith.constant 0.000000e+00 : f32
    %0 = vector.broadcast %cst : f32 to vector<28x448xf32>
    %c0 = arith.constant 0 : index
    %c0_0 = arith.constant 0 : index
    %c0_1 = arith.constant 0 : index
    %1 = vector.load %arg1[%c0, %c0_0, %c0_1] : memref<1x30x30xbf16, #tpu.memory_space<vmem>>, vector<1x28x30xbf16>
    %2 = vector.shape_cast %1 : vector<1x28x30xbf16> to vector<28x30xbf16>
    %c0_2 = arith.constant 0 : index
    %c0_3 = arith.constant 0 : index
    %c0_4 = arith.constant 0 : index
    %3 = vector.load %arg2[%c0_2, %c0_3, %c0_4] : memref<3x30x448xbf16, #tpu.memory_space<vmem>>, vector<1x30x448xbf16>
    %4 = vector.shape_cast %3 : vector<1x30x448xbf16> to vector<30x448xbf16>
    %cst_5 = arith.constant dense<0.000000e+00> : vector<28x448xf32>
    %5 = tpu.matmul %2, %4, %cst_5 {dimension_numbers = #tpu.dot_dimension_numbers<[1], [0], [0], [1], [0, 0, 1, 1], [], []>} : vector<28x30xbf16>, vector<30x448xbf16>, vector<28x448xf32> -> vector<28x448xf32>
    %6 = arith.addf %0, %5 : vector<28x448xf32>
    %c0_6 = arith.constant 0 : index
    %c1 = arith.constant 1 : index
    %c0_7 = arith.constant 0 : index
    %7 = vector.load %arg1[%c0_6, %c1, %c0_7] : memref<1x30x30xbf16, #tpu.memory_space<vmem>>, vector<1x28x30xbf16>
    %8 = vector.shape_cast %7 : vector<1x28x30xbf16> to vector<28x30xbf16>
    %c1_8 = arith.constant 1 : index
    %c0_9 = arith.constant 0 : index
    %c0_10 = arith.constant 0 : index
    %9 = vector.load %arg2[%c1_8, %c0_9, %c0_10] : memref<3x30x448xbf16, #tpu.memory_space<vmem>>, vector<1x30x448xbf16>
    %10 = vector.shape_cast %9 : vector<1x30x448xbf16> to vector<30x448xbf16>
    %cst_11 = arith.constant dense<0.000000e+00> : vector<28x448xf32>
    %11 = tpu.matmul %8, %10, %cst_11 {dimension_numbers = #tpu.dot_dimension_numbers<[1], [0], [0], [1], [0, 0, 1, 1], [], []>} : vector<28x30xbf16>, vector<30x448xbf16>, vector<28x448xf32> -> vector<28x448xf32>
    %12 = arith.addf %6, %11 : vector<28x448xf32>
    %c0_12 = arith.constant 0 : index
    %c2 = arith.constant 2 : index
    %c0_13 = arith.constant 0 : index
    %13 = vector.load %arg1[%c0_12, %c2, %c0_13] : memref<1x30x30xbf16, #tpu.memory_space<vmem>>, vector<1x28x30xbf16>
    %14 = vector.shape_cast %13 : vector<1x28x30xbf16> to vector<28x30xbf16>
    %c2_14 = arith.constant 2 : index
    %c0_15 = arith.constant 0 : index
    %c0_16 = arith.constant 0 : index
    %15 = vector.load %arg2[%c2_14, %c0_15, %c0_16] : memref<3x30x448xbf16, #tpu.memory_space<vmem>>, vector<1x30x448xbf16>
    %16 = vector.shape_cast %15 : vector<1x30x448xbf16> to vector<30x448xbf16>
    %cst_17 = arith.constant dense<0.000000e+00> : vector<28x448xf32>
    %17 = tpu.matmul %14, %16, %cst_17 {dimension_numbers = #tpu.dot_dimension_numbers<[1], [0], [0], [1], [0, 0, 1, 1], [], []>} : vector<28x30xbf16>, vector<30x448xbf16>, vector<28x448xf32> -> vector<28x448xf32>
    %18 = arith.addf %12, %17 : vector<28x448xf32>
    %c0_18 = arith.constant 0 : index
    %c0_19 = arith.constant 0 : index
    %19 = vector.load %arg3[%c0_18, %c0_19] : memref<1x448xf32, #tpu.memory_space<vmem>>, vector<1x448xf32>
    %20 = vector.broadcast %19 : vector<1x448xf32> to vector<28x448xf32>
    %21 = arith.addf %18, %20 : vector<28x448xf32>
    %cst_20 = arith.constant 0.000000e+00 : f32
    %22 = vector.broadcast %cst_20 : f32 to vector<28x448xf32>
    %23 = arith.maximumf %21, %22 : vector<28x448xf32>
    %24 = arith.truncf %23 : vector<28x448xf32> to vector<28x448xbf16>
    %c0_21 = arith.constant 0 : index
    %c0_22 = arith.constant 0 : index
    %c0_23 = arith.constant 0 : index
    %25 = vector.load %arg4[%c0_21, %c0_22, %c0_23] : memref<2x16x28xbf16, #tpu.memory_space<vmem>>, vector<1x16x28xbf16>
    %26 = vector.shape_cast %25 : vector<1x16x28xbf16> to vector<16x28xbf16>
    %cst_24 = arith.constant dense<0.000000e+00> : vector<16x448xf32>
    %27 = tpu.matmul %26, %24, %cst_24 {dimension_numbers = #tpu.dot_dimension_numbers<[1], [0], [0], [1], [0, 0, 1, 1], [], []>} : vector<16x28xbf16>, vector<28x448xbf16>, vector<16x448xf32> -> vector<16x448xf32>
    %c1_25 = arith.constant 1 : index
    %c0_26 = arith.constant 0 : index
    %c0_27 = arith.constant 0 : index
    %28 = vector.load %arg4[%c1_25, %c0_26, %c0_27] : memref<2x16x28xbf16, #tpu.memory_space<vmem>>, vector<1x16x28xbf16>
    %29 = vector.shape_cast %28 : vector<1x16x28xbf16> to vector<16x28xbf16>
    %cst_28 = arith.constant dense<0.000000e+00> : vector<16x448xf32>
    %30 = tpu.matmul %29, %24, %cst_28 {dimension_numbers = #tpu.dot_dimension_numbers<[1], [0], [0], [1], [0, 0, 1, 1], [], []>} : vector<16x28xbf16>, vector<28x448xbf16>, vector<16x448xf32> -> vector<16x448xf32>
    %31 = arith.maximumf %27, %30 : vector<16x448xf32>
    %32 = arith.truncf %31 : vector<16x448xf32> to vector<16x448xbf16>
    %c0_29 = arith.constant 0 : index
    %c0_30 = arith.constant 0 : index
    %c0_31 = arith.constant 0 : index
    %33 = vector.load %arg5[%c0_29, %c0_30, %c0_31] : memref<2x448x256xbf16, #tpu.memory_space<vmem>>, vector<1x448x256xbf16>
    %34 = vector.shape_cast %33 : vector<1x448x256xbf16> to vector<448x256xbf16>
    %cst_32 = arith.constant dense<0.000000e+00> : vector<16x256xf32>
    %35 = tpu.matmul %32, %34, %cst_32 {dimension_numbers = #tpu.dot_dimension_numbers<[1], [0], [0], [1], [0, 0, 1, 1], [], []>} : vector<16x448xbf16>, vector<448x256xbf16>, vector<16x256xf32> -> vector<16x256xf32>
    %c1_33 = arith.constant 1 : index
    %c0_34 = arith.constant 0 : index
    %c0_35 = arith.constant 0 : index
    %36 = vector.load %arg5[%c1_33, %c0_34, %c0_35] : memref<2x448x256xbf16, #tpu.memory_space<vmem>>, vector<1x448x256xbf16>
    %37 = vector.shape_cast %36 : vector<1x448x256xbf16> to vector<448x256xbf16>
    %cst_36 = arith.constant dense<0.000000e+00> : vector<16x256xf32>
    %38 = tpu.matmul %32, %37, %cst_36 {dimension_numbers = #tpu.dot_dimension_numbers<[1], [0], [0], [1], [0, 0, 1, 1], [], []>} : vector<16x448xbf16>, vector<448x256xbf16>, vector<16x256xf32> -> vector<16x256xf32>
    %39 = arith.maximumf %35, %38 : vector<16x256xf32>
    %40 = arith.truncf %39 : vector<16x256xf32> to vector<16x256xbf16>
    %c0_37 = arith.constant 0 : index
    %c0_38 = arith.constant 0 : index
    %c0_39 = arith.constant 0 : index
    %41 = vector.load %arg6[%c0_37, %c0_38, %c0_39] : memref<1x16x256xbf16, #tpu.memory_space<vmem>>, vector<1x16x256xbf16>
    %42 = vector.shape_cast %41 : vector<1x16x256xbf16> to vector<16x256xbf16>
    %43 = vector.shape_cast %40 : vector<16x256xbf16> to vector<1x16x256xbf16>
    tpu.vector_store %arg6[%c0_37, %c0_38, %c0_39], %43 {strides = array<i32>} : memref<1x16x256xbf16, #tpu.memory_space<vmem>>, vector<1x16x256xbf16>,
    return
  }
  func.func @transform_0(%arg0: i32) -> (i32, i32, i32) {
    %c0_i32 = arith.constant 0 : i32
    %c0_i32_0 = arith.constant 0 : i32
    %c0_i32_1 = arith.constant 0 : i32
    return %arg0, %c0_i32, %c0_i32_0 : i32, i32, i32
  }
  func.func @transform_1(%arg0: i32) -> (i32, i32, i32) {
    %c0_i32 = arith.constant 0 : i32
    %c0_i32_0 = arith.constant 0 : i32
    %c0_i32_1 = arith.constant 0 : i32
    %c0_i32_2 = arith.constant 0 : i32
    return %c0_i32, %c0_i32_0, %c0_i32_1 : i32, i32, i32
  }
  func.func @transform_2(%arg0: i32) -> (i32, i32) {
    %c0_i32 = arith.constant 0 : i32
    %c0_i32_0 = arith.constant 0 : i32
    %c0_i32_1 = arith.constant 0 : i32
    return %c0_i32, %c0_i32_0 : i32, i32
  }
  func.func @transform_3(%arg0: i32) -> (i32, i32, i32) {
    %c0_i32 = arith.constant 0 : i32
    %c0_i32_0 = arith.constant 0 : i32
    %c0_i32_1 = arith.constant 0 : i32
    %c0_i32_2 = arith.constant 0 : i32
    return %c0_i32, %c0_i32_0, %c0_i32_1 : i32, i32, i32
  }
  func.func @transform_4(%arg0: i32) -> (i32, i32, i32) {
    %c0_i32 = arith.constant 0 : i32
    %c0_i32_0 = arith.constant 0 : i32
    %c0_i32_1 = arith.constant 0 : i32
    %c0_i32_2 = arith.constant 0 : i32
    return %c0_i32, %c0_i32_0, %c0_i32_1 : i32, i32, i32
  }
  func.func @transform_5(%arg0: i32) -> (i32, i32, i32) {
    %c0_i32 = arith.constant 0 : i32
    %c0_i32_0 = arith.constant 0 : i32
    %c0_i32_1 = arith.constant 0 : i32
    return %arg0, %c0_i32, %c0_i32_0 : i32, i32, i32
  }
}

module attributes {stable_mosaic.version = 11 : i64} {
  func.func @_conv_relu_pool_kernel(%arg0: i32, %arg1: memref<1x16x256xbf16, #tpu.memory_space<vmem>>, %arg2: memref<3x256x448xbf16, #tpu.memory_space<vmem>>, %arg3: memref<1x448xf32, #tpu.memory_space<vmem>>, %arg4: memref<2x7x14xbf16, #tpu.memory_space<vmem>>, %arg5: memref<2x448x224xbf16, #tpu.memory_space<vmem>>, %arg6: memref<1x7x224xbf16, #tpu.memory_space<vmem>>) attributes {dimension_semantics = [#tpu.dimension_semantics<parallel>], iteration_bounds = array<i64: 2>, scalar_prefetch = 0 : i64, scratch_operands = 0 : i64, tpu.core_type = #tpu.core_type<tc>, window_params = [{transform_indices = @transform_0, window_bounds = array<i64: 1, 16, 256>}, {pipeline_mode = #tpu.pipeline_mode<synchronous>, transform_indices = @transform_1, window_bounds = array<i64: 3, 256, 448>}, {pipeline_mode = #tpu.pipeline_mode<synchronous>, transform_indices = @transform_2, window_bounds = array<i64: 1, 448>}, {pipeline_mode = #tpu.pipeline_mode<synchronous>, transform_indices = @transform_3, window_bounds = array<i64: 2, 7, 14>}, {pipeline_mode = #tpu.pipeline_mode<synchronous>, transform_indices = @transform_4, window_bounds = array<i64: 2, 448, 224>}, {transform_indices = @transform_5, window_bounds = array<i64: 1, 7, 224>}]} {
    %cst = arith.constant 0.000000e+00 : f32
    %0 = vector.broadcast %cst : f32 to vector<14x448xf32>
    %c0 = arith.constant 0 : index
    %c0_0 = arith.constant 0 : index
    %c0_1 = arith.constant 0 : index
    %1 = vector.load %arg1[%c0, %c0_0, %c0_1] : memref<1x16x256xbf16, #tpu.memory_space<vmem>>, vector<1x14x256xbf16>
    %2 = vector.shape_cast %1 : vector<1x14x256xbf16> to vector<14x256xbf16>
    %c0_2 = arith.constant 0 : index
    %c0_3 = arith.constant 0 : index
    %c0_4 = arith.constant 0 : index
    %3 = vector.load %arg2[%c0_2, %c0_3, %c0_4] : memref<3x256x448xbf16, #tpu.memory_space<vmem>>, vector<1x256x448xbf16>
    %4 = vector.shape_cast %3 : vector<1x256x448xbf16> to vector<256x448xbf16>
    %cst_5 = arith.constant dense<0.000000e+00> : vector<14x448xf32>
    %5 = tpu.matmul %2, %4, %cst_5 {dimension_numbers = #tpu.dot_dimension_numbers<[1], [0], [0], [1], [0, 0, 1, 1], [], []>} : vector<14x256xbf16>, vector<256x448xbf16>, vector<14x448xf32> -> vector<14x448xf32>
    %6 = arith.addf %0, %5 : vector<14x448xf32>
    %c0_6 = arith.constant 0 : index
    %c1 = arith.constant 1 : index
    %c0_7 = arith.constant 0 : index
    %7 = vector.load %arg1[%c0_6, %c1, %c0_7] : memref<1x16x256xbf16, #tpu.memory_space<vmem>>, vector<1x14x256xbf16>
    %8 = vector.shape_cast %7 : vector<1x14x256xbf16> to vector<14x256xbf16>
    %c1_8 = arith.constant 1 : index
    %c0_9 = arith.constant 0 : index
    %c0_10 = arith.constant 0 : index
    %9 = vector.load %arg2[%c1_8, %c0_9, %c0_10] : memref<3x256x448xbf16, #tpu.memory_space<vmem>>, vector<1x256x448xbf16>
    %10 = vector.shape_cast %9 : vector<1x256x448xbf16> to vector<256x448xbf16>
    %cst_11 = arith.constant dense<0.000000e+00> : vector<14x448xf32>
    %11 = tpu.matmul %8, %10, %cst_11 {dimension_numbers = #tpu.dot_dimension_numbers<[1], [0], [0], [1], [0, 0, 1, 1], [], []>} : vector<14x256xbf16>, vector<256x448xbf16>, vector<14x448xf32> -> vector<14x448xf32>
    %12 = arith.addf %6, %11 : vector<14x448xf32>
    %c0_12 = arith.constant 0 : index
    %c2 = arith.constant 2 : index
    %c0_13 = arith.constant 0 : index
    %13 = vector.load %arg1[%c0_12, %c2, %c0_13] : memref<1x16x256xbf16, #tpu.memory_space<vmem>>, vector<1x14x256xbf16>
    %14 = vector.shape_cast %13 : vector<1x14x256xbf16> to vector<14x256xbf16>
    %c2_14 = arith.constant 2 : index
    %c0_15 = arith.constant 0 : index
    %c0_16 = arith.constant 0 : index
    %15 = vector.load %arg2[%c2_14, %c0_15, %c0_16] : memref<3x256x448xbf16, #tpu.memory_space<vmem>>, vector<1x256x448xbf16>
    %16 = vector.shape_cast %15 : vector<1x256x448xbf16> to vector<256x448xbf16>
    %cst_17 = arith.constant dense<0.000000e+00> : vector<14x448xf32>
    %17 = tpu.matmul %14, %16, %cst_17 {dimension_numbers = #tpu.dot_dimension_numbers<[1], [0], [0], [1], [0, 0, 1, 1], [], []>} : vector<14x256xbf16>, vector<256x448xbf16>, vector<14x448xf32> -> vector<14x448xf32>
    %18 = arith.addf %12, %17 : vector<14x448xf32>
    %c0_18 = arith.constant 0 : index
    %c0_19 = arith.constant 0 : index
    %19 = vector.load %arg3[%c0_18, %c0_19] : memref<1x448xf32, #tpu.memory_space<vmem>>, vector<1x448xf32>
    %20 = vector.broadcast %19 : vector<1x448xf32> to vector<14x448xf32>
    %21 = arith.addf %18, %20 : vector<14x448xf32>
    %cst_20 = arith.constant 0.000000e+00 : f32
    %22 = vector.broadcast %cst_20 : f32 to vector<14x448xf32>
    %23 = arith.maximumf %21, %22 : vector<14x448xf32>
    %24 = arith.truncf %23 : vector<14x448xf32> to vector<14x448xbf16>
    %c0_21 = arith.constant 0 : index
    %c0_22 = arith.constant 0 : index
    %c0_23 = arith.constant 0 : index
    %25 = vector.load %arg4[%c0_21, %c0_22, %c0_23] : memref<2x7x14xbf16, #tpu.memory_space<vmem>>, vector<1x7x14xbf16>
    %26 = vector.shape_cast %25 : vector<1x7x14xbf16> to vector<7x14xbf16>
    %cst_24 = arith.constant dense<0.000000e+00> : vector<7x448xf32>
    %27 = tpu.matmul %26, %24, %cst_24 {dimension_numbers = #tpu.dot_dimension_numbers<[1], [0], [0], [1], [0, 0, 1, 1], [], []>} : vector<7x14xbf16>, vector<14x448xbf16>, vector<7x448xf32> -> vector<7x448xf32>
    %c1_25 = arith.constant 1 : index
    %c0_26 = arith.constant 0 : index
    %c0_27 = arith.constant 0 : index
    %28 = vector.load %arg4[%c1_25, %c0_26, %c0_27] : memref<2x7x14xbf16, #tpu.memory_space<vmem>>, vector<1x7x14xbf16>
    %29 = vector.shape_cast %28 : vector<1x7x14xbf16> to vector<7x14xbf16>
    %cst_28 = arith.constant dense<0.000000e+00> : vector<7x448xf32>
    %30 = tpu.matmul %29, %24, %cst_28 {dimension_numbers = #tpu.dot_dimension_numbers<[1], [0], [0], [1], [0, 0, 1, 1], [], []>} : vector<7x14xbf16>, vector<14x448xbf16>, vector<7x448xf32> -> vector<7x448xf32>
    %31 = arith.maximumf %27, %30 : vector<7x448xf32>
    %32 = arith.truncf %31 : vector<7x448xf32> to vector<7x448xbf16>
    %c0_29 = arith.constant 0 : index
    %c0_30 = arith.constant 0 : index
    %c0_31 = arith.constant 0 : index
    %33 = vector.load %arg5[%c0_29, %c0_30, %c0_31] : memref<2x448x224xbf16, #tpu.memory_space<vmem>>, vector<1x448x224xbf16>
    %34 = vector.shape_cast %33 : vector<1x448x224xbf16> to vector<448x224xbf16>
    %cst_32 = arith.constant dense<0.000000e+00> : vector<7x224xf32>
    %35 = tpu.matmul %32, %34, %cst_32 {dimension_numbers = #tpu.dot_dimension_numbers<[1], [0], [0], [1], [0, 0, 1, 1], [], []>} : vector<7x448xbf16>, vector<448x224xbf16>, vector<7x224xf32> -> vector<7x224xf32>
    %c1_33 = arith.constant 1 : index
    %c0_34 = arith.constant 0 : index
    %c0_35 = arith.constant 0 : index
    %36 = vector.load %arg5[%c1_33, %c0_34, %c0_35] : memref<2x448x224xbf16, #tpu.memory_space<vmem>>, vector<1x448x224xbf16>
    %37 = vector.shape_cast %36 : vector<1x448x224xbf16> to vector<448x224xbf16>
    %cst_36 = arith.constant dense<0.000000e+00> : vector<7x224xf32>
    %38 = tpu.matmul %32, %37, %cst_36 {dimension_numbers = #tpu.dot_dimension_numbers<[1], [0], [0], [1], [0, 0, 1, 1], [], []>} : vector<7x448xbf16>, vector<448x224xbf16>, vector<7x224xf32> -> vector<7x224xf32>
    %39 = arith.maximumf %35, %38 : vector<7x224xf32>
    %40 = arith.truncf %39 : vector<7x224xf32> to vector<7x224xbf16>
    %c0_37 = arith.constant 0 : index
    %c0_38 = arith.constant 0 : index
    %c0_39 = arith.constant 0 : index
    %41 = vector.load %arg6[%c0_37, %c0_38, %c0_39] : memref<1x7x224xbf16, #tpu.memory_space<vmem>>, vector<1x7x224xbf16>
    %42 = vector.shape_cast %41 : vector<1x7x224xbf16> to vector<7x224xbf16>
    %43 = vector.shape_cast %40 : vector<7x224xbf16> to vector<1x7x224xbf16>
    tpu.vector_store %arg6[%c0_37, %c0_38, %c0_39], %43 {strides = array<i32>} : memref<1x7x224xbf16, #tpu.memory_space<vmem>>, vector<1x7x224xbf16>,
    return
  }
  func.func @transform_0(%arg0: i32) -> (i32, i32, i32) {
    %c0_i32 = arith.constant 0 : i32
    %c0_i32_0 = arith.constant 0 : i32
    %c0_i32_1 = arith.constant 0 : i32
    return %arg0, %c0_i32, %c0_i32_0 : i32, i32, i32
  }
  func.func @transform_1(%arg0: i32) -> (i32, i32, i32) {
    %c0_i32 = arith.constant 0 : i32
    %c0_i32_0 = arith.constant 0 : i32
    %c0_i32_1 = arith.constant 0 : i32
    %c0_i32_2 = arith.constant 0 : i32
    return %c0_i32, %c0_i32_0, %c0_i32_1 : i32, i32, i32
  }
  func.func @transform_2(%arg0: i32) -> (i32, i32) {
    %c0_i32 = arith.constant 0 : i32
    %c0_i32_0 = arith.constant 0 : i32
    %c0_i32_1 = arith.constant 0 : i32
    return %c0_i32, %c0_i32_0 : i32, i32
  }
  func.func @transform_3(%arg0: i32) -> (i32, i32, i32) {
    %c0_i32 = arith.constant 0 : i32
    %c0_i32_0 = arith.constant 0 : i32
    %c0_i32_1 = arith.constant 0 : i32
    %c0_i32_2 = arith.constant 0 : i32
    return %c0_i32, %c0_i32_0, %c0_i32_1 : i32, i32, i32
  }
  func.func @transform_4(%arg0: i32) -> (i32, i32, i32) {
    %c0_i32 = arith.constant 0 : i32
    %c0_i32_0 = arith.constant 0 : i32
    %c0_i32_1 = arith.constant 0 : i32
    %c0_i32_2 = arith.constant 0 : i32
    return %c0_i32, %c0_i32_0, %c0_i32_1 : i32, i32, i32
  }
  func.func @transform_5(%arg0: i32) -> (i32, i32, i32) {
    %c0_i32 = arith.constant 0 : i32
    %c0_i32_0 = arith.constant 0 : i32
    %c0_i32_1 = arith.constant 0 : i32
    return %arg0, %c0_i32, %c0_i32_0 : i32, i32, i32
  }
}

module attributes {stable_mosaic.version = 11 : i64} {
  func.func @_fc_fused_kernel(%arg0: i32, %arg1: memref<2x1568xbf16, #tpu.memory_space<vmem>>, %arg2: memref<1568x64xbf16, #tpu.memory_space<vmem>>, %arg3: memref<1x64xf32, #tpu.memory_space<vmem>>, %arg4: memref<64x3xbf16, #tpu.memory_space<vmem>>, %arg5: memref<1x3xf32, #tpu.memory_space<vmem>>, %arg6: memref<2x3xf32, #tpu.memory_space<vmem>>) attributes {dimension_semantics = [#tpu.dimension_semantics<parallel>], iteration_bounds = array<i64: 1>, scalar_prefetch = 0 : i64, scratch_operands = 0 : i64, tpu.core_type = #tpu.core_type<tc>, window_params = [{transform_indices = @transform_0, window_bounds = array<i64: 2, 1568>}, {pipeline_mode = #tpu.pipeline_mode<synchronous>, transform_indices = @transform_1, window_bounds = array<i64: 1568, 64>}, {pipeline_mode = #tpu.pipeline_mode<synchronous>, transform_indices = @transform_2, window_bounds = array<i64: 1, 64>}, {pipeline_mode = #tpu.pipeline_mode<synchronous>, transform_indices = @transform_3, window_bounds = array<i64: 64, 3>}, {pipeline_mode = #tpu.pipeline_mode<synchronous>, transform_indices = @transform_4, window_bounds = array<i64: 1, 3>}, {transform_indices = @transform_5, window_bounds = array<i64: 2, 3>}]} {
    %c0 = arith.constant 0 : index
    %c0_0 = arith.constant 0 : index
    %0 = vector.load %arg1[%c0, %c0_0] : memref<2x1568xbf16, #tpu.memory_space<vmem>>, vector<2x1568xbf16>
    %c0_1 = arith.constant 0 : index
    %c0_2 = arith.constant 0 : index
    %1 = vector.load %arg2[%c0_1, %c0_2] : memref<1568x64xbf16, #tpu.memory_space<vmem>>, vector<1568x64xbf16>
    %cst = arith.constant dense<0.000000e+00> : vector<2x64xf32>
    %2 = tpu.matmul %0, %1, %cst {dimension_numbers = #tpu.dot_dimension_numbers<[1], [0], [0], [1], [0, 0, 1, 1], [], []>} : vector<2x1568xbf16>, vector<1568x64xbf16>, vector<2x64xf32> -> vector<2x64xf32>
    %c0_3 = arith.constant 0 : index
    %c0_4 = arith.constant 0 : index
    %3 = vector.load %arg3[%c0_3, %c0_4] : memref<1x64xf32, #tpu.memory_space<vmem>>, vector<1x64xf32>
    %4 = vector.broadcast %3 : vector<1x64xf32> to vector<2x64xf32>
    %5 = arith.addf %2, %4 : vector<2x64xf32>
    %cst_5 = arith.constant 0.000000e+00 : f32
    %6 = vector.broadcast %cst_5 : f32 to vector<2x64xf32>
    %7 = arith.maximumf %5, %6 : vector<2x64xf32>
    %8 = arith.truncf %7 : vector<2x64xf32> to vector<2x64xbf16>
    %c0_6 = arith.constant 0 : index
    %c0_7 = arith.constant 0 : index
    %9 = vector.load %arg4[%c0_6, %c0_7] : memref<64x3xbf16, #tpu.memory_space<vmem>>, vector<64x3xbf16>
    %cst_8 = arith.constant dense<0.000000e+00> : vector<2x3xf32>
    %10 = tpu.matmul %8, %9, %cst_8 {dimension_numbers = #tpu.dot_dimension_numbers<[1], [0], [0], [1], [0, 0, 1, 1], [], []>} : vector<2x64xbf16>, vector<64x3xbf16>, vector<2x3xf32> -> vector<2x3xf32>
    %c0_9 = arith.constant 0 : index
    %c0_10 = arith.constant 0 : index
    %11 = vector.load %arg5[%c0_9, %c0_10] : memref<1x3xf32, #tpu.memory_space<vmem>>, vector<1x3xf32>
    %12 = vector.broadcast %11 : vector<1x3xf32> to vector<2x3xf32>
    %13 = arith.addf %10, %12 : vector<2x3xf32>
    %c0_11 = arith.constant 0 : index
    %c0_12 = arith.constant 0 : index
    %14 = vector.load %arg6[%c0_11, %c0_12] : memref<2x3xf32, #tpu.memory_space<vmem>>, vector<2x3xf32>
    tpu.vector_store %arg6[%c0_11, %c0_12], %13 {strides = array<i32>} : memref<2x3xf32, #tpu.memory_space<vmem>>, vector<2x3xf32>,
    return
  }
  func.func @transform_0(%arg0: i32) -> (i32, i32) {
    %c0_i32 = arith.constant 0 : i32
    %c0_i32_0 = arith.constant 0 : i32
    return %arg0, %c0_i32 : i32, i32
  }
  func.func @transform_1(%arg0: i32) -> (i32, i32) {
    %c0_i32 = arith.constant 0 : i32
    %c0_i32_0 = arith.constant 0 : i32
    %c0_i32_1 = arith.constant 0 : i32
    return %c0_i32, %c0_i32_0 : i32, i32
  }
  func.func @transform_2(%arg0: i32) -> (i32, i32) {
    %c0_i32 = arith.constant 0 : i32
    %c0_i32_0 = arith.constant 0 : i32
    %c0_i32_1 = arith.constant 0 : i32
    return %c0_i32, %c0_i32_0 : i32, i32
  }
  func.func @transform_3(%arg0: i32) -> (i32, i32) {
    %c0_i32 = arith.constant 0 : i32
    %c0_i32_0 = arith.constant 0 : i32
    %c0_i32_1 = arith.constant 0 : i32
    return %c0_i32, %c0_i32_0 : i32, i32
  }
  func.func @transform_4(%arg0: i32) -> (i32, i32) {
    %c0_i32 = arith.constant 0 : i32
    %c0_i32_0 = arith.constant 0 : i32
    %c0_i32_1 = arith.constant 0 : i32
    return %c0_i32, %c0_i32_0 : i32, i32
  }
  func.func @transform_5(%arg0: i32) -> (i32, i32) {
    %c0_i32 = arith.constant 0 : i32
    %c0_i32_0 = arith.constant 0 : i32
    return %arg0, %c0_i32 : i32, i32
  }
}

</mosaic_0001>

<llo_original>
// kernel: mycnn_forward.3
$region0: #{mycnn_forward.3}
  #allocation0 [shape = 'u32[]', space=smem, size = 0x4, offset = 0x4, fixed_abs, tag = 'smem constant byte address 0x4 - core index']
  #allocation1 [shape = 'u32[72,128]{1,0:T(1,128)}', space=vmem, size = 0x9000, scoped, tag = 'internal scratch']
  %s0 = inlined_call_operand.vmem [shape: bf16[2,30,30], index: 0, kind: input, shape index: {}]
  %s1 = inlined_call_operand.hbm [shape: bf16[3,30,448], index: 1, kind: input, shape index: {}]
  %s2 = inlined_call_operand.vmem [shape: f32[1,448], index: 2, kind: input, shape index: {}]
  %s3 = inlined_call_operand.vmem [shape: bf16[2,16,28], index: 3, kind: input, shape index: {}]
  %s4 = inlined_call_operand.hbm [shape: bf16[2,448,256], index: 4, kind: input, shape index: {}]
  %s5 = inlined_call_operand.vmem [shape: bf16[2,16,256], index: 5, kind: output, shape index: {}]
  %s6 = sld [smem:[#allocation0]]
  $region61: #{mycnn_forward.3} parent=0
    _
  %s8 = ssub.s32 1, %s6
  %s9 = scalar_select 0, %s8, %s6
  $region1: #{mycnn_forward.3} parent=0
    #allocation2 [shape = 'u8[98304]{0}', space=vmem, size = 0x18000, scoped, tag = 'input window, operand 1, single buffered']
    #allocation3 [shape = 's32[2]{0}', space=sflag, size = 0x8, scoped, tag = 'scoped memory for mycnn_forward.3']
    #allocation4 [shape = 'u8[458752]{0}', space=vmem, size = 0x70000, scoped, tag = 'input window, operand 4, single buffered']
    #allocation5 [shape = 's32[1]{0}', space=sflag, size = 0x4, scoped, tag = 'scoped memory for mycnn_forward.3']
    %10 = vsyncpa [#allocation3], 0
    %11 = vsyncpa [#allocation5], 0
    loop: start=0, step=1, limit=4
    $region2: #{mycnn_forward.3} parent=1 // loop_pre_header
      _
    $region3: #{mycnn_forward.3} parent=1 // loop_header
      %s13 = sphi 0, %s17
      %p14 = scmp.ge.s32.totalorder %s13, 4
      %s23 = sphi 0, %s25
      %s26 = sphi 0, %s23
      %s27 = sphi 0, %s26
      %s43 = sphi 0, %s27
      %s47 = sphi 0, %s47
      %s49 = sphi 0, %s47
      %s50 = sphi 0, %s49
      %s64 = sphi 0, %s50
      %s68 = sphi 0, %s68
      %s70 = sphi 0, %s68
      %s71 = sphi 0, %s70
      %s85 = sphi 0, %s71
      %s89 = sphi 0, %s89
      %s91 = sphi 0, %s89
      %s92 = sphi 0, %s91
      %s106 = sphi 0, %s92
      %s110 = sphi 0, %s110
      %s112 = sphi 0, %s110
      %s113 = sphi 0, %s112
      %s127 = sphi 0, %s113
      %s133 = sphi 0, %s135
      %s136 = sphi 0, %s133
      %s137 = sphi 0, %s136
      %s153 = sphi 0, %s137
    $region4: #{mycnn_forward.3} parent=1 // loop_header_branch
      %16 = sbr.rel (%p14) target = $region8
    $region5: #{mycnn_forward.3} parent=1 // loop_body
      %s18 = ssub.s32 %s13, 1
      %s19 = ssub.s32 %s13, 2
      %s20 = sadd.s32 %s13, 1
      %s21 = ssub.s32 %s13, %s20
      %p22 = scmp.eq.s32.totalorder %s21, 0
      %s24 = sadd.s32 %s23, 1
      %s25 = scalar_select %p22, %s23, %s24
      %p28 = pneg %p22
      %p29 = scmp.eq.s32.totalorder %s13, 1
      %p30 = por %p28, %p29
      %p31 = scmp.ne.s32.totalorder %s23, %s26
      %p32 = scmp.eq.s32.totalorder %s13, 0
      %p33 = por %p31, %p32
      %p34 = scmp.ne.s32.totalorder %s23, %s26
      %p35 = scmp.eq.s32.totalorder %s18, 1
      %p36 = por %p34, %p35
      %p37 = scmp.ne.s32.totalorder %s26, %s27
      %p38 = scmp.eq.s32.totalorder %s18, 0
      %p39 = por %p37, %p38
      %p40 = scmp.ne.s32.totalorder %s26, %s27
      %p41 = scmp.eq.s32.totalorder %s19, 1
      %p42 = por %p40, %p41
      %p44 = scmp.ne.s32.totalorder %s27, %s43
      %p45 = scmp.eq.s32.totalorder %s19, 0
      %p46 = por %p44, %p45
      %s48 = sadd.s32 %s47, 1
      %p51 = scmp.eq.s32.totalorder %s13, 1
      %p52 = scmp.ne.s32.totalorder %s47, %s49
      %p53 = scmp.eq.s32.totalorder %s13, 0
      %p54 = por %p52, %p53
      %p55 = scmp.ne.s32.totalorder %s47, %s49
      %p56 = scmp.eq.s32.totalorder %s18, 1
      %p57 = por %p55, %p56
      %p58 = scmp.ne.s32.totalorder %s49, %s50
      %p59 = scmp.eq.s32.totalorder %s18, 0
      %p60 = por %p58, %p59
      %p61 = scmp.ne.s32.totalorder %s49, %s50
      %p62 = scmp.eq.s32.totalorder %s19, 1
      %p63 = por %p61, %p62
      %p65 = scmp.ne.s32.totalorder %s50, %s64
      %p66 = scmp.eq.s32.totalorder %s19, 0
      %p67 = por %p65, %p66
      %s69 = sadd.s32 %s68, 1
      %p72 = scmp.eq.s32.totalorder %s13, 1
      %p73 = scmp.ne.s32.totalorder %s68, %s70
      %p74 = scmp.eq.s32.totalorder %s13, 0
      %p75 = por %p73, %p74
      %p76 = scmp.ne.s32.totalorder %s68, %s70
      %p77 = scmp.eq.s32.totalorder %s18, 1
      %p78 = por %p76, %p77
      %p79 = scmp.ne.s32.totalorder %s70, %s71
      %p80 = scmp.eq.s32.totalorder %s18, 0
      %p81 = por %p79, %p80
      %p82 = scmp.ne.s32.totalorder %s70, %s71
      %p83 = scmp.eq.s32.totalorder %s19, 1
      %p84 = por %p82, %p83
      %p86 = scmp.ne.s32.totalorder %s71, %s85
      %p87 = scmp.eq.s32.totalorder %s19, 0
      %p88 = por %p86, %p87
      %s90 = sadd.s32 %s89, 1
      %p93 = scmp.eq.s32.totalorder %s13, 1
      %p94 = scmp.ne.s32.totalorder %s89, %s91
      %p95 = scmp.eq.s32.totalorder %s13, 0
      %p96 = por %p94, %p95
      %p97 = scmp.ne.s32.totalorder %s89, %s91
      %p98 = scmp.eq.s32.totalorder %s18, 1
      %p99 = por %p97, %p98
      %p100 = scmp.ne.s32.totalorder %s91, %s92
      %p101 = scmp.eq.s32.totalorder %s18, 0
      %p102 = por %p100, %p101
      %p103 = scmp.ne.s32.totalorder %s91, %s92
      %p104 = scmp.eq.s32.totalorder %s19, 1
      %p105 = por %p103, %p104
      %p107 = scmp.ne.s32.totalorder %s92, %s106
      %p108 = scmp.eq.s32.totalorder %s19, 0
      %p109 = por %p107, %p108
      %s111 = sadd.s32 %s110, 1
      %p114 = scmp.eq.s32.totalorder %s13, 1
      %p115 = scmp.ne.s32.totalorder %s110, %s112
      %p116 = scmp.eq.s32.totalorder %s13, 0
      %p117 = por %p115, %p116
      %p118 = scmp.ne.s32.totalorder %s110, %s112
      %p119 = scmp.eq.s32.totalorder %s18, 1
      %p120 = por %p118, %p119
      %p121 = scmp.ne.s32.totalorder %s112, %s113
      %p122 = scmp.eq.s32.totalorder %s18, 0
      %p123 = por %p121, %p122
      %p124 = scmp.ne.s32.totalorder %s112, %s113
      %p125 = scmp.eq.s32.totalorder %s19, 1
      %p126 = por %p124, %p125
      %p128 = scmp.ne.s32.totalorder %s113, %s127
      %p129 = scmp.eq.s32.totalorder %s19, 0
      %p130 = por %p128, %p129
      %s131 = ssub.s32 %s13, %s20
      %p132 = scmp.eq.s32.totalorder %s131, 0
      %s134 = sadd.s32 %s133, 1
      %s135 = scalar_select %p132, %s133, %s134
      %p138 = pneg %p132
      %p139 = scmp.eq.s32.totalorder %s13, 1
      %p140 = por %p138, %p139
      %p141 = scmp.ne.s32.totalorder %s133, %s136
      %p142 = scmp.eq.s32.totalorder %s13, 0
      %p143 = por %p141, %p142
      %p144 = scmp.ne.s32.totalorder %s133, %s136
      %p145 = scmp.eq.s32.totalorder %s18, 1
      %p146 = por %p144, %p145
      %p147 = scmp.ne.s32.totalorder %s136, %s137
      %p148 = scmp.eq.s32.totalorder %s18, 0
      %p149 = por %p147, %p148
      %p150 = scmp.ne.s32.totalorder %s136, %s137
      %p151 = scmp.eq.s32.totalorder %s19, 1
      %p152 = por %p150, %p151
      %p154 = scmp.ne.s32.totalorder %s137, %s153
      %p155 = scmp.eq.s32.totalorder %s19, 0
      %p156 = por %p154, %p155
      %p157 = scmp.le.s32.totalorder 1, %s13
      %p158 = scmp.lt.s32.totalorder %s13, 3
      %p159 = pnand %p157, %p158
      %p160 = pneg %p159
      // Predicated region
      $region9: #{mycnn_forward.3} parent=5 // pred_check
        _
      $region10: #{mycnn_forward.3} parent=5 // pred_check_branch
        %162 = sbr.rel (%p159) target = $region12
      $region11: #{mycnn_forward.3} parent=5 // pred_region
        %s163 = ssub.s32 %s13, 1
        // Predicated region
        $region13: #{mycnn_forward.3} parent=11 // pred_check
          %p164 = pneg %p60
        $region14: #{mycnn_forward.3} parent=11 // pred_check_branch
          %166 = sbr.rel (%p164) target = $region16
        $region15: #{mycnn_forward.3} parent=11 // pred_region
          %168 = vsyncadd [#allocation3], 0
          %s169 = sshll.u32 %s1, 4
          %s170 = int_to_ptr.hbm [resolvable:$true] %s169
          %s171 = sshll.u32 [#allocation2], 4
          %s172 = int_to_ptr.vmem [resolvable:$true] %s171
          %177 = dma.hbm_to_vmem [thread:$0]  %s170, 3072, %s172, [#allocation3], 256, 256, 16
        $region16: #{mycnn_forward.3} parent=11 // pred_fallthru
          _
        // Predicated region
        $region17: #{mycnn_forward.3} parent=11 // pred_check
          %p178 = pneg %p81
        $region18: #{mycnn_forward.3} parent=11 // pred_check_branch
          %180 = sbr.rel (%p178) target = $region20
        $region19: #{mycnn_forward.3} parent=11 // pred_region
          _
        $region20: #{mycnn_forward.3} parent=11 // pred_fallthru
          _
        // Predicated region
        $region21: #{mycnn_forward.3} parent=11 // pred_check
          %p181 = pneg %p102
        $region22: #{mycnn_forward.3} parent=11 // pred_check_branch
          %183 = sbr.rel (%p181) target = $region24
        $region23: #{mycnn_forward.3} parent=11 // pred_region
          _
        $region24: #{mycnn_forward.3} parent=11 // pred_fallthru
          _
        // Predicated region
        $region25: #{mycnn_forward.3} parent=11 // pred_check
          %p184 = pneg %p123
        $region26: #{mycnn_forward.3} parent=11 // pred_check_branch
          %186 = sbr.rel (%p184) target = $region28
        $region27: #{mycnn_forward.3} parent=11 // pred_region
          %188 = vsyncadd [#allocation5], 0
          %s189 = sshll.u32 %s4, 4
          %s190 = int_to_ptr.hbm [resolvable:$true] %s189
          %s191 = sshll.u32 [#allocation4], 4
          %s192 = int_to_ptr.vmem [resolvable:$true] %s191
          %197 = dma.hbm_to_vmem [thread:$0]  %s190, 14336, %s192, [#allocation5], 128, 128, 8
        $region28: #{mycnn_forward.3} parent=11 // pred_fallthru
          _
      $region12: #{mycnn_forward.3} parent=5 // pred_fallthru
        _
      %p198 = scmp.lt.s32.totalorder %s13, 2
      // Predicated region
      $region29: #{mycnn_forward.3} parent=5 // pred_check
        %p199 = pneg %p198
      $region30: #{mycnn_forward.3} parent=5 // pred_check_branch
        %201 = sbr.rel (%p199) target = $region32
      $region31: #{mycnn_forward.3} parent=5 // pred_region
        // Predicated region
        $region33: #{mycnn_forward.3} parent=31 // pred_check
          %p202 = pneg %p33
        $region34: #{mycnn_forward.3} parent=31 // pred_check_branch
          %204 = sbr.rel (%p202) target = $region36
        $region35: #{mycnn_forward.3} parent=31 // pred_region
          %p205 = scmp.lt.s32.totalorder %s13, 1
          %s206 = scalar_select %p205, %s13, 1
          %s207 = smul.addr %s206, 4
          %s208 = smul.addr %s207, 4
          %s209 = scalar_lea.vmem %s0, %s208
        $region36: #{mycnn_forward.3} parent=31 // pred_fallthru
          _
      $region32: #{mycnn_forward.3} parent=5 // pred_fallthru
        _
      %p210 = scmp.le.s32.totalorder 1, %s13
      %p211 = scmp.lt.s32.totalorder %s13, 3
      %p212 = pnand %p210, %p211
      %p213 = pneg %p212
      // Predicated region
      $region37: #{mycnn_forward.3} parent=5 // pred_check
        _
      $region38: #{mycnn_forward.3} parent=5 // pred_check_branch
        %215 = sbr.rel (%p212) target = $region40
      $region39: #{mycnn_forward.3} parent=5 // pred_region
        %s216 = ssub.s32 %s13, 1
        // Predicated region
        $region41: #{mycnn_forward.3} parent=39 // pred_check
          %p217 = pneg %p60
        $region42: #{mycnn_forward.3} parent=39 // pred_check_branch
          %219 = sbr.rel (%p217) target = $region44
        $region43: #{mycnn_forward.3} parent=39 // pred_region
          %221 = dma.done [#allocation3], 3072
        $region44: #{mycnn_forward.3} parent=39 // pred_fallthru
          _
        // Predicated region
        $region45: #{mycnn_forward.3} parent=39 // pred_check
          %p222 = pneg %p123
        $region46: #{mycnn_forward.3} parent=39 // pred_check_branch
          %224 = sbr.rel (%p222) target = $region48
        $region47: #{mycnn_forward.3} parent=39 // pred_region
          %226 = dma.done [#allocation5], 14336
        $region48: #{mycnn_forward.3} parent=39 // pred_fallthru
          _
        %p227 = scmp.lt.s32.totalorder %s18, 1
        %s228 = scalar_select %p227, %s18, 1
        %s229 = smul.addr %s228, 4
        %s230 = smul.addr %s229, 4
        %s231 = scalar_lea.vmem %s0, %s230
        %p232 = pneg %p39
        %p233 = pneg %p36
        %p234 = pneg %p60
        %p235 = pneg %p57
        %p236 = pneg %p81
        %p237 = pneg %p78
        %p238 = pneg %p102
        %p239 = pneg %p99
        %p240 = pneg %p123
        %p241 = pneg %p120
        %p242 = pneg %p149
        %p243 = pneg %p146
        %p244 = scmp.lt.s32.totalorder %s18, 1
        %s245 = scalar_select %p244, %s18, 1
        %s246 = smul.addr %s245, 4
        %s247 = smul.addr %s246, 4
        %s248 = scalar_lea.vmem %s5, %s247
        %p249 = scmp.lt.s32.totalorder %s18, 1
        %s250 = scalar_select %p249, %s18, 1
        %s251 = smul.addr %s250, 4
        %s252 = smul.addr %s251, 4
        %s253 = scalar_lea.vmem %s0, %s252
        %p254 = scmp.lt.s32.totalorder %s18, 1
        %s255 = scalar_select %p254, %s18, 1
        %s256 = smul.addr %s255, 4
        %s257 = smul.addr %s256, 4
        %s258 = scalar_lea.vmem %s5, %s257
        %v260 = vld [vmem:[%s253] sm:$0xf]
        %v261 = vld [vmem:[%s253 + $0x4] sm:$0xf]
        %v262 = vld [vmem:[%s253 + $0x8] sm:$0xf]
        %v263 = vld [vmem:[%s253 + $0xc] sm:$0x3]
        %v264 = vld [vmem:[#allocation2] sm:$0xff]
        %v265 = vld [vmem:[#allocation2 + $0x8] sm:$0xff]
        %v266 = vld [vmem:[#allocation2 + $0x10] sm:$0xff]
        %v267 = vld [vmem:[#allocation2 + $0x18] sm:$0xff]
        %v268 = vld [vmem:[#allocation2 + $0x20] sm:$0xff]
        %v269 = vld [vmem:[#allocation2 + $0x28] sm:$0xff]
        %v270 = vld [vmem:[#allocation2 + $0x30] sm:$0x77]
        %v271 = vld [vmem:[#allocation2 + $0x38] sm:$0x77]
        %v272 = vld [vmem:[%s253 + $0xc] sm:$0x7]
        %s273 = scalar_lea.vmem [#allocation2], 64
        %v274 = vld [vmem:[%s273] sm:$0xff]
        %v275 = vld [vmem:[%s273 + $0x8] sm:$0xff]
        %v276 = vld [vmem:[%s273 + $0x10] sm:$0xff]
        %v277 = vld [vmem:[%s273 + $0x18] sm:$0xff]
        %v278 = vld [vmem:[%s273 + $0x20] sm:$0xff]
        %v279 = vld [vmem:[%s273 + $0x28] sm:$0xff]
        %v280 = vld [vmem:[%s273 + $0x30] sm:$0x77]
        %v281 = vld [vmem:[%s273 + $0x38] sm:$0x77]
        %v286 = vunpack.c.l.b16 %v260
        %v287 = vunpack.c.l.b16 %v261
        %v288 = vunpack.c.l.b16 %v262
        %v289 = vunpack.c.l.b16 %v272
        %v290 = vpack.c.b16 %v287, %v286
        %v291 = vpack.c.b16 %v289, %v288
        %vm292 = vsmask.f32 7424
        %v294 = vshrl.u32 %v290, 16
        %v296 = vshll.u32 %v290, 16
        %v298 = vrot.slane %v296, 1
        %v299 = vor.u32 %v294, %v298
        %v301 = vshll.u32 %v291, 16
        %v303 = vrot.slane %v301, 1
        %v304 = vsel %vm292, %v299, %v303
        %v305 = vshrl.u32 %v291, 16
        %v307 = vor.u32 %v305, %v303
        %v316 = vunpack.c.l.b16 %v274
        %v317 = vunpack.c.h.b16 %v274
        %v318 = vunpack.c.l.b16 %v275
        %v319 = vunpack.c.h.b16 %v275
        %v320 = vunpack.c.l.b16 %v276
        %v321 = vunpack.c.h.b16 %v276
        %v322 = vunpack.c.l.b16 %v277
        %v323 = vunpack.c.h.b16 %v277
        %v324 = vunpack.c.l.b16 %v278
        %v325 = vunpack.c.h.b16 %v278
        %v326 = vunpack.c.l.b16 %v279
        %v327 = vunpack.c.h.b16 %v279
        %v328 = vunpack.c.l.b16 %v280
        %v329 = vunpack.c.h.b16 %v280
        %v330 = vunpack.c.l.b16 %v281
        %v331 = vunpack.c.h.b16 %v281
        %v332 = vpack.c.b16 %v320, %v316
        %v333 = vpack.c.b16 %v321, %v317
        %v334 = vpack.c.b16 %v322, %v318
        %v335 = vpack.c.b16 %v323, %v319
        %v336 = vpack.c.b16 %v328, %v324
        %v337 = vpack.c.b16 %v329, %v325
        %v338 = vpack.c.b16 %v330, %v326
        %v339 = vpack.c.b16 %v331, %v327
        %vm344 = vcmask 244736
        %v346 = vsel %vm344, %v304, 0
        %v349 = vsel %vm344, %v307, 0
        %vm351 = vcmask 1046528
        %v353 = vsel %vm351, %v336, 0
        %v356 = vsel %vm351, %v337, 0
        %v359 = vsel %vm351, %v338, 0
        %v362 = vsel %vm351, %v339, 0
        %364 = vmatpush.bf16.msra.mxu0 0
        %365 = vmatpush.bf16.msra.mxu0 0
        %366 = vmatpush.bf16.msra.mxu0 0
        %367 = vmatpush.bf16.msra.mxu0 0
        %368 = vmatpush.bf16.msra.mxu0 0
        %369 = vmatpush.bf16.msra.mxu0 0
        %370 = vmatpush.bf16.msra.mxu0 %v353
        %371 = vmatpush.bf16.msra.mxu0 %v332
        %372 = vmatmul.bf16.gmra.mxu0 %v346
        %v373 = vpop.f32.mrf.mxu0
        %v374 = vadd.f32 0.0, %v373
        %v375 = vpop.f32.mrf.mxu0
        %v376 = vadd.f32 0.0, %v375
        %377 = vmatmul.bf16.gmra.mxu0 %v349
        %v378 = vpop.f32.mrf.mxu0
        %v379 = vadd.f32 0.0, %v378
        %v380 = vpop.f32.mrf.mxu0
        %v381 = vadd.f32 0.0, %v380
        %382 = vdwg.mxu0
        %383 = vmatpush.bf16.msra.mxu0 0
        %384 = vmatpush.bf16.msra.mxu0 0
        %385 = vmatpush.bf16.msra.mxu0 0
        %386 = vmatpush.bf16.msra.mxu0 0
        %387 = vmatpush.bf16.msra.mxu0 0
        %388 = vmatpush.bf16.msra.mxu0 0
        %389 = vmatpush.bf16.msra.mxu0 %v356
        %390 = vmatpush.bf16.msra.mxu0 %v333
        %391 = vmatmul.bf16.gmra.mxu0 %v346
        %v392 = vpop.f32.mrf.mxu0
        %v393 = vadd.f32 0.0, %v392
        %v394 = vpop.f32.mrf.mxu0
        %v395 = vadd.f32 0.0, %v394
        %396 = vmatmul.bf16.gmra.mxu0 %v349
        %v397 = vpop.f32.mrf.mxu0
        %v398 = vadd.f32 0.0, %v397
        %v399 = vpop.f32.mrf.mxu0
        %v400 = vadd.f32 0.0, %v399
        %401 = vdwg.mxu0
        %402 = vmatpush.bf16.msra.mxu0 0
        %403 = vmatpush.bf16.msra.mxu0 0
        %404 = vmatpush.bf16.msra.mxu0 0
        %405 = vmatpush.bf16.msra.mxu0 0
        %406 = vmatpush.bf16.msra.mxu0 0
        %407 = vmatpush.bf16.msra.mxu0 0
        %408 = vmatpush.bf16.msra.mxu0 %v359
        %409 = vmatpush.bf16.msra.mxu0 %v334
        %410 = vmatmul.bf16.gmra.mxu0 %v346
        %v411 = vpop.f32.mrf.mxu0
        %v412 = vadd.f32 0.0, %v411
        %v413 = vpop.f32.mrf.mxu0
        %v414 = vadd.f32 0.0, %v413
        %415 = vmatmul.bf16.gmra.mxu0 %v349
        %v416 = vpop.f32.mrf.mxu0
        %v417 = vadd.f32 0.0, %v416
        %v418 = vpop.f32.mrf.mxu0
        %v419 = vadd.f32 0.0, %v418
        %420 = vdwg.mxu0
        %421 = vmatpush.bf16.msra.mxu0 0
        %422 = vmatpush.bf16.msra.mxu0 0
        %423 = vmatpush.bf16.msra.mxu0 0
        %424 = vmatpush.bf16.msra.mxu0 0
        %425 = vmatpush.bf16.msra.mxu0 0
        %426 = vmatpush.bf16.msra.mxu0 0
        %427 = vmatpush.bf16.msra.mxu0 %v362
        %428 = vmatpush.bf16.msra.mxu0 %v335
        %429 = vmatmul.bf16.gmra.mxu0 %v346
        %v430 = vpop.f32.mrf.mxu0
        %v431 = vadd.f32 0.0, %v430
        %v432 = vpop.f32.mrf.mxu0
        %v433 = vadd.f32 0.0, %v432
        %434 = vmatmul.bf16.gmra.mxu0 %v349
        %v435 = vpop.f32.mrf.mxu0
        %v436 = vadd.f32 0.0, %v435
        %v437 = vpop.f32.mrf.mxu0
        %v438 = vadd.f32 0.0, %v437
        %439 = vdwg.mxu0
        %v441 = vunpack.c.l.b16 %v263
        %v442 = vpack.c.b16 %v441, %v288
        %v451 = vunpack.c.l.b16 %v264
        %v452 = vunpack.c.h.b16 %v264
        %v453 = vunpack.c.l.b16 %v265
        %v454 = vunpack.c.h.b16 %v265
        %v455 = vunpack.c.l.b16 %v266
        %v456 = vunpack.c.h.b16 %v266
        %v457 = vunpack.c.l.b16 %v267
        %v458 = vunpack.c.h.b16 %v267
        %v459 = vunpack.c.l.b16 %v268
        %v460 = vunpack.c.h.b16 %v268
        %v461 = vunpack.c.l.b16 %v269
        %v462 = vunpack.c.h.b16 %v269
        %v463 = vunpack.c.l.b16 %v270
        %v464 = vunpack.c.h.b16 %v270
        %v465 = vunpack.c.l.b16 %v271
        %v466 = vunpack.c.h.b16 %v271
        %v467 = vpack.c.b16 %v455, %v451
        %v468 = vpack.c.b16 %v456, %v452
        %v469 = vpack.c.b16 %v457, %v453
        %v470 = vpack.c.b16 %v458, %v454
        %v471 = vpack.c.b16 %v463, %v459
        %v472 = vpack.c.b16 %v464, %v460
        %v473 = vpack.c.b16 %v465, %v461
        %v474 = vpack.c.b16 %v466, %v462
        %v479 = vsel %vm344, %v290, 0
        %v482 = vsel %vm344, %v442, 0
        %v485 = vsel %vm351, %v471, 0
        %v488 = vsel %vm351, %v472, 0
        %v491 = vsel %vm351, %v473, 0
        %v494 = vsel %vm351, %v474, 0
        %496 = vmatpush.bf16.msra.mxu0 0
        %497 = vmatpush.bf16.msra.mxu0 0
        %498 = vmatpush.bf16.msra.mxu0 0
        %499 = vmatpush.bf16.msra.mxu0 0
        %500 = vmatpush.bf16.msra.mxu0 0
        %501 = vmatpush.bf16.msra.mxu0 0
        %502 = vmatpush.bf16.msra.mxu0 %v485
        %503 = vmatpush.bf16.msra.mxu0 %v467
        %504 = vmatmul.bf16.gmra.mxu0 %v479
        %v505 = vpop.f32.mrf.mxu0
        %v506 = vadd.f32 %v374, %v505
        %v507 = vpop.f32.mrf.mxu0
        %v508 = vadd.f32 %v376, %v507
        %509 = vmatmul.bf16.gmra.mxu0 %v482
        %v510 = vpop.f32.mrf.mxu0
        %v511 = vadd.f32 %v379, %v510
        %v512 = vpop.f32.mrf.mxu0
        %v513 = vadd.f32 %v381, %v512
        %514 = vdwg.mxu0
        %515 = vmatpush.bf16.msra.mxu0 0
        %516 = vmatpush.bf16.msra.mxu0 0
        %517 = vmatpush.bf16.msra.mxu0 0
        %518 = vmatpush.bf16.msra.mxu0 0
        %519 = vmatpush.bf16.msra.mxu0 0
        %520 = vmatpush.bf16.msra.mxu0 0
        %521 = vmatpush.bf16.msra.mxu0 %v488
        %522 = vmatpush.bf16.msra.mxu0 %v468
        %523 = vmatmul.bf16.gmra.mxu0 %v479
        %v524 = vpop.f32.mrf.mxu0
        %v525 = vadd.f32 %v393, %v524
        %v526 = vpop.f32.mrf.mxu0
        %v527 = vadd.f32 %v395, %v526
        %528 = vmatmul.bf16.gmra.mxu0 %v482
        %v529 = vpop.f32.mrf.mxu0
        %v530 = vadd.f32 %v398, %v529
        %v531 = vpop.f32.mrf.mxu0
        %v532 = vadd.f32 %v400, %v531
        %533 = vdwg.mxu0
        %534 = vmatpush.bf16.msra.mxu0 0
        %535 = vmatpush.bf16.msra.mxu0 0
        %536 = vmatpush.bf16.msra.mxu0 0
        %537 = vmatpush.bf16.msra.mxu0 0
        %538 = vmatpush.bf16.msra.mxu0 0
        %539 = vmatpush.bf16.msra.mxu0 0
        %540 = vmatpush.bf16.msra.mxu0 %v491
        %541 = vmatpush.bf16.msra.mxu0 %v469
        %542 = vmatmul.bf16.gmra.mxu0 %v479
        %v543 = vpop.f32.mrf.mxu0
        %v544 = vadd.f32 %v412, %v543
        %v545 = vpop.f32.mrf.mxu0
        %v546 = vadd.f32 %v414, %v545
        %547 = vmatmul.bf16.gmra.mxu0 %v482
        %v548 = vpop.f32.mrf.mxu0
        %v549 = vadd.f32 %v417, %v548
        %v550 = vpop.f32.mrf.mxu0
        %v551 = vadd.f32 %v419, %v550
        %552 = vdwg.mxu0
        %553 = vmatpush.bf16.msra.mxu0 0
        %554 = vmatpush.bf16.msra.mxu0 0
        %555 = vmatpush.bf16.msra.mxu0 0
        %556 = vmatpush.bf16.msra.mxu0 0
        %557 = vmatpush.bf16.msra.mxu0 0
        %558 = vmatpush.bf16.msra.mxu0 0
        %559 = vmatpush.bf16.msra.mxu0 %v494
        %560 = vmatpush.bf16.msra.mxu0 %v470
        %561 = vmatmul.bf16.gmra.mxu0 %v479
        %v562 = vpop.f32.mrf.mxu0
        %v563 = vadd.f32 %v431, %v562
        %v564 = vpop.f32.mrf.mxu0
        %v565 = vadd.f32 %v433, %v564
        %566 = vmatmul.bf16.gmra.mxu0 %v482
        %v567 = vpop.f32.mrf.mxu0
        %v568 = vadd.f32 %v436, %v567
        %v569 = vpop.f32.mrf.mxu0
        %v570 = vadd.f32 %v438, %v569
        %571 = vdwg.mxu0
        %v572 = vld [vmem:[%s253] sm:$0xe]
        %s573 = scalar_lea.vmem [#allocation2], 128
        %v574 = vld [vmem:[%s573] sm:$0xff]
        %v575 = vld [vmem:[%s573 + $0x8] sm:$0xff]
        %v576 = vld [vmem:[%s573 + $0x10] sm:$0xff]
        %v577 = vld [vmem:[%s573 + $0x18] sm:$0xff]
        %v578 = vld [vmem:[%s573 + $0x20] sm:$0xff]
        %v579 = vld [vmem:[%s573 + $0x28] sm:$0xff]
        %v580 = vld [vmem:[%s573 + $0x30] sm:$0x77]
        %v581 = vld [vmem:[%s573 + $0x38] sm:$0x77]
        %v583 = vunpack.c.l.b16 %v572
        %v584 = vpack.c.b16 %v287, %v583
        %vm585 = vcmask 1046528
        %v586 = vrot.slane %v584, 1
        %v587 = vrot.slane %v291, 1
        %v588 = vsel %vm585, %v586, %v587
        %v597 = vunpack.c.l.b16 %v574
        %v598 = vunpack.c.h.b16 %v574
        %v599 = vunpack.c.l.b16 %v575
        %v600 = vunpack.c.h.b16 %v575
        %v601 = vunpack.c.l.b16 %v576
        %v602 = vunpack.c.h.b16 %v576
        %v603 = vunpack.c.l.b16 %v577
        %v604 = vunpack.c.h.b16 %v577
        %v605 = vunpack.c.l.b16 %v578
        %v606 = vunpack.c.h.b16 %v578
        %v607 = vunpack.c.l.b16 %v579
        %v608 = vunpack.c.h.b16 %v579
        %v609 = vunpack.c.l.b16 %v580
        %v610 = vunpack.c.h.b16 %v580
        %v611 = vunpack.c.l.b16 %v581
        %v612 = vunpack.c.h.b16 %v581
        %v613 = vpack.c.b16 %v601, %v597
        %v614 = vpack.c.b16 %v602, %v598
        %v615 = vpack.c.b16 %v603, %v599
        %v616 = vpack.c.b16 %v604, %v600
        %v617 = vpack.c.b16 %v609, %v605
        %v618 = vpack.c.b16 %v610, %v606
        %v619 = vpack.c.b16 %v611, %v607
        %v620 = vpack.c.b16 %v612, %v608
        %v626 = vsel %vm344, %v588, 0
        %v629 = vsel %vm344, %v587, 0
        %v632 = vsel %vm351, %v617, 0
        %v635 = vsel %vm351, %v618, 0
        %v638 = vsel %vm351, %v619, 0
        %v641 = vsel %vm351, %v620, 0
        %643 = vmatpush.bf16.msra.mxu0 0
        %644 = vmatpush.bf16.msra.mxu0 0
        %645 = vmatpush.bf16.msra.mxu0 0
        %646 = vmatpush.bf16.msra.mxu0 0
        %647 = vmatpush.bf16.msra.mxu0 0
        %648 = vmatpush.bf16.msra.mxu0 0
        %649 = vmatpush.bf16.msra.mxu0 %v632
        %650 = vmatpush.bf16.msra.mxu0 %v613
        %651 = vmatmul.bf16.gmra.mxu0 %v626
        %v652 = vpop.f32.mrf.mxu0
        %v653 = vadd.f32 0.0, %v652
        %v654 = vpop.f32.mrf.mxu0
        %v655 = vadd.f32 0.0, %v654
        %656 = vmatmul.bf16.gmra.mxu0 %v629
        %v657 = vpop.f32.mrf.mxu0
        %v658 = vadd.f32 0.0, %v657
        %v659 = vpop.f32.mrf.mxu0
        %v660 = vadd.f32 0.0, %v659
        %661 = vdwg.mxu0
        %662 = vmatpush.bf16.msra.mxu0 0
        %663 = vmatpush.bf16.msra.mxu0 0
        %664 = vmatpush.bf16.msra.mxu0 0
        %665 = vmatpush.bf16.msra.mxu0 0
        %666 = vmatpush.bf16.msra.mxu0 0
        %667 = vmatpush.bf16.msra.mxu0 0
        %668 = vmatpush.bf16.msra.mxu0 %v635
        %669 = vmatpush.bf16.msra.mxu0 %v614
        %670 = vmatmul.bf16.gmra.mxu0 %v626
        %v671 = vpop.f32.mrf.mxu0
        %v672 = vadd.f32 0.0, %v671
        %v673 = vpop.f32.mrf.mxu0
        %v674 = vadd.f32 0.0, %v673
        %675 = vmatmul.bf16.gmra.mxu0 %v629
        %v676 = vpop.f32.mrf.mxu0
        %v677 = vadd.f32 0.0, %v676
        %v678 = vpop.f32.mrf.mxu0
        %v679 = vadd.f32 0.0, %v678
        %680 = vdwg.mxu0
        %681 = vmatpush.bf16.msra.mxu0 0
        %682 = vmatpush.bf16.msra.mxu0 0
        %683 = vmatpush.bf16.msra.mxu0 0
        %684 = vmatpush.bf16.msra.mxu0 0
        %685 = vmatpush.bf16.msra.mxu0 0
        %686 = vmatpush.bf16.msra.mxu0 0
        %687 = vmatpush.bf16.msra.mxu0 %v638
        %688 = vmatpush.bf16.msra.mxu0 %v615
        %689 = vmatmul.bf16.gmra.mxu0 %v626
        %v690 = vpop.f32.mrf.mxu0
        %v691 = vadd.f32 0.0, %v690
        %v692 = vpop.f32.mrf.mxu0
        %v693 = vadd.f32 0.0, %v692
        %694 = vmatmul.bf16.gmra.mxu0 %v629
        %v695 = vpop.f32.mrf.mxu0
        %v696 = vadd.f32 0.0, %v695
        %v697 = vpop.f32.mrf.mxu0
        %v698 = vadd.f32 0.0, %v697
        %699 = vdwg.mxu0
        %700 = vmatpush.bf16.msra.mxu0 0
        %701 = vmatpush.bf16.msra.mxu0 0
        %702 = vmatpush.bf16.msra.mxu0 0
        %703 = vmatpush.bf16.msra.mxu0 0
        %704 = vmatpush.bf16.msra.mxu0 0
        %705 = vmatpush.bf16.msra.mxu0 0
        %706 = vmatpush.bf16.msra.mxu0 %v641
        %707 = vmatpush.bf16.msra.mxu0 %v616
        %708 = vmatmul.bf16.gmra.mxu0 %v626
        %v709 = vpop.f32.mrf.mxu0
        %v710 = vadd.f32 0.0, %v709
        %v711 = vpop.f32.mrf.mxu0
        %v712 = vadd.f32 0.0, %v711
        %713 = vmatmul.bf16.gmra.mxu0 %v629
        %v714 = vpop.f32.mrf.mxu0
        %v715 = vadd.f32 0.0, %v714
        %v716 = vpop.f32.mrf.mxu0
        %v717 = vadd.f32 0.0, %v716
        %718 = vdwg.mxu0
        %v719 = vadd.f32 %v506, %v653
        %v720 = vadd.f32 %v525, %v672
        %v721 = vadd.f32 %v544, %v691
        %v722 = vadd.f32 %v563, %v710
        %v723 = vadd.f32 %v508, %v655
        %v724 = vadd.f32 %v527, %v674
        %v725 = vadd.f32 %v546, %v693
        %v726 = vadd.f32 %v565, %v712
        %v727 = vadd.f32 %v511, %v658
        %v728 = vadd.f32 %v530, %v677
        %v729 = vadd.f32 %v549, %v696
        %v730 = vadd.f32 %v568, %v715
        %v731 = vadd.f32 %v513, %v660
        %v732 = vadd.f32 %v532, %v679
        %v733 = vadd.f32 %v551, %v698
        %v734 = vadd.f32 %v570, %v717
        %v735 = vld [vmem:[%s2] sm:$0xf]
        %v737 = vperm.slane %v735, 0
        %v738 = vperm.slane %v735, 1
        %v739 = vperm.slane %v735, 2
        %v740 = vperm.slane %v735, 3
        %v745 = vadd.f32 %v719, %v737
        %v746 = vadd.f32 %v720, %v738
        %v747 = vadd.f32 %v721, %v739
        %v748 = vadd.f32 %v722, %v740
        %v749 = vadd.f32 %v723, %v737
        %v750 = vadd.f32 %v724, %v738
        %v751 = vadd.f32 %v725, %v739
        %v752 = vadd.f32 %v726, %v740
        %v753 = vadd.f32 %v727, %v737
        %v754 = vadd.f32 %v728, %v738
        %v755 = vadd.f32 %v729, %v739
        %v756 = vadd.f32 %v730, %v740
        %v757 = vadd.f32 %v731, %v737
        %v758 = vadd.f32 %v732, %v738
        %v759 = vadd.f32 %v733, %v739
        %v760 = vadd.f32 %v734, %v740
        %v761 = vmax.f32 %v745, 0.0
        %v762 = vmax.f32 %v746, 0.0
        %v763 = vmax.f32 %v747, 0.0
        %v764 = vmax.f32 %v748, 0.0
        %v765 = vmax.f32 %v749, 0.0
        %v766 = vmax.f32 %v750, 0.0
        %v767 = vmax.f32 %v751, 0.0
        %v768 = vmax.f32 %v752, 0.0
        %v769 = vmax.f32 %v753, 0.0
        %v770 = vmax.f32 %v754, 0.0
        %v771 = vmax.f32 %v755, 0.0
        %v772 = vmax.f32 %v756, 0.0
        %v773 = vmax.f32 %v757, 0.0
        %v774 = vmax.f32 %v758, 0.0
        %v775 = vmax.f32 %v759, 0.0
        %v776 = vmax.f32 %v760, 0.0
        %v777 = vpack.c.bf16 %v765, %v761
        %v778 = vpack.c.bf16 %v766, %v762
        %v779 = vpack.c.bf16 %v767, %v763
        %v780 = vpack.c.bf16 %v768, %v764
        %v781 = vpack.c.bf16 %v773, %v769
        %v782 = vpack.c.bf16 %v774, %v770
        %v783 = vpack.c.bf16 %v775, %v771
        %v784 = vpack.c.bf16 %v776, %v772
        %v785 = vld [vmem:[%s3] sm:$0xf]
        %v786 = vld [vmem:[%s3 + $0x4] sm:$0xf]
        %v789 = vunpack.c.l.b16 %v785
        %v790 = vunpack.c.l.b16 %v786
        %v791 = vpack.c.b16 %v790, %v789
        %vm792 = vcmask 228352
        %v794 = vsel %vm792, %v791, 0
        %vm796 = vcmask 1045504
        %v798 = vsel %vm796, %v781, 0
        %v801 = vsel %vm796, %v782, 0
        %v804 = vsel %vm796, %v783, 0
        %v807 = vsel %vm796, %v784, 0
        %809 = vmatpush.bf16.msra.mxu0 0
        %810 = vmatpush.bf16.msra.mxu0 0
        %811 = vmatpush.bf16.msra.mxu0 0
        %812 = vmatpush.bf16.msra.mxu0 0
        %813 = vmatpush.bf16.msra.mxu0 0
        %814 = vmatpush.bf16.msra.mxu0 0
        %815 = vmatpush.bf16.msra.mxu0 %v798
        %816 = vmatpush.bf16.msra.mxu0 %v777
        %817 = vmatmul.bf16.gmra.mxu0 %v794
        %v818 = vpop.f32.mrf.mxu0
        %v819 = vadd.f32 0.0, %v818
        %v820 = vpop.f32.mrf.mxu0
        %v821 = vadd.f32 0.0, %v820
        %822 = vdwg.mxu0
        %823 = vmatpush.bf16.msra.mxu0 0
        %824 = vmatpush.bf16.msra.mxu0 0
        %825 = vmatpush.bf16.msra.mxu0 0
        %826 = vmatpush.bf16.msra.mxu0 0
        %827 = vmatpush.bf16.msra.mxu0 0
        %828 = vmatpush.bf16.msra.mxu0 0
        %829 = vmatpush.bf16.msra.mxu0 %v801
        %830 = vmatpush.bf16.msra.mxu0 %v778
        %831 = vmatmul.bf16.gmra.mxu0 %v794
        %v832 = vpop.f32.mrf.mxu0
        %v833 = vadd.f32 0.0, %v832
        %v834 = vpop.f32.mrf.mxu0
        %v835 = vadd.f32 0.0, %v834
        %836 = vdwg.mxu0
        %837 = vmatpush.bf16.msra.mxu0 0
        %838 = vmatpush.bf16.msra.mxu0 0
        %839 = vmatpush.bf16.msra.mxu0 0
        %840 = vmatpush.bf16.msra.mxu0 0
        %841 = vmatpush.bf16.msra.mxu0 0
        %842 = vmatpush.bf16.msra.mxu0 0
        %843 = vmatpush.bf16.msra.mxu0 %v804
        %844 = vmatpush.bf16.msra.mxu0 %v779
        %845 = vmatmul.bf16.gmra.mxu0 %v794
        %v846 = vpop.f32.mrf.mxu0
        %v847 = vadd.f32 0.0, %v846
        %v848 = vpop.f32.mrf.mxu0
        %v849 = vadd.f32 0.0, %v848
        %850 = vdwg.mxu0
        %851 = vmatpush.bf16.msra.mxu0 0
        %852 = vmatpush.bf16.msra.mxu0 0
        %853 = vmatpush.bf16.msra.mxu0 0
        %854 = vmatpush.bf16.msra.mxu0 0
        %855 = vmatpush.bf16.msra.mxu0 0
        %856 = vmatpush.bf16.msra.mxu0 0
        %857 = vmatpush.bf16.msra.mxu0 %v807
        %858 = vmatpush.bf16.msra.mxu0 %v780
        %859 = vmatmul.bf16.gmra.mxu0 %v794
        %v860 = vpop.f32.mrf.mxu0
        %v861 = vadd.f32 0.0, %v860
        %v862 = vpop.f32.mrf.mxu0
        %v863 = vadd.f32 0.0, %v862
        %864 = vdwg.mxu0
        %s865 = scalar_lea.vmem %s3, 8
        %v866 = vld [vmem:[%s865] sm:$0xf]
        %v867 = vld [vmem:[%s865 + $0x4] sm:$0xf]
        %v870 = vunpack.c.l.b16 %v866
        %v871 = vunpack.c.l.b16 %v867
        %v872 = vpack.c.b16 %v871, %v870
        %v874 = vsel %vm792, %v872, 0
        %876 = vmatpush.bf16.msra.mxu0 0
        %877 = vmatpush.bf16.msra.mxu0 0
        %878 = vmatpush.bf16.msra.mxu0 0
        %879 = vmatpush.bf16.msra.mxu0 0
        %880 = vmatpush.bf16.msra.mxu0 0
        %881 = vmatpush.bf16.msra.mxu0 0
        %882 = vmatpush.bf16.msra.mxu0 %v798
        %883 = vmatpush.bf16.msra.mxu0 %v777
        %884 = vmatmul.bf16.gmra.mxu0 %v874
        %v885 = vpop.f32.mrf.mxu0
        %v886 = vadd.f32 0.0, %v885
        %v887 = vpop.f32.mrf.mxu0
        %v888 = vadd.f32 0.0, %v887
        %889 = vdwg.mxu0
        %890 = vmatpush.bf16.msra.mxu0 0
        %891 = vmatpush.bf16.msra.mxu0 0
        %892 = vmatpush.bf16.msra.mxu0 0
        %893 = vmatpush.bf16.msra.mxu0 0
        %894 = vmatpush.bf16.msra.mxu0 0
        %895 = vmatpush.bf16.msra.mxu0 0
        %896 = vmatpush.bf16.msra.mxu0 %v801
        %897 = vmatpush.bf16.msra.mxu0 %v778
        %898 = vmatmul.bf16.gmra.mxu0 %v874
        %v899 = vpop.f32.mrf.mxu0
        %v900 = vadd.f32 0.0, %v899
        %v901 = vpop.f32.mrf.mxu0
        %v902 = vadd.f32 0.0, %v901
        %903 = vdwg.mxu0
        %904 = vmatpush.bf16.msra.mxu0 0
        %905 = vmatpush.bf16.msra.mxu0 0
        %906 = vmatpush.bf16.msra.mxu0 0
        %907 = vmatpush.bf16.msra.mxu0 0
        %908 = vmatpush.bf16.msra.mxu0 0
        %909 = vmatpush.bf16.msra.mxu0 0
        %910 = vmatpush.bf16.msra.mxu0 %v804
        %911 = vmatpush.bf16.msra.mxu0 %v779
        %912 = vmatmul.bf16.gmra.mxu0 %v874
        %v913 = vpop.f32.mrf.mxu0
        %v914 = vadd.f32 0.0, %v913
        %v915 = vpop.f32.mrf.mxu0
        %v916 = vadd.f32 0.0, %v915
        %917 = vdwg.mxu0
        %918 = vmatpush.bf16.msra.mxu0 0
        %919 = vmatpush.bf16.msra.mxu0 0
        %920 = vmatpush.bf16.msra.mxu0 0
        %921 = vmatpush.bf16.msra.mxu0 0
        %922 = vmatpush.bf16.msra.mxu0 0
        %923 = vmatpush.bf16.msra.mxu0 0
        %924 = vmatpush.bf16.msra.mxu0 %v807
        %925 = vmatpush.bf16.msra.mxu0 %v780
        %926 = vmatmul.bf16.gmra.mxu0 %v874
        %v927 = vpop.f32.mrf.mxu0
        %v928 = vadd.f32 0.0, %v927
        %v929 = vpop.f32.mrf.mxu0
        %v930 = vadd.f32 0.0, %v929
        %931 = vdwg.mxu0
        %v932 = vmax.f32 %v819, %v886
        %v933 = vmax.f32 %v833, %v900
        %v934 = vmax.f32 %v847, %v914
        %v935 = vmax.f32 %v861, %v928
        %v936 = vmax.f32 %v821, %v888
        %v937 = vmax.f32 %v835, %v902
        %v938 = vmax.f32 %v849, %v916
        %v939 = vmax.f32 %v863, %v930
        %v940 = vpack.c.bf16 %v936, %v932
        %v941 = vpack.c.bf16 %v937, %v933
        %v942 = vpack.c.bf16 %v938, %v934
        %v943 = vpack.c.bf16 %v939, %v935
        %v944 = vld [vmem:[#allocation4] sm:$0xff]
        %v945 = vld [vmem:[#allocation4 + $0x8] sm:$0xff]
        %v946 = vld [vmem:[#allocation4 + $0x10] sm:$0xff]
        %v947 = vld [vmem:[#allocation4 + $0x18] sm:$0xff]
        %v948 = vld [vmem:[#allocation4 + $0x20] sm:$0xff]
        %v949 = vld [vmem:[#allocation4 + $0x28] sm:$0xff]
        %v950 = vld [vmem:[#allocation4 + $0x30] sm:$0xff]
        %v951 = vld [vmem:[#allocation4 + $0x38] sm:$0xff]
        %v952 = vld [vmem:[#allocation4 + $0x40] sm:$0xff]
        %v953 = vld [vmem:[#allocation4 + $0x48] sm:$0xff]
        %v954 = vld [vmem:[#allocation4 + $0x50] sm:$0xff]
        %v955 = vld [vmem:[#allocation4 + $0x58] sm:$0xff]
        %v956 = vld [vmem:[#allocation4 + $0x60] sm:$0xff]
        %v957 = vld [vmem:[#allocation4 + $0x68] sm:$0xff]
        %v958 = vld [vmem:[#allocation4 + $0x70] sm:$0xff]
        %v959 = vld [vmem:[#allocation4 + $0x78] sm:$0xff]
        %v960 = vld [vmem:[#allocation4 + $0x80] sm:$0xff]
        %v961 = vld [vmem:[#allocation4 + $0x88] sm:$0xff]
        %v962 = vld [vmem:[#allocation4 + $0x90] sm:$0xff]
        %v963 = vld [vmem:[#allocation4 + $0x98] sm:$0xff]
        %v964 = vld [vmem:[#allocation4 + $0xa0] sm:$0xff]
        %v965 = vld [vmem:[#allocation4 + $0xa8] sm:$0xff]
        %v966 = vld [vmem:[#allocation4 + $0xb0] sm:$0xff]
        %v967 = vld [vmem:[#allocation4 + $0xb8] sm:$0xff]
        %v968 = vld [vmem:[#allocation4 + $0xc0] sm:$0xff]
        %v969 = vld [vmem:[#allocation4 + $0xc8] sm:$0xff]
        %v970 = vld [vmem:[#allocation4 + $0xd0] sm:$0xff]
        %v971 = vld [vmem:[#allocation4 + $0xd8] sm:$0xff]
        %v972 = vld [vmem:[#allocation4 + $0xe0] sm:$0xff]
        %v973 = vld [vmem:[#allocation4 + $0xe8] sm:$0xff]
        %v974 = vld [vmem:[#allocation4 + $0xf0] sm:$0xff]
        %v975 = vld [vmem:[#allocation4 + $0xf8] sm:$0xff]
        %v976 = vld [vmem:[#allocation4 + $0x100] sm:$0xff]
        %v977 = vld [vmem:[#allocation4 + $0x108] sm:$0xff]
        %v978 = vld [vmem:[#allocation4 + $0x110] sm:$0xff]
        %v979 = vld [vmem:[#allocation4 + $0x118] sm:$0xff]
        %v980 = vld [vmem:[#allocation4 + $0x120] sm:$0xff]
        %v981 = vld [vmem:[#allocation4 + $0x128] sm:$0xff]
        %v982 = vld [vmem:[#allocation4 + $0x130] sm:$0xff]
        %v983 = vld [vmem:[#allocation4 + $0x138] sm:$0xff]
        %v984 = vld [vmem:[#allocation4 + $0x140] sm:$0xff]
        %v985 = vld [vmem:[#allocation4 + $0x148] sm:$0xff]
        %v986 = vld [vmem:[#allocation4 + $0x150] sm:$0xff]
        %v987 = vld [vmem:[#allocation4 + $0x158] sm:$0xff]
        %v988 = vld [vmem:[#allocation4 + $0x160] sm:$0xff]
        %v989 = vld [vmem:[#allocation4 + $0x168] sm:$0xff]
        %v990 = vld [vmem:[#allocation4 + $0x170] sm:$0xff]
        %v991 = vld [vmem:[#allocation4 + $0x178] sm:$0xff]
        %v992 = vld [vmem:[#allocation4 + $0x180] sm:$0xff]
        %v993 = vld [vmem:[#allocation4 + $0x188] sm:$0xff]
        %v994 = vld [vmem:[#allocation4 + $0x190] sm:$0xff]
        %v995 = vld [vmem:[#allocation4 + $0x198] sm:$0xff]
        %v996 = vld [vmem:[#allocation4 + $0x1a0] sm:$0xff]
        %v997 = vld [vmem:[#allocation4 + $0x1a8] sm:$0xff]
        %v998 = vld [vmem:[#allocation4 + $0x1b0] sm:$0xff]
        %v999 = vld [vmem:[#allocation4 + $0x1b8] sm:$0xff]
        %v1056 = vunpack.c.l.b16 %v944
        %v1057 = vunpack.c.h.b16 %v944
        %v1058 = vunpack.c.l.b16 %v945
        %v1059 = vunpack.c.h.b16 %v945
        %v1060 = vunpack.c.l.b16 %v946
        %v1061 = vunpack.c.h.b16 %v946
        %v1062 = vunpack.c.l.b16 %v947
        %v1063 = vunpack.c.h.b16 %v947
        %v1064 = vunpack.c.l.b16 %v948
        %v1065 = vunpack.c.h.b16 %v948
        %v1066 = vunpack.c.l.b16 %v949
        %v1067 = vunpack.c.h.b16 %v949
        %v1068 = vunpack.c.l.b16 %v950
        %v1069 = vunpack.c.h.b16 %v950
        %v1070 = vunpack.c.l.b16 %v951
        %v1071 = vunpack.c.h.b16 %v951
        %v1072 = vunpack.c.l.b16 %v952
        %v1073 = vunpack.c.h.b16 %v952
        %v1074 = vunpack.c.l.b16 %v953
        %v1075 = vunpack.c.h.b16 %v953
        %v1076 = vunpack.c.l.b16 %v954
        %v1077 = vunpack.c.h.b16 %v954
        %v1078 = vunpack.c.l.b16 %v955
        %v1079 = vunpack.c.h.b16 %v955
        %v1080 = vunpack.c.l.b16 %v956
        %v1081 = vunpack.c.h.b16 %v956
        %v1082 = vunpack.c.l.b16 %v957
        %v1083 = vunpack.c.h.b16 %v957
        %v1084 = vunpack.c.l.b16 %v958
        %v1085 = vunpack.c.h.b16 %v958
        %v1086 = vunpack.c.l.b16 %v959
        %v1087 = vunpack.c.h.b16 %v959
        %v1088 = vunpack.c.l.b16 %v960
        %v1089 = vunpack.c.h.b16 %v960
        %v1090 = vunpack.c.l.b16 %v961
        %v1091 = vunpack.c.h.b16 %v961
        %v1092 = vunpack.c.l.b16 %v962
        %v1093 = vunpack.c.h.b16 %v962
        %v1094 = vunpack.c.l.b16 %v963
        %v1095 = vunpack.c.h.b16 %v963
        %v1096 = vunpack.c.l.b16 %v964
        %v1097 = vunpack.c.h.b16 %v964
        %v1098 = vunpack.c.l.b16 %v965
        %v1099 = vunpack.c.h.b16 %v965
        %v1100 = vunpack.c.l.b16 %v966
        %v1101 = vunpack.c.h.b16 %v966
        %v1102 = vunpack.c.l.b16 %v967
        %v1103 = vunpack.c.h.b16 %v967
        %v1104 = vunpack.c.l.b16 %v968
        %v1105 = vunpack.c.h.b16 %v968
        %v1106 = vunpack.c.l.b16 %v969
        %v1107 = vunpack.c.h.b16 %v969
        %v1108 = vunpack.c.l.b16 %v970
        %v1109 = vunpack.c.h.b16 %v970
        %v1110 = vunpack.c.l.b16 %v971
        %v1111 = vunpack.c.h.b16 %v971
        %v1112 = vunpack.c.l.b16 %v972
        %v1113 = vunpack.c.h.b16 %v972
        %v1114 = vunpack.c.l.b16 %v973
        %v1115 = vunpack.c.h.b16 %v973
        %v1116 = vunpack.c.l.b16 %v974
        %v1117 = vunpack.c.h.b16 %v974
        %v1118 = vunpack.c.l.b16 %v975
        %v1119 = vunpack.c.h.b16 %v975
        %v1120 = vunpack.c.l.b16 %v976
        %v1121 = vunpack.c.h.b16 %v976
        %v1122 = vunpack.c.l.b16 %v977
        %v1123 = vunpack.c.h.b16 %v977
        %v1124 = vunpack.c.l.b16 %v978
        %v1125 = vunpack.c.h.b16 %v978
        %v1126 = vunpack.c.l.b16 %v979
        %v1127 = vunpack.c.h.b16 %v979
        %v1128 = vunpack.c.l.b16 %v980
        %v1129 = vunpack.c.h.b16 %v980
        %v1130 = vunpack.c.l.b16 %v981
        %v1131 = vunpack.c.h.b16 %v981
        %v1132 = vunpack.c.l.b16 %v982
        %v1133 = vunpack.c.h.b16 %v982
        %v1134 = vunpack.c.l.b16 %v983
        %v1135 = vunpack.c.h.b16 %v983
        %v1136 = vunpack.c.l.b16 %v984
        %v1137 = vunpack.c.h.b16 %v984
        %v1138 = vunpack.c.l.b16 %v985
        %v1139 = vunpack.c.h.b16 %v985
        %v1140 = vunpack.c.l.b16 %v986
        %v1141 = vunpack.c.h.b16 %v986
        %v1142 = vunpack.c.l.b16 %v987
        %v1143 = vunpack.c.h.b16 %v987
        %v1144 = vunpack.c.l.b16 %v988
        %v1145 = vunpack.c.h.b16 %v988
        %v1146 = vunpack.c.l.b16 %v989
        %v1147 = vunpack.c.h.b16 %v989
        %v1148 = vunpack.c.l.b16 %v990
        %v1149 = vunpack.c.h.b16 %v990
        %v1150 = vunpack.c.l.b16 %v991
        %v1151 = vunpack.c.h.b16 %v991
        %v1152 = vunpack.c.l.b16 %v992
        %v1153 = vunpack.c.h.b16 %v992
        %v1154 = vunpack.c.l.b16 %v993
        %v1155 = vunpack.c.h.b16 %v993
        %v1156 = vunpack.c.l.b16 %v994
        %v1157 = vunpack.c.h.b16 %v994
        %v1158 = vunpack.c.l.b16 %v995
        %v1159 = vunpack.c.h.b16 %v995
        %v1160 = vunpack.c.l.b16 %v996
        %v1161 = vunpack.c.h.b16 %v996
        %v1162 = vunpack.c.l.b16 %v997
        %v1163 = vunpack.c.h.b16 %v997
        %v1164 = vunpack.c.l.b16 %v998
        %v1165 = vunpack.c.h.b16 %v998
        %v1166 = vunpack.c.l.b16 %v999
        %v1167 = vunpack.c.h.b16 %v999
        %v1168 = vpack.c.b16 %v1058, %v1056
        %v1169 = vpack.c.b16 %v1059, %v1057
        %v1170 = vpack.c.b16 %v1062, %v1060
        %v1171 = vpack.c.b16 %v1063, %v1061
        %v1172 = vpack.c.b16 %v1066, %v1064
        %v1173 = vpack.c.b16 %v1067, %v1065
        %v1174 = vpack.c.b16 %v1070, %v1068
        %v1175 = vpack.c.b16 %v1071, %v1069
        %v1176 = vpack.c.b16 %v1074, %v1072
        %v1177 = vpack.c.b16 %v1075, %v1073
        %v1178 = vpack.c.b16 %v1078, %v1076
        %v1179 = vpack.c.b16 %v1079, %v1077
        %v1180 = vpack.c.b16 %v1082, %v1080
        %v1181 = vpack.c.b16 %v1083, %v1081
        %v1182 = vpack.c.b16 %v1086, %v1084
        %v1183 = vpack.c.b16 %v1087, %v1085
        %v1184 = vpack.c.b16 %v1090, %v1088
        %v1185 = vpack.c.b16 %v1091, %v1089
        %v1186 = vpack.c.b16 %v1094, %v1092
        %v1187 = vpack.c.b16 %v1095, %v1093
        %v1188 = vpack.c.b16 %v1098, %v1096
        %v1189 = vpack.c.b16 %v1099, %v1097
        %v1190 = vpack.c.b16 %v1102, %v1100
        %v1191 = vpack.c.b16 %v1103, %v1101
        %v1192 = vpack.c.b16 %v1106, %v1104
        %v1193 = vpack.c.b16 %v1107, %v1105
        %v1194 = vpack.c.b16 %v1110, %v1108
        %v1195 = vpack.c.b16 %v1111, %v1109
        %v1196 = vpack.c.b16 %v1114, %v1112
        %v1197 = vpack.c.b16 %v1115, %v1113
        %v1198 = vpack.c.b16 %v1118, %v1116
        %v1199 = vpack.c.b16 %v1119, %v1117
        %v1200 = vpack.c.b16 %v1122, %v1120
        %v1201 = vpack.c.b16 %v1123, %v1121
        %v1202 = vpack.c.b16 %v1126, %v1124
        %v1203 = vpack.c.b16 %v1127, %v1125
        %v1204 = vpack.c.b16 %v1130, %v1128
        %v1205 = vpack.c.b16 %v1131, %v1129
        %v1206 = vpack.c.b16 %v1134, %v1132
        %v1207 = vpack.c.b16 %v1135, %v1133
        %v1208 = vpack.c.b16 %v1138, %v1136
        %v1209 = vpack.c.b16 %v1139, %v1137
        %v1210 = vpack.c.b16 %v1142, %v1140
        %v1211 = vpack.c.b16 %v1143, %v1141
        %v1212 = vpack.c.b16 %v1146, %v1144
        %v1213 = vpack.c.b16 %v1147, %v1145
        %v1214 = vpack.c.b16 %v1150, %v1148
        %v1215 = vpack.c.b16 %v1151, %v1149
        %v1216 = vpack.c.b16 %v1154, %v1152
        %v1217 = vpack.c.b16 %v1155, %v1153
        %v1218 = vpack.c.b16 %v1158, %v1156
        %v1219 = vpack.c.b16 %v1159, %v1157
        %v1220 = vpack.c.b16 %v1162, %v1160
        %v1221 = vpack.c.b16 %v1163, %v1161
        %v1222 = vpack.c.b16 %v1166, %v1164
        %v1223 = vpack.c.b16 %v1167, %v1165
        %vm1280 = vcmask 523264
        %v1282 = vsel %vm1280, %v943, 0
        %1284 = vmatpush.bf16.msra.mxu0 %v1182
        %1285 = vmatpush.bf16.msra.mxu0 %v1180
        %1286 = vmatpush.bf16.msra.mxu0 %v1178
        %1287 = vmatpush.bf16.msra.mxu0 %v1176
        %1288 = vmatpush.bf16.msra.mxu0 %v1174
        %1289 = vmatpush.bf16.msra.mxu0 %v1172
        %1290 = vmatpush.bf16.msra.mxu0 %v1170
        %1291 = vmatpush.bf16.msra.mxu0 %v1168
        %1292 = vmatmul.bf16.gmra.mxu0 %v940
        %v1293 = vpop.f32.mrf.mxu0
        %v1294 = vadd.f32 0.0, %v1293
        %v1295 = vpop.f32.mrf.mxu0
        %v1296 = vadd.f32 0.0, %v1295
        %1297 = vdwg.mxu0
        %1298 = vmatpush.bf16.msra.mxu0 %v1198
        %1299 = vmatpush.bf16.msra.mxu0 %v1196
        %1300 = vmatpush.bf16.msra.mxu0 %v1194
        %1301 = vmatpush.bf16.msra.mxu0 %v1192
        %1302 = vmatpush.bf16.msra.mxu0 %v1190
        %1303 = vmatpush.bf16.msra.mxu0 %v1188
        %1304 = vmatpush.bf16.msra.mxu0 %v1186
        %1305 = vmatpush.bf16.msra.mxu0 %v1184
        %1306 = vmatmul.bf16.gmra.mxu0 %v941
        %v1307 = vpop.f32.mrf.mxu0
        %v1308 = vadd.f32 %v1294, %v1307
        %v1309 = vpop.f32.mrf.mxu0
        %v1310 = vadd.f32 %v1296, %v1309
        %1311 = vdwg.mxu0
        %1312 = vmatpush.bf16.msra.mxu0 %v1214
        %1313 = vmatpush.bf16.msra.mxu0 %v1212
        %1314 = vmatpush.bf16.msra.mxu0 %v1210
        %1315 = vmatpush.bf16.msra.mxu0 %v1208
        %1316 = vmatpush.bf16.msra.mxu0 %v1206
        %1317 = vmatpush.bf16.msra.mxu0 %v1204
        %1318 = vmatpush.bf16.msra.mxu0 %v1202
        %1319 = vmatpush.bf16.msra.mxu0 %v1200
        %1320 = vmatmul.bf16.gmra.mxu0 %v942
        %v1321 = vpop.f32.mrf.mxu0
        %v1322 = vadd.f32 %v1308, %v1321
        %v1323 = vpop.f32.mrf.mxu0
        %v1324 = vadd.f32 %v1310, %v1323
        %1325 = vdwg.mxu0
        %1326 = vmatpush.bf16.msra.mxu0 0
        %1327 = vmatpush.bf16.msra.mxu0 0
        %1328 = vmatpush.bf16.msra.mxu0 0
        %1329 = vmatpush.bf16.msra.mxu0 0
        %1330 = vmatpush.bf16.msra.mxu0 %v1222
        %1331 = vmatpush.bf16.msra.mxu0 %v1220
        %1332 = vmatpush.bf16.msra.mxu0 %v1218
        %1333 = vmatpush.bf16.msra.mxu0 %v1216
        %1334 = vmatmul.bf16.gmra.mxu0 %v1282
        %v1335 = vpop.f32.mrf.mxu0
        %v1336 = vadd.f32 %v1322, %v1335
        %v1337 = vpop.f32.mrf.mxu0
        %v1338 = vadd.f32 %v1324, %v1337
        %1339 = vdwg.mxu0
        %1340 = vmatpush.bf16.msra.mxu0 %v1183
        %1341 = vmatpush.bf16.msra.mxu0 %v1181
        %1342 = vmatpush.bf16.msra.mxu0 %v1179
        %1343 = vmatpush.bf16.msra.mxu0 %v1177
        %1344 = vmatpush.bf16.msra.mxu0 %v1175
        %1345 = vmatpush.bf16.msra.mxu0 %v1173
        %1346 = vmatpush.bf16.msra.mxu0 %v1171
        %1347 = vmatpush.bf16.msra.mxu0 %v1169
        %1348 = vmatmul.bf16.gmra.mxu0 %v940
        %v1349 = vpop.f32.mrf.mxu0
        %v1350 = vadd.f32 0.0, %v1349
        %v1351 = vpop.f32.mrf.mxu0
        %v1352 = vadd.f32 0.0, %v1351
        %1353 = vdwg.mxu0
        %1354 = vmatpush.bf16.msra.mxu0 %v1199
        %1355 = vmatpush.bf16.msra.mxu0 %v1197
        %1356 = vmatpush.bf16.msra.mxu0 %v1195
        %1357 = vmatpush.bf16.msra.mxu0 %v1193
        %1358 = vmatpush.bf16.msra.mxu0 %v1191
        %1359 = vmatpush.bf16.msra.mxu0 %v1189
        %1360 = vmatpush.bf16.msra.mxu0 %v1187
        %1361 = vmatpush.bf16.msra.mxu0 %v1185
        %1362 = vmatmul.bf16.gmra.mxu0 %v941
        %v1363 = vpop.f32.mrf.mxu0
        %v1364 = vadd.f32 %v1350, %v1363
        %v1365 = vpop.f32.mrf.mxu0
        %v1366 = vadd.f32 %v1352, %v1365
        %1367 = vdwg.mxu0
        %1368 = vmatpush.bf16.msra.mxu0 %v1215
        %1369 = vmatpush.bf16.msra.mxu0 %v1213
        %1370 = vmatpush.bf16.msra.mxu0 %v1211
        %1371 = vmatpush.bf16.msra.mxu0 %v1209
        %1372 = vmatpush.bf16.msra.mxu0 %v1207
        %1373 = vmatpush.bf16.msra.mxu0 %v1205
        %1374 = vmatpush.bf16.msra.mxu0 %v1203
        %1375 = vmatpush.bf16.msra.mxu0 %v1201
        %1376 = vmatmul.bf16.gmra.mxu0 %v942
        %v1377 = vpop.f32.mrf.mxu0
        %v1378 = vadd.f32 %v1364, %v1377
        %v1379 = vpop.f32.mrf.mxu0
        %v1380 = vadd.f32 %v1366, %v1379
        %1381 = vdwg.mxu0
        %1382 = vmatpush.bf16.msra.mxu0 0
        %1383 = vmatpush.bf16.msra.mxu0 0
        %1384 = vmatpush.bf16.msra.mxu0 0
        %1385 = vmatpush.bf16.msra.mxu0 0
        %1386 = vmatpush.bf16.msra.mxu0 %v1223
        %1387 = vmatpush.bf16.msra.mxu0 %v1221
        %1388 = vmatpush.bf16.msra.mxu0 %v1219
        %1389 = vmatpush.bf16.msra.mxu0 %v1217
        %1390 = vmatmul.bf16.gmra.mxu0 %v1282
        %v1391 = vpop.f32.mrf.mxu0
        %v1392 = vadd.f32 %v1378, %v1391
        %v1393 = vpop.f32.mrf.mxu0
        %v1394 = vadd.f32 %v1380, %v1393
        %1395 = vdwg.mxu0
        %s1396 = scalar_lea.vmem [#allocation4], 448
        %v1397 = vld [vmem:[%s1396] sm:$0xff]
        %v1398 = vld [vmem:[%s1396 + $0x8] sm:$0xff]
        %v1399 = vld [vmem:[%s1396 + $0x10] sm:$0xff]
        %v1400 = vld [vmem:[%s1396 + $0x18] sm:$0xff]
        %v1401 = vld [vmem:[%s1396 + $0x20] sm:$0xff]
        %v1402 = vld [vmem:[%s1396 + $0x28] sm:$0xff]
        %v1403 = vld [vmem:[%s1396 + $0x30] sm:$0xff]
        %v1404 = vld [vmem:[%s1396 + $0x38] sm:$0xff]
        %v1405 = vld [vmem:[%s1396 + $0x40] sm:$0xff]
        %v1406 = vld [vmem:[%s1396 + $0x48] sm:$0xff]
        %v1407 = vld [vmem:[%s1396 + $0x50] sm:$0xff]
        %v1408 = vld [vmem:[%s1396 + $0x58] sm:$0xff]
        %v1409 = vld [vmem:[%s1396 + $0x60] sm:$0xff]
        %v1410 = vld [vmem:[%s1396 + $0x68] sm:$0xff]
        %v1411 = vld [vmem:[%s1396 + $0x70] sm:$0xff]
        %v1412 = vld [vmem:[%s1396 + $0x78] sm:$0xff]
        %v1413 = vld [vmem:[%s1396 + $0x80] sm:$0xff]
        %v1414 = vld [vmem:[%s1396 + $0x88] sm:$0xff]
        %v1415 = vld [vmem:[%s1396 + $0x90] sm:$0xff]
        %v1416 = vld [vmem:[%s1396 + $0x98] sm:$0xff]
        %v1417 = vld [vmem:[%s1396 + $0xa0] sm:$0xff]
        %v1418 = vld [vmem:[%s1396 + $0xa8] sm:$0xff]
        %v1419 = vld [vmem:[%s1396 + $0xb0] sm:$0xff]
        %v1420 = vld [vmem:[%s1396 + $0xb8] sm:$0xff]
        %v1421 = vld [vmem:[%s1396 + $0xc0] sm:$0xff]
        %v1422 = vld [vmem:[%s1396 + $0xc8] sm:$0xff]
        %v1423 = vld [vmem:[%s1396 + $0xd0] sm:$0xff]
        %v1424 = vld [vmem:[%s1396 + $0xd8] sm:$0xff]
        %v1425 = vld [vmem:[%s1396 + $0xe0] sm:$0xff]
        %v1426 = vld [vmem:[%s1396 + $0xe8] sm:$0xff]
        %v1427 = vld [vmem:[%s1396 + $0xf0] sm:$0xff]
        %v1428 = vld [vmem:[%s1396 + $0xf8] sm:$0xff]
        %v1429 = vld [vmem:[%s1396 + $0x100] sm:$0xff]
        %v1430 = vld [vmem:[%s1396 + $0x108] sm:$0xff]
        %v1431 = vld [vmem:[%s1396 + $0x110] sm:$0xff]
        %v1432 = vld [vmem:[%s1396 + $0x118] sm:$0xff]
        %v1433 = vld [vmem:[%s1396 + $0x120] sm:$0xff]
        %v1434 = vld [vmem:[%s1396 + $0x128] sm:$0xff]
        %v1435 = vld [vmem:[%s1396 + $0x130] sm:$0xff]
        %v1436 = vld [vmem:[%s1396 + $0x138] sm:$0xff]
        %v1437 = vld [vmem:[%s1396 + $0x140] sm:$0xff]
        %v1438 = vld [vmem:[%s1396 + $0x148] sm:$0xff]
        %v1439 = vld [vmem:[%s1396 + $0x150] sm:$0xff]
        %v1440 = vld [vmem:[%s1396 + $0x158] sm:$0xff]
        %v1441 = vld [vmem:[%s1396 + $0x160] sm:$0xff]
        %v1442 = vld [vmem:[%s1396 + $0x168] sm:$0xff]
        %v1443 = vld [vmem:[%s1396 + $0x170] sm:$0xff]
        %v1444 = vld [vmem:[%s1396 + $0x178] sm:$0xff]
        %v1445 = vld [vmem:[%s1396 + $0x180] sm:$0xff]
        %v1446 = vld [vmem:[%s1396 + $0x188] sm:$0xff]
        %v1447 = vld [vmem:[%s1396 + $0x190] sm:$0xff]
        %v1448 = vld [vmem:[%s1396 + $0x198] sm:$0xff]
        %v1449 = vld [vmem:[%s1396 + $0x1a0] sm:$0xff]
        %v1450 = vld [vmem:[%s1396 + $0x1a8] sm:$0xff]
        %v1451 = vld [vmem:[%s1396 + $0x1b0] sm:$0xff]
        %v1452 = vld [vmem:[%s1396 + $0x1b8] sm:$0xff]
        %v1509 = vunpack.c.l.b16 %v1397
        %v1510 = vunpack.c.h.b16 %v1397
        %v1511 = vunpack.c.l.b16 %v1398
        %v1512 = vunpack.c.h.b16 %v1398
        %v1513 = vunpack.c.l.b16 %v1399
        %v1514 = vunpack.c.h.b16 %v1399
        %v1515 = vunpack.c.l.b16 %v1400
        %v1516 = vunpack.c.h.b16 %v1400
        %v1517 = vunpack.c.l.b16 %v1401
        %v1518 = vunpack.c.h.b16 %v1401
        %v1519 = vunpack.c.l.b16 %v1402
        %v1520 = vunpack.c.h.b16 %v1402
        %v1521 = vunpack.c.l.b16 %v1403
        %v1522 = vunpack.c.h.b16 %v1403
        %v1523 = vunpack.c.l.b16 %v1404
        %v1524 = vunpack.c.h.b16 %v1404
        %v1525 = vunpack.c.l.b16 %v1405
        %v1526 = vunpack.c.h.b16 %v1405
        %v1527 = vunpack.c.l.b16 %v1406
        %v1528 = vunpack.c.h.b16 %v1406
        %v1529 = vunpack.c.l.b16 %v1407
        %v1530 = vunpack.c.h.b16 %v1407
        %v1531 = vunpack.c.l.b16 %v1408
        %v1532 = vunpack.c.h.b16 %v1408
        %v1533 = vunpack.c.l.b16 %v1409
        %v1534 = vunpack.c.h.b16 %v1409
        %v1535 = vunpack.c.l.b16 %v1410
        %v1536 = vunpack.c.h.b16 %v1410
        %v1537 = vunpack.c.l.b16 %v1411
        %v1538 = vunpack.c.h.b16 %v1411
        %v1539 = vunpack.c.l.b16 %v1412
        %v1540 = vunpack.c.h.b16 %v1412
        %v1541 = vunpack.c.l.b16 %v1413
        %v1542 = vunpack.c.h.b16 %v1413
        %v1543 = vunpack.c.l.b16 %v1414
        %v1544 = vunpack.c.h.b16 %v1414
        %v1545 = vunpack.c.l.b16 %v1415
        %v1546 = vunpack.c.h.b16 %v1415
        %v1547 = vunpack.c.l.b16 %v1416
        %v1548 = vunpack.c.h.b16 %v1416
        %v1549 = vunpack.c.l.b16 %v1417
        %v1550 = vunpack.c.h.b16 %v1417
        %v1551 = vunpack.c.l.b16 %v1418
        %v1552 = vunpack.c.h.b16 %v1418
        %v1553 = vunpack.c.l.b16 %v1419
        %v1554 = vunpack.c.h.b16 %v1419
        %v1555 = vunpack.c.l.b16 %v1420
        %v1556 = vunpack.c.h.b16 %v1420
        %v1557 = vunpack.c.l.b16 %v1421
        %v1558 = vunpack.c.h.b16 %v1421
        %v1559 = vunpack.c.l.b16 %v1422
        %v1560 = vunpack.c.h.b16 %v1422
        %v1561 = vunpack.c.l.b16 %v1423
        %v1562 = vunpack.c.h.b16 %v1423
        %v1563 = vunpack.c.l.b16 %v1424
        %v1564 = vunpack.c.h.b16 %v1424
        %v1565 = vunpack.c.l.b16 %v1425
        %v1566 = vunpack.c.h.b16 %v1425
        %v1567 = vunpack.c.l.b16 %v1426
        %v1568 = vunpack.c.h.b16 %v1426
        %v1569 = vunpack.c.l.b16 %v1427
        %v1570 = vunpack.c.h.b16 %v1427
        %v1571 = vunpack.c.l.b16 %v1428
        %v1572 = vunpack.c.h.b16 %v1428
        %v1573 = vunpack.c.l.b16 %v1429
        %v1574 = vunpack.c.h.b16 %v1429
        %v1575 = vunpack.c.l.b16 %v1430
        %v1576 = vunpack.c.h.b16 %v1430
        %v1577 = vunpack.c.l.b16 %v1431
        %v1578 = vunpack.c.h.b16 %v1431
        %v1579 = vunpack.c.l.b16 %v1432
        %v1580 = vunpack.c.h.b16 %v1432
        %v1581 = vunpack.c.l.b16 %v1433
        %v1582 = vunpack.c.h.b16 %v1433
        %v1583 = vunpack.c.l.b16 %v1434
        %v1584 = vunpack.c.h.b16 %v1434
        %v1585 = vunpack.c.l.b16 %v1435
        %v1586 = vunpack.c.h.b16 %v1435
        %v1587 = vunpack.c.l.b16 %v1436
        %v1588 = vunpack.c.h.b16 %v1436
        %v1589 = vunpack.c.l.b16 %v1437
        %v1590 = vunpack.c.h.b16 %v1437
        %v1591 = vunpack.c.l.b16 %v1438
        %v1592 = vunpack.c.h.b16 %v1438
        %v1593 = vunpack.c.l.b16 %v1439
        %v1594 = vunpack.c.h.b16 %v1439
        %v1595 = vunpack.c.l.b16 %v1440
        %v1596 = vunpack.c.h.b16 %v1440
        %v1597 = vunpack.c.l.b16 %v1441
        %v1598 = vunpack.c.h.b16 %v1441
        %v1599 = vunpack.c.l.b16 %v1442
        %v1600 = vunpack.c.h.b16 %v1442
        %v1601 = vunpack.c.l.b16 %v1443
        %v1602 = vunpack.c.h.b16 %v1443
        %v1603 = vunpack.c.l.b16 %v1444
        %v1604 = vunpack.c.h.b16 %v1444
        %v1605 = vunpack.c.l.b16 %v1445
        %v1606 = vunpack.c.h.b16 %v1445
        %v1607 = vunpack.c.l.b16 %v1446
        %v1608 = vunpack.c.h.b16 %v1446
        %v1609 = vunpack.c.l.b16 %v1447
        %v1610 = vunpack.c.h.b16 %v1447
        %v1611 = vunpack.c.l.b16 %v1448
        %v1612 = vunpack.c.h.b16 %v1448
        %v1613 = vunpack.c.l.b16 %v1449
        %v1614 = vunpack.c.h.b16 %v1449
        %v1615 = vunpack.c.l.b16 %v1450
        %v1616 = vunpack.c.h.b16 %v1450
        %v1617 = vunpack.c.l.b16 %v1451
        %v1618 = vunpack.c.h.b16 %v1451
        %v1619 = vunpack.c.l.b16 %v1452
        %v1620 = vunpack.c.h.b16 %v1452
        %v1621 = vpack.c.b16 %v1511, %v1509
        %v1622 = vpack.c.b16 %v1512, %v1510
        %v1623 = vpack.c.b16 %v1515, %v1513
        %v1624 = vpack.c.b16 %v1516, %v1514
        %v1625 = vpack.c.b16 %v1519, %v1517
        %v1626 = vpack.c.b16 %v1520, %v1518
        %v1627 = vpack.c.b16 %v1523, %v1521
        %v1628 = vpack.c.b16 %v1524, %v1522
        %v1629 = vpack.c.b16 %v1527, %v1525
        %v1630 = vpack.c.b16 %v1528, %v1526
        %v1631 = vpack.c.b16 %v1531, %v1529
        %v1632 = vpack.c.b16 %v1532, %v1530
        %v1633 = vpack.c.b16 %v1535, %v1533
        %v1634 = vpack.c.b16 %v1536, %v1534
        %v1635 = vpack.c.b16 %v1539, %v1537
        %v1636 = vpack.c.b16 %v1540, %v1538
        %v1637 = vpack.c.b16 %v1543, %v1541
        %v1638 = vpack.c.b16 %v1544, %v1542
        %v1639 = vpack.c.b16 %v1547, %v1545
        %v1640 = vpack.c.b16 %v1548, %v1546
        %v1641 = vpack.c.b16 %v1551, %v1549
        %v1642 = vpack.c.b16 %v1552, %v1550
        %v1643 = vpack.c.b16 %v1555, %v1553
        %v1644 = vpack.c.b16 %v1556, %v1554
        %v1645 = vpack.c.b16 %v1559, %v1557
        %v1646 = vpack.c.b16 %v1560, %v1558
        %v1647 = vpack.c.b16 %v1563, %v1561
        %v1648 = vpack.c.b16 %v1564, %v1562
        %v1649 = vpack.c.b16 %v1567, %v1565
        %v1650 = vpack.c.b16 %v1568, %v1566
        %v1651 = vpack.c.b16 %v1571, %v1569
        %v1652 = vpack.c.b16 %v1572, %v1570
        %v1653 = vpack.c.b16 %v1575, %v1573
        %v1654 = vpack.c.b16 %v1576, %v1574
        %v1655 = vpack.c.b16 %v1579, %v1577
        %v1656 = vpack.c.b16 %v1580, %v1578
        %v1657 = vpack.c.b16 %v1583, %v1581
        %v1658 = vpack.c.b16 %v1584, %v1582
        %v1659 = vpack.c.b16 %v1587, %v1585
        %v1660 = vpack.c.b16 %v1588, %v1586
        %v1661 = vpack.c.b16 %v1591, %v1589
        %v1662 = vpack.c.b16 %v1592, %v1590
        %v1663 = vpack.c.b16 %v1595, %v1593
        %v1664 = vpack.c.b16 %v1596, %v1594
        %v1665 = vpack.c.b16 %v1599, %v1597
        %v1666 = vpack.c.b16 %v1600, %v1598
        %v1667 = vpack.c.b16 %v1603, %v1601
        %v1668 = vpack.c.b16 %v1604, %v1602
        %v1669 = vpack.c.b16 %v1607, %v1605
        %v1670 = vpack.c.b16 %v1608, %v1606
        %v1671 = vpack.c.b16 %v1611, %v1609
        %v1672 = vpack.c.b16 %v1612, %v1610
        %v1673 = vpack.c.b16 %v1615, %v1613
        %v1674 = vpack.c.b16 %v1616, %v1614
        %v1675 = vpack.c.b16 %v1619, %v1617
        %v1676 = vpack.c.b16 %v1620, %v1618
        %1733 = vmatpush.bf16.msra.mxu0 %v1635
        %1734 = vmatpush.bf16.msra.mxu0 %v1633
        %1735 = vmatpush.bf16.msra.mxu0 %v1631
        %1736 = vmatpush.bf16.msra.mxu0 %v1629
        %1737 = vmatpush.bf16.msra.mxu0 %v1627
        %1738 = vmatpush.bf16.msra.mxu0 %v1625
        %1739 = vmatpush.bf16.msra.mxu0 %v1623
        %1740 = vmatpush.bf16.msra.mxu0 %v1621
        %1741 = vmatmul.bf16.gmra.mxu0 %v940
        %v1742 = vpop.f32.mrf.mxu0
        %v1743 = vadd.f32 0.0, %v1742
        %v1744 = vpop.f32.mrf.mxu0
        %v1745 = vadd.f32 0.0, %v1744
        %1746 = vdwg.mxu0
        %1747 = vmatpush.bf16.msra.mxu0 %v1651
        %1748 = vmatpush.bf16.msra.mxu0 %v1649
        %1749 = vmatpush.bf16.msra.mxu0 %v1647
        %1750 = vmatpush.bf16.msra.mxu0 %v1645
        %1751 = vmatpush.bf16.msra.mxu0 %v1643
        %1752 = vmatpush.bf16.msra.mxu0 %v1641
        %1753 = vmatpush.bf16.msra.mxu0 %v1639
        %1754 = vmatpush.bf16.msra.mxu0 %v1637
        %1755 = vmatmul.bf16.gmra.mxu0 %v941
        %v1756 = vpop.f32.mrf.mxu0
        %v1757 = vadd.f32 %v1743, %v1756
        %v1758 = vpop.f32.mrf.mxu0
        %v1759 = vadd.f32 %v1745, %v1758
        %1760 = vdwg.mxu0
        %1761 = vmatpush.bf16.msra.mxu0 %v1667
        %1762 = vmatpush.bf16.msra.mxu0 %v1665
        %1763 = vmatpush.bf16.msra.mxu0 %v1663
        %1764 = vmatpush.bf16.msra.mxu0 %v1661
        %1765 = vmatpush.bf16.msra.mxu0 %v1659
        %1766 = vmatpush.bf16.msra.mxu0 %v1657
        %1767 = vmatpush.bf16.msra.mxu0 %v1655
        %1768 = vmatpush.bf16.msra.mxu0 %v1653
        %1769 = vmatmul.bf16.gmra.mxu0 %v942
        %v1770 = vpop.f32.mrf.mxu0
        %v1771 = vadd.f32 %v1757, %v1770
        %v1772 = vpop.f32.mrf.mxu0
        %v1773 = vadd.f32 %v1759, %v1772
        %1774 = vdwg.mxu0
        %1775 = vmatpush.bf16.msra.mxu0 0
        %1776 = vmatpush.bf16.msra.mxu0 0
        %1777 = vmatpush.bf16.msra.mxu0 0
        %1778 = vmatpush.bf16.msra.mxu0 0
        %1779 = vmatpush.bf16.msra.mxu0 %v1675
        %1780 = vmatpush.bf16.msra.mxu0 %v1673
        %1781 = vmatpush.bf16.msra.mxu0 %v1671
        %1782 = vmatpush.bf16.msra.mxu0 %v1669
        %1783 = vmatmul.bf16.gmra.mxu0 %v1282
        %v1784 = vpop.f32.mrf.mxu0
        %v1785 = vadd.f32 %v1771, %v1784
        %v1786 = vpop.f32.mrf.mxu0
        %v1787 = vadd.f32 %v1773, %v1786
        %1788 = vdwg.mxu0
        %1789 = vmatpush.bf16.msra.mxu0 %v1636
        %1790 = vmatpush.bf16.msra.mxu0 %v1634
        %1791 = vmatpush.bf16.msra.mxu0 %v1632
        %1792 = vmatpush.bf16.msra.mxu0 %v1630
        %1793 = vmatpush.bf16.msra.mxu0 %v1628
        %1794 = vmatpush.bf16.msra.mxu0 %v1626
        %1795 = vmatpush.bf16.msra.mxu0 %v1624
        %1796 = vmatpush.bf16.msra.mxu0 %v1622
        %1797 = vmatmul.bf16.gmra.mxu0 %v940
        %v1798 = vpop.f32.mrf.mxu0
        %v1799 = vadd.f32 0.0, %v1798
        %v1800 = vpop.f32.mrf.mxu0
        %v1801 = vadd.f32 0.0, %v1800
        %1802 = vdwg.mxu0
        %1803 = vmatpush.bf16.msra.mxu0 %v1652
        %1804 = vmatpush.bf16.msra.mxu0 %v1650
        %1805 = vmatpush.bf16.msra.mxu0 %v1648
        %1806 = vmatpush.bf16.msra.mxu0 %v1646
        %1807 = vmatpush.bf16.msra.mxu0 %v1644
        %1808 = vmatpush.bf16.msra.mxu0 %v1642
        %1809 = vmatpush.bf16.msra.mxu0 %v1640
        %1810 = vmatpush.bf16.msra.mxu0 %v1638
        %1811 = vmatmul.bf16.gmra.mxu0 %v941
        %v1812 = vpop.f32.mrf.mxu0
        %v1813 = vadd.f32 %v1799, %v1812
        %v1814 = vpop.f32.mrf.mxu0
        %v1815 = vadd.f32 %v1801, %v1814
        %1816 = vdwg.mxu0
        %1817 = vmatpush.bf16.msra.mxu0 %v1668
        %1818 = vmatpush.bf16.msra.mxu0 %v1666
        %1819 = vmatpush.bf16.msra.mxu0 %v1664
        %1820 = vmatpush.bf16.msra.mxu0 %v1662
        %1821 = vmatpush.bf16.msra.mxu0 %v1660
        %1822 = vmatpush.bf16.msra.mxu0 %v1658
        %1823 = vmatpush.bf16.msra.mxu0 %v1656
        %1824 = vmatpush.bf16.msra.mxu0 %v1654
        %1825 = vmatmul.bf16.gmra.mxu0 %v942
        %v1826 = vpop.f32.mrf.mxu0
        %v1827 = vadd.f32 %v1813, %v1826
        %v1828 = vpop.f32.mrf.mxu0
        %v1829 = vadd.f32 %v1815, %v1828
        %1830 = vdwg.mxu0
        %1831 = vmatpush.bf16.msra.mxu0 0
        %1832 = vmatpush.bf16.msra.mxu0 0
        %1833 = vmatpush.bf16.msra.mxu0 0
        %1834 = vmatpush.bf16.msra.mxu0 0
        %1835 = vmatpush.bf16.msra.mxu0 %v1676
        %1836 = vmatpush.bf16.msra.mxu0 %v1674
        %1837 = vmatpush.bf16.msra.mxu0 %v1672
        %1838 = vmatpush.bf16.msra.mxu0 %v1670
        %1839 = vmatmul.bf16.gmra.mxu0 %v1282
        %v1840 = vpop.f32.mrf.mxu0
        %v1841 = vadd.f32 %v1827, %v1840
        %v1842 = vpop.f32.mrf.mxu0
        %v1843 = vadd.f32 %v1829, %v1842
        %1844 = vdwg.mxu0
        %v1845 = vmax.f32 %v1336, %v1785
        %v1846 = vmax.f32 %v1392, %v1841
        %v1847 = vmax.f32 %v1338, %v1787
        %v1848 = vmax.f32 %v1394, %v1843
        %v1849 = vpack.c.bf16 %v1846, %v1845
        %v1850 = vpack.c.bf16 %v1848, %v1847
        %1851 = vst [vmem:[%s258] sm:$0xff] %v1849
        %1852 = vst [vmem:[%s258 + $0x8] sm:$0xff] %v1850
        %p1853 = scmp.lt.s32.totalorder %s18, 1
        %s1854 = scalar_select %p1853, %s18, 1
        %s1855 = smul.addr %s1854, 4
        %s1856 = smul.addr %s1855, 4
        %s1857 = scalar_lea.vmem %s5, %s1856
        // Predicated region
        $region49: #{mycnn_forward.3} parent=39 // pred_check
          %p1858 = pneg %p146
        $region50: #{mycnn_forward.3} parent=39 // pred_check_branch
          %1860 = sbr.rel (%p1858) target = $region52
        $region51: #{mycnn_forward.3} parent=39 // pred_region
          _
        $region52: #{mycnn_forward.3} parent=39 // pred_fallthru
          _
      $region40: #{mycnn_forward.3} parent=5 // pred_fallthru
        _
      %p1861 = scmp.le.s32.totalorder 2, %s13
      // Predicated region
      $region53: #{mycnn_forward.3} parent=5 // pred_check
        %p1862 = pneg %p1861
      $region54: #{mycnn_forward.3} parent=5 // pred_check_branch
        %1864 = sbr.rel (%p1862) target = $region56
      $region55: #{mycnn_forward.3} parent=5 // pred_region
        %s1865 = ssub.s32 %s13, 2
        // Predicated region
        $region57: #{mycnn_forward.3} parent=55 // pred_check
          %p1866 = pneg %p152
        $region58: #{mycnn_forward.3} parent=55 // pred_check_branch
          %1868 = sbr.rel (%p1866) target = $region60
        $region59: #{mycnn_forward.3} parent=55 // pred_region
          %p1869 = scmp.lt.s32.totalorder %s19, 1
          %s1870 = scalar_select %p1869, %s19, 1
          %s1871 = smul.addr %s1870, 4
          %s1872 = smul.addr %s1871, 4
          %s1873 = scalar_lea.vmem %s5, %s1872
        $region60: #{mycnn_forward.3} parent=55 // pred_fallthru
          _
      $region56: #{mycnn_forward.3} parent=5 // pred_fallthru
        _
    $region6: #{mycnn_forward.3} parent=1 // loop_footer
      %s17 = sadd.s32 1, %s13
    $region7: #{mycnn_forward.3} parent=1 // loop_footer_branch
      %12 = sbr.rel target = $region3
    $region8: #{mycnn_forward.3} parent=1 // loop_exit
      _
    %1874 = vsyncpa [#allocation3], 1
    %s1875 = scalar_lea.sflag [#allocation3], 1
    %1876 = vsyncpa %s1875, 1
    %1877 = vsyncpa [#allocation5], 1

// kernel: mycnn_forward.4
$region0: #{mycnn_forward.4}
  #allocation0 [shape = 'u32[]', space=smem, size = 0x4, offset = 0x4, fixed_abs, tag = 'smem constant byte address 0x4 - core index']
  #allocation1 [shape = 'u32[72,128]{1,0:T(1,128)}', space=vmem, size = 0x9000, scoped, tag = 'internal scratch']
  %s0 = inlined_call_operand.vmem [shape: bf16[2,16,256], index: 0, kind: input, shape index: {}]
  %s1 = inlined_call_operand.vmem [shape: bf16[3,256,448], index: 1, kind: input, shape index: {}]
  %s2 = inlined_call_operand.vmem [shape: f32[1,448], index: 2, kind: input, shape index: {}]
  %s3 = inlined_call_operand.vmem [shape: bf16[2,7,14], index: 3, kind: input, shape index: {}]
  %s4 = inlined_call_operand.vmem [shape: bf16[2,448,224], index: 4, kind: input, shape index: {}]
  %s5 = inlined_call_operand.vmem [shape: bf16[2,7,224], index: 5, kind: output, shape index: {}]
  %s6 = sld [smem:[#allocation0]]
  $region53: #{mycnn_forward.4} parent=0
    _
  %s8 = ssub.s32 1, %s6
  %s9 = scalar_select 0, %s8, %s6
  loop: start=0, step=1, limit=4
  $region2: #{mycnn_forward.4} parent=0 // loop_pre_header
    _
  $region3: #{mycnn_forward.4} parent=0 // loop_header
    %s11 = sphi 0, %s15
    %p12 = scmp.ge.s32.totalorder %s11, 4
    %s21 = sphi 0, %s23
    %s24 = sphi 0, %s21
    %s25 = sphi 0, %s24
    %s41 = sphi 0, %s25
    %s45 = sphi 0, %s45
    %s47 = sphi 0, %s45
    %s48 = sphi 0, %s47
    %s62 = sphi 0, %s48
    %s66 = sphi 0, %s66
    %s68 = sphi 0, %s66
    %s69 = sphi 0, %s68
    %s83 = sphi 0, %s69
    %s87 = sphi 0, %s87
    %s89 = sphi 0, %s87
    %s90 = sphi 0, %s89
    %s104 = sphi 0, %s90
    %s108 = sphi 0, %s108
    %s110 = sphi 0, %s108
    %s111 = sphi 0, %s110
    %s125 = sphi 0, %s111
    %s131 = sphi 0, %s133
    %s134 = sphi 0, %s131
    %s135 = sphi 0, %s134
    %s151 = sphi 0, %s135
  $region4: #{mycnn_forward.4} parent=0 // loop_header_branch
    %14 = sbr.rel (%p12) target = $region8
  $region5: #{mycnn_forward.4} parent=0 // loop_body
    %s16 = ssub.s32 %s11, 1
    %s17 = ssub.s32 %s11, 2
    %s18 = sadd.s32 %s11, 1
    %s19 = ssub.s32 %s11, %s18
    %p20 = scmp.eq.s32.totalorder %s19, 0
    %s22 = sadd.s32 %s21, 1
    %s23 = scalar_select %p20, %s21, %s22
    %p26 = pneg %p20
    %p27 = scmp.eq.s32.totalorder %s11, 1
    %p28 = por %p26, %p27
    %p29 = scmp.ne.s32.totalorder %s21, %s24
    %p30 = scmp.eq.s32.totalorder %s11, 0
    %p31 = por %p29, %p30
    %p32 = scmp.ne.s32.totalorder %s21, %s24
    %p33 = scmp.eq.s32.totalorder %s16, 1
    %p34 = por %p32, %p33
    %p35 = scmp.ne.s32.totalorder %s24, %s25
    %p36 = scmp.eq.s32.totalorder %s16, 0
    %p37 = por %p35, %p36
    %p38 = scmp.ne.s32.totalorder %s24, %s25
    %p39 = scmp.eq.s32.totalorder %s17, 1
    %p40 = por %p38, %p39
    %p42 = scmp.ne.s32.totalorder %s25, %s41
    %p43 = scmp.eq.s32.totalorder %s17, 0
    %p44 = por %p42, %p43
    %s46 = sadd.s32 %s45, 1
    %p49 = scmp.eq.s32.totalorder %s11, 1
    %p50 = scmp.ne.s32.totalorder %s45, %s47
    %p51 = scmp.eq.s32.totalorder %s11, 0
    %p52 = por %p50, %p51
    %p53 = scmp.ne.s32.totalorder %s45, %s47
    %p54 = scmp.eq.s32.totalorder %s16, 1
    %p55 = por %p53, %p54
    %p56 = scmp.ne.s32.totalorder %s47, %s48
    %p57 = scmp.eq.s32.totalorder %s16, 0
    %p58 = por %p56, %p57
    %p59 = scmp.ne.s32.totalorder %s47, %s48
    %p60 = scmp.eq.s32.totalorder %s17, 1
    %p61 = por %p59, %p60
    %p63 = scmp.ne.s32.totalorder %s48, %s62
    %p64 = scmp.eq.s32.totalorder %s17, 0
    %p65 = por %p63, %p64
    %s67 = sadd.s32 %s66, 1
    %p70 = scmp.eq.s32.totalorder %s11, 1
    %p71 = scmp.ne.s32.totalorder %s66, %s68
    %p72 = scmp.eq.s32.totalorder %s11, 0
    %p73 = por %p71, %p72
    %p74 = scmp.ne.s32.totalorder %s66, %s68
    %p75 = scmp.eq.s32.totalorder %s16, 1
    %p76 = por %p74, %p75
    %p77 = scmp.ne.s32.totalorder %s68, %s69
    %p78 = scmp.eq.s32.totalorder %s16, 0
    %p79 = por %p77, %p78
    %p80 = scmp.ne.s32.totalorder %s68, %s69
    %p81 = scmp.eq.s32.totalorder %s17, 1
    %p82 = por %p80, %p81
    %p84 = scmp.ne.s32.totalorder %s69, %s83
    %p85 = scmp.eq.s32.totalorder %s17, 0
    %p86 = por %p84, %p85
    %s88 = sadd.s32 %s87, 1
    %p91 = scmp.eq.s32.totalorder %s11, 1
    %p92 = scmp.ne.s32.totalorder %s87, %s89
    %p93 = scmp.eq.s32.totalorder %s11, 0
    %p94 = por %p92, %p93
    %p95 = scmp.ne.s32.totalorder %s87, %s89
    %p96 = scmp.eq.s32.totalorder %s16, 1
    %p97 = por %p95, %p96
    %p98 = scmp.ne.s32.totalorder %s89, %s90
    %p99 = scmp.eq.s32.totalorder %s16, 0
    %p100 = por %p98, %p99
    %p101 = scmp.ne.s32.totalorder %s89, %s90
    %p102 = scmp.eq.s32.totalorder %s17, 1
    %p103 = por %p101, %p102
    %p105 = scmp.ne.s32.totalorder %s90, %s104
    %p106 = scmp.eq.s32.totalorder %s17, 0
    %p107 = por %p105, %p106
    %s109 = sadd.s32 %s108, 1
    %p112 = scmp.eq.s32.totalorder %s11, 1
    %p113 = scmp.ne.s32.totalorder %s108, %s110
    %p114 = scmp.eq.s32.totalorder %s11, 0
    %p115 = por %p113, %p114
    %p116 = scmp.ne.s32.totalorder %s108, %s110
    %p117 = scmp.eq.s32.totalorder %s16, 1
    %p118 = por %p116, %p117
    %p119 = scmp.ne.s32.totalorder %s110, %s111
    %p120 = scmp.eq.s32.totalorder %s16, 0
    %p121 = por %p119, %p120
    %p122 = scmp.ne.s32.totalorder %s110, %s111
    %p123 = scmp.eq.s32.totalorder %s17, 1
    %p124 = por %p122, %p123
    %p126 = scmp.ne.s32.totalorder %s111, %s125
    %p127 = scmp.eq.s32.totalorder %s17, 0
    %p128 = por %p126, %p127
    %s129 = ssub.s32 %s11, %s18
    %p130 = scmp.eq.s32.totalorder %s129, 0
    %s132 = sadd.s32 %s131, 1
    %s133 = scalar_select %p130, %s131, %s132
    %p136 = pneg %p130
    %p137 = scmp.eq.s32.totalorder %s11, 1
    %p138 = por %p136, %p137
    %p139 = scmp.ne.s32.totalorder %s131, %s134
    %p140 = scmp.eq.s32.totalorder %s11, 0
    %p141 = por %p139, %p140
    %p142 = scmp.ne.s32.totalorder %s131, %s134
    %p143 = scmp.eq.s32.totalorder %s16, 1
    %p144 = por %p142, %p143
    %p145 = scmp.ne.s32.totalorder %s134, %s135
    %p146 = scmp.eq.s32.totalorder %s16, 0
    %p147 = por %p145, %p146
    %p148 = scmp.ne.s32.totalorder %s134, %s135
    %p149 = scmp.eq.s32.totalorder %s17, 1
    %p150 = por %p148, %p149
    %p152 = scmp.ne.s32.totalorder %s135, %s151
    %p153 = scmp.eq.s32.totalorder %s17, 0
    %p154 = por %p152, %p153
    %p155 = scmp.le.s32.totalorder 1, %s11
    %p156 = scmp.lt.s32.totalorder %s11, 3
    %p157 = pnand %p155, %p156
    %p158 = pneg %p157
    // Predicated region
    $region9: #{mycnn_forward.4} parent=5 // pred_check
      _
    $region10: #{mycnn_forward.4} parent=5 // pred_check_branch
      %160 = sbr.rel (%p157) target = $region12
    $region11: #{mycnn_forward.4} parent=5 // pred_region
      %s161 = ssub.s32 %s11, 1
      // Predicated region
      $region13: #{mycnn_forward.4} parent=11 // pred_check
        %p162 = pneg %p58
      $region14: #{mycnn_forward.4} parent=11 // pred_check_branch
        %164 = sbr.rel (%p162) target = $region16
      $region15: #{mycnn_forward.4} parent=11 // pred_region
        _
      $region16: #{mycnn_forward.4} parent=11 // pred_fallthru
        _
      // Predicated region
      $region17: #{mycnn_forward.4} parent=11 // pred_check
        %p165 = pneg %p79
      $region18: #{mycnn_forward.4} parent=11 // pred_check_branch
        %167 = sbr.rel (%p165) target = $region20
      $region19: #{mycnn_forward.4} parent=11 // pred_region
        _
      $region20: #{mycnn_forward.4} parent=11 // pred_fallthru
        _
      // Predicated region
      $region21: #{mycnn_forward.4} parent=11 // pred_check
        %p168 = pneg %p100
      $region22: #{mycnn_forward.4} parent=11 // pred_check_branch
        %170 = sbr.rel (%p168) target = $region24
      $region23: #{mycnn_forward.4} parent=11 // pred_region
        _
      $region24: #{mycnn_forward.4} parent=11 // pred_fallthru
        _
      // Predicated region
      $region25: #{mycnn_forward.4} parent=11 // pred_check
        %p171 = pneg %p121
      $region26: #{mycnn_forward.4} parent=11 // pred_check_branch
        %173 = sbr.rel (%p171) target = $region28
      $region27: #{mycnn_forward.4} parent=11 // pred_region
        _
      $region28: #{mycnn_forward.4} parent=11 // pred_fallthru
        _
    $region12: #{mycnn_forward.4} parent=5 // pred_fallthru
      _
    %p174 = scmp.lt.s32.totalorder %s11, 2
    // Predicated region
    $region29: #{mycnn_forward.4} parent=5 // pred_check
      %p175 = pneg %p174
    $region30: #{mycnn_forward.4} parent=5 // pred_check_branch
      %177 = sbr.rel (%p175) target = $region32
    $region31: #{mycnn_forward.4} parent=5 // pred_region
      // Predicated region
      $region33: #{mycnn_forward.4} parent=31 // pred_check
        %p178 = pneg %p31
      $region34: #{mycnn_forward.4} parent=31 // pred_check_branch
        %180 = sbr.rel (%p178) target = $region36
      $region35: #{mycnn_forward.4} parent=31 // pred_region
        %p181 = scmp.lt.s32.totalorder %s11, 1
        %s182 = scalar_select %p181, %s11, 1
        %s183 = smul.addr %s182, 4
        %s184 = smul.addr %s183, 4
        %s185 = scalar_lea.vmem %s0, %s184
      $region36: #{mycnn_forward.4} parent=31 // pred_fallthru
        _
    $region32: #{mycnn_forward.4} parent=5 // pred_fallthru
      _
    %p186 = scmp.le.s32.totalorder 1, %s11
    %p187 = scmp.lt.s32.totalorder %s11, 3
    %p188 = pnand %p186, %p187
    %p189 = pneg %p188
    // Predicated region
    $region37: #{mycnn_forward.4} parent=5 // pred_check
      _
    $region38: #{mycnn_forward.4} parent=5 // pred_check_branch
      %191 = sbr.rel (%p188) target = $region40
    $region39: #{mycnn_forward.4} parent=5 // pred_region
      %s192 = ssub.s32 %s11, 1
      %p193 = scmp.lt.s32.totalorder %s16, 1
      %s194 = scalar_select %p193, %s16, 1
      %s195 = smul.addr %s194, 4
      %s196 = smul.addr %s195, 4
      %s197 = scalar_lea.vmem %s0, %s196
      %p198 = pneg %p37
      %p199 = pneg %p34
      %p200 = pneg %p58
      %p201 = pneg %p55
      %p202 = pneg %p79
      %p203 = pneg %p76
      %p204 = pneg %p100
      %p205 = pneg %p97
      %p206 = pneg %p121
      %p207 = pneg %p118
      %p208 = pneg %p147
      %p209 = pneg %p144
      %p210 = scmp.lt.s32.totalorder %s16, 1
      %s211 = scalar_select %p210, %s16, 1
      %s212 = smul.addr %s211, 2
      %s213 = smul.addr %s212, 4
      %s214 = scalar_lea.vmem %s5, %s213
      %p215 = scmp.lt.s32.totalorder %s16, 1
      %s216 = scalar_select %p215, %s16, 1
      %s217 = smul.addr %s216, 4
      %s218 = smul.addr %s217, 4
      %s219 = scalar_lea.vmem %s0, %s218
      %p220 = scmp.lt.s32.totalorder %s16, 1
      %s221 = scalar_select %p220, %s16, 1
      %s222 = smul.addr %s221, 2
      %s223 = smul.addr %s222, 4
      %s224 = scalar_lea.vmem %s5, %s223
      %v226 = vld [vmem:[%s219] sm:$0xff]
      %v227 = vld [vmem:[%s219 + $0x8] sm:$0x77]
      %v228 = vld [vmem:[%s1] sm:$0xff]
      %v229 = vld [vmem:[%s1 + $0x8] sm:$0xff]
      %v230 = vld [vmem:[%s1 + $0x10] sm:$0xff]
      %v231 = vld [vmem:[%s1 + $0x18] sm:$0xff]
      %v232 = vld [vmem:[%s1 + $0x20] sm:$0xff]
      %v233 = vld [vmem:[%s1 + $0x28] sm:$0xff]
      %v234 = vld [vmem:[%s1 + $0x30] sm:$0xff]
      %v235 = vld [vmem:[%s1 + $0x38] sm:$0xff]
      %v236 = vld [vmem:[%s1 + $0x40] sm:$0xff]
      %v237 = vld [vmem:[%s1 + $0x48] sm:$0xff]
      %v238 = vld [vmem:[%s1 + $0x50] sm:$0xff]
      %v239 = vld [vmem:[%s1 + $0x58] sm:$0xff]
      %v240 = vld [vmem:[%s1 + $0x60] sm:$0xff]
      %v241 = vld [vmem:[%s1 + $0x68] sm:$0xff]
      %v242 = vld [vmem:[%s1 + $0x70] sm:$0xff]
      %v243 = vld [vmem:[%s1 + $0x78] sm:$0xff]
      %v244 = vld [vmem:[%s1 + $0x80] sm:$0xff]
      %v245 = vld [vmem:[%s1 + $0x88] sm:$0xff]
      %v246 = vld [vmem:[%s1 + $0x90] sm:$0xff]
      %v247 = vld [vmem:[%s1 + $0x98] sm:$0xff]
      %v248 = vld [vmem:[%s1 + $0xa0] sm:$0xff]
      %v249 = vld [vmem:[%s1 + $0xa8] sm:$0xff]
      %v250 = vld [vmem:[%s1 + $0xb0] sm:$0xff]
      %v251 = vld [vmem:[%s1 + $0xb8] sm:$0xff]
      %v252 = vld [vmem:[%s1 + $0xc0] sm:$0xff]
      %v253 = vld [vmem:[%s1 + $0xc8] sm:$0xff]
      %v254 = vld [vmem:[%s1 + $0xd0] sm:$0xff]
      %v255 = vld [vmem:[%s1 + $0xd8] sm:$0xff]
      %v256 = vld [vmem:[%s1 + $0xe0] sm:$0xff]
      %v257 = vld [vmem:[%s1 + $0xe8] sm:$0xff]
      %v258 = vld [vmem:[%s1 + $0xf0] sm:$0xff]
      %v259 = vld [vmem:[%s1 + $0xf8] sm:$0xff]
      %v260 = vld [vmem:[%s1 + $0x100] sm:$0xff]
      %v261 = vld [vmem:[%s1 + $0x108] sm:$0xff]
      %v262 = vld [vmem:[%s1 + $0x110] sm:$0xff]
      %v263 = vld [vmem:[%s1 + $0x118] sm:$0xff]
      %v264 = vld [vmem:[%s1 + $0x120] sm:$0xff]
      %v265 = vld [vmem:[%s1 + $0x128] sm:$0xff]
      %v266 = vld [vmem:[%s1 + $0x130] sm:$0xff]
      %v267 = vld [vmem:[%s1 + $0x138] sm:$0xff]
      %v268 = vld [vmem:[%s1 + $0x140] sm:$0xff]
      %v269 = vld [vmem:[%s1 + $0x148] sm:$0xff]
      %v270 = vld [vmem:[%s1 + $0x150] sm:$0xff]
      %v271 = vld [vmem:[%s1 + $0x158] sm:$0xff]
      %v272 = vld [vmem:[%s1 + $0x160] sm:$0xff]
      %v273 = vld [vmem:[%s1 + $0x168] sm:$0xff]
      %v274 = vld [vmem:[%s1 + $0x170] sm:$0xff]
      %v275 = vld [vmem:[%s1 + $0x178] sm:$0xff]
      %v276 = vld [vmem:[%s1 + $0x180] sm:$0xff]
      %v277 = vld [vmem:[%s1 + $0x188] sm:$0xff]
      %v278 = vld [vmem:[%s1 + $0x190] sm:$0xff]
      %v279 = vld [vmem:[%s1 + $0x198] sm:$0xff]
      %v280 = vld [vmem:[%s1 + $0x1a0] sm:$0xff]
      %v281 = vld [vmem:[%s1 + $0x1a8] sm:$0xff]
      %v282 = vld [vmem:[%s1 + $0x1b0] sm:$0xff]
      %v283 = vld [vmem:[%s1 + $0x1b8] sm:$0xff]
      %v284 = vld [vmem:[%s1 + $0x1c0] sm:$0xff]
      %v285 = vld [vmem:[%s1 + $0x1c8] sm:$0xff]
      %v286 = vld [vmem:[%s1 + $0x1d0] sm:$0xff]
      %v287 = vld [vmem:[%s1 + $0x1d8] sm:$0xff]
      %v288 = vld [vmem:[%s1 + $0x1e0] sm:$0xff]
      %v289 = vld [vmem:[%s1 + $0x1e8] sm:$0xff]
      %v290 = vld [vmem:[%s1 + $0x1f0] sm:$0xff]
      %v291 = vld [vmem:[%s1 + $0x1f8] sm:$0xff]
      %v292 = vld [vmem:[%s219 + $0x8] sm:$0xff]
      %s293 = scalar_lea.vmem %s1, 512
      %v294 = vld [vmem:[%s293] sm:$0xff]
      %v295 = vld [vmem:[%s293 + $0x8] sm:$0xff]
      %v296 = vld [vmem:[%s293 + $0x10] sm:$0xff]
      %v297 = vld [vmem:[%s293 + $0x18] sm:$0xff]
      %v298 = vld [vmem:[%s293 + $0x20] sm:$0xff]
      %v299 = vld [vmem:[%s293 + $0x28] sm:$0xff]
      %v300 = vld [vmem:[%s293 + $0x30] sm:$0xff]
      %v301 = vld [vmem:[%s293 + $0x38] sm:$0xff]
      %v302 = vld [vmem:[%s293 + $0x40] sm:$0xff]
      %v303 = vld [vmem:[%s293 + $0x48] sm:$0xff]
      %v304 = vld [vmem:[%s293 + $0x50] sm:$0xff]
      %v305 = vld [vmem:[%s293 + $0x58] sm:$0xff]
      %v306 = vld [vmem:[%s293 + $0x60] sm:$0xff]
      %v307 = vld [vmem:[%s293 + $0x68] sm:$0xff]
      %v308 = vld [vmem:[%s293 + $0x70] sm:$0xff]
      %v309 = vld [vmem:[%s293 + $0x78] sm:$0xff]
      %v310 = vld [vmem:[%s293 + $0x80] sm:$0xff]
      %v311 = vld [vmem:[%s293 + $0x88] sm:$0xff]
      %v312 = vld [vmem:[%s293 + $0x90] sm:$0xff]
      %v313 = vld [vmem:[%s293 + $0x98] sm:$0xff]
      %v314 = vld [vmem:[%s293 + $0xa0] sm:$0xff]
      %v315 = vld [vmem:[%s293 + $0xa8] sm:$0xff]
      %v316 = vld [vmem:[%s293 + $0xb0] sm:$0xff]
      %v317 = vld [vmem:[%s293 + $0xb8] sm:$0xff]
      %v318 = vld [vmem:[%s293 + $0xc0] sm:$0xff]
      %v319 = vld [vmem:[%s293 + $0xc8] sm:$0xff]
      %v320 = vld [vmem:[%s293 + $0xd0] sm:$0xff]
      %v321 = vld [vmem:[%s293 + $0xd8] sm:$0xff]
      %v322 = vld [vmem:[%s293 + $0xe0] sm:$0xff]
      %v323 = vld [vmem:[%s293 + $0xe8] sm:$0xff]
      %v324 = vld [vmem:[%s293 + $0xf0] sm:$0xff]
      %v325 = vld [vmem:[%s293 + $0xf8] sm:$0xff]
      %v326 = vld [vmem:[%s293 + $0x100] sm:$0xff]
      %v327 = vld [vmem:[%s293 + $0x108] sm:$0xff]
      %v328 = vld [vmem:[%s293 + $0x110] sm:$0xff]
      %v329 = vld [vmem:[%s293 + $0x118] sm:$0xff]
      %v330 = vld [vmem:[%s293 + $0x120] sm:$0xff]
      %v331 = vld [vmem:[%s293 + $0x128] sm:$0xff]
      %v332 = vld [vmem:[%s293 + $0x130] sm:$0xff]
      %v333 = vld [vmem:[%s293 + $0x138] sm:$0xff]
      %v334 = vld [vmem:[%s293 + $0x140] sm:$0xff]
      %v335 = vld [vmem:[%s293 + $0x148] sm:$0xff]
      %v336 = vld [vmem:[%s293 + $0x150] sm:$0xff]
      %v337 = vld [vmem:[%s293 + $0x158] sm:$0xff]
      %v338 = vld [vmem:[%s293 + $0x160] sm:$0xff]
      %v339 = vld [vmem:[%s293 + $0x168] sm:$0xff]
      %v340 = vld [vmem:[%s293 + $0x170] sm:$0xff]
      %v341 = vld [vmem:[%s293 + $0x178] sm:$0xff]
      %v342 = vld [vmem:[%s293 + $0x180] sm:$0xff]
      %v343 = vld [vmem:[%s293 + $0x188] sm:$0xff]
      %v344 = vld [vmem:[%s293 + $0x190] sm:$0xff]
      %v345 = vld [vmem:[%s293 + $0x198] sm:$0xff]
      %v346 = vld [vmem:[%s293 + $0x1a0] sm:$0xff]
      %v347 = vld [vmem:[%s293 + $0x1a8] sm:$0xff]
      %v348 = vld [vmem:[%s293 + $0x1b0] sm:$0xff]
      %v349 = vld [vmem:[%s293 + $0x1b8] sm:$0xff]
      %v350 = vld [vmem:[%s293 + $0x1c0] sm:$0xff]
      %v351 = vld [vmem:[%s293 + $0x1c8] sm:$0xff]
      %v352 = vld [vmem:[%s293 + $0x1d0] sm:$0xff]
      %v353 = vld [vmem:[%s293 + $0x1d8] sm:$0xff]
      %v354 = vld [vmem:[%s293 + $0x1e0] sm:$0xff]
      %v355 = vld [vmem:[%s293 + $0x1e8] sm:$0xff]
      %v356 = vld [vmem:[%s293 + $0x1f0] sm:$0xff]
      %v357 = vld [vmem:[%s293 + $0x1f8] sm:$0xff]
      %v360 = vunpack.c.l.b16 %v226
      %v361 = vunpack.c.h.b16 %v226
      %v362 = vunpack.c.l.b16 %v292
      %v363 = vunpack.c.h.b16 %v292
      %v364 = vpack.c.b16 %v362, %v360
      %v365 = vpack.c.b16 %v363, %v361
      %v367 = vshrl.u32 %v364, 16
      %v369 = vshll.u32 %v364, 16
      %v371 = vrot.slane %v369, 1
      %v372 = vor.u32 %v367, %v371
      %v374 = vshrl.u32 %v365, 16
      %v376 = vshll.u32 %v365, 16
      %v378 = vrot.slane %v376, 1
      %v379 = vor.u32 %v374, %v378
      %v446 = vunpack.c.l.b16 %v294
      %v447 = vunpack.c.h.b16 %v294
      %v448 = vunpack.c.l.b16 %v295
      %v449 = vunpack.c.h.b16 %v295
      %v450 = vunpack.c.l.b16 %v296
      %v451 = vunpack.c.h.b16 %v296
      %v452 = vunpack.c.l.b16 %v297
      %v453 = vunpack.c.h.b16 %v297
      %v454 = vunpack.c.l.b16 %v298
      %v455 = vunpack.c.h.b16 %v298
      %v456 = vunpack.c.l.b16 %v299
      %v457 = vunpack.c.h.b16 %v299
      %v458 = vunpack.c.l.b16 %v300
      %v459 = vunpack.c.h.b16 %v300
      %v460 = vunpack.c.l.b16 %v301
      %v461 = vunpack.c.h.b16 %v301
      %v462 = vunpack.c.l.b16 %v302
      %v463 = vunpack.c.h.b16 %v302
      %v464 = vunpack.c.l.b16 %v303
      %v465 = vunpack.c.h.b16 %v303
      %v466 = vunpack.c.l.b16 %v304
      %v467 = vunpack.c.h.b16 %v304
      %v468 = vunpack.c.l.b16 %v305
      %v469 = vunpack.c.h.b16 %v305
      %v470 = vunpack.c.l.b16 %v306
      %v471 = vunpack.c.h.b16 %v306
      %v472 = vunpack.c.l.b16 %v307
      %v473 = vunpack.c.h.b16 %v307
      %v474 = vunpack.c.l.b16 %v308
      %v475 = vunpack.c.h.b16 %v308
      %v476 = vunpack.c.l.b16 %v309
      %v477 = vunpack.c.h.b16 %v309
      %v478 = vunpack.c.l.b16 %v310
      %v479 = vunpack.c.h.b16 %v310
      %v480 = vunpack.c.l.b16 %v311
      %v481 = vunpack.c.h.b16 %v311
      %v482 = vunpack.c.l.b16 %v312
      %v483 = vunpack.c.h.b16 %v312
      %v484 = vunpack.c.l.b16 %v313
      %v485 = vunpack.c.h.b16 %v313
      %v486 = vunpack.c.l.b16 %v314
      %v487 = vunpack.c.h.b16 %v314
      %v488 = vunpack.c.l.b16 %v315
      %v489 = vunpack.c.h.b16 %v315
      %v490 = vunpack.c.l.b16 %v316
      %v491 = vunpack.c.h.b16 %v316
      %v492 = vunpack.c.l.b16 %v317
      %v493 = vunpack.c.h.b16 %v317
      %v494 = vunpack.c.l.b16 %v318
      %v495 = vunpack.c.h.b16 %v318
      %v496 = vunpack.c.l.b16 %v319
      %v497 = vunpack.c.h.b16 %v319
      %v498 = vunpack.c.l.b16 %v320
      %v499 = vunpack.c.h.b16 %v320
      %v500 = vunpack.c.l.b16 %v321
      %v501 = vunpack.c.h.b16 %v321
      %v502 = vunpack.c.l.b16 %v322
      %v503 = vunpack.c.h.b16 %v322
      %v504 = vunpack.c.l.b16 %v323
      %v505 = vunpack.c.h.b16 %v323
      %v506 = vunpack.c.l.b16 %v324
      %v507 = vunpack.c.h.b16 %v324
      %v508 = vunpack.c.l.b16 %v325
      %v509 = vunpack.c.h.b16 %v325
      %v510 = vunpack.c.l.b16 %v326
      %v511 = vunpack.c.h.b16 %v326
      %v512 = vunpack.c.l.b16 %v327
      %v513 = vunpack.c.h.b16 %v327
      %v514 = vunpack.c.l.b16 %v328
      %v515 = vunpack.c.h.b16 %v328
      %v516 = vunpack.c.l.b16 %v329
      %v517 = vunpack.c.h.b16 %v329
      %v518 = vunpack.c.l.b16 %v330
      %v519 = vunpack.c.h.b16 %v330
      %v520 = vunpack.c.l.b16 %v331
      %v521 = vunpack.c.h.b16 %v331
      %v522 = vunpack.c.l.b16 %v332
      %v523 = vunpack.c.h.b16 %v332
      %v524 = vunpack.c.l.b16 %v333
      %v525 = vunpack.c.h.b16 %v333
      %v526 = vunpack.c.l.b16 %v334
      %v527 = vunpack.c.h.b16 %v334
      %v528 = vunpack.c.l.b16 %v335
      %v529 = vunpack.c.h.b16 %v335
      %v530 = vunpack.c.l.b16 %v336
      %v531 = vunpack.c.h.b16 %v336
      %v532 = vunpack.c.l.b16 %v337
      %v533 = vunpack.c.h.b16 %v337
      %v534 = vunpack.c.l.b16 %v338
      %v535 = vunpack.c.h.b16 %v338
      %v536 = vunpack.c.l.b16 %v339
      %v537 = vunpack.c.h.b16 %v339
      %v538 = vunpack.c.l.b16 %v340
      %v539 = vunpack.c.h.b16 %v340
      %v540 = vunpack.c.l.b16 %v341
      %v541 = vunpack.c.h.b16 %v341
      %v542 = vunpack.c.l.b16 %v342
      %v543 = vunpack.c.h.b16 %v342
      %v544 = vunpack.c.l.b16 %v343
      %v545 = vunpack.c.h.b16 %v343
      %v546 = vunpack.c.l.b16 %v344
      %v547 = vunpack.c.h.b16 %v344
      %v548 = vunpack.c.l.b16 %v345
      %v549 = vunpack.c.h.b16 %v345
      %v550 = vunpack.c.l.b16 %v346
      %v551 = vunpack.c.h.b16 %v346
      %v552 = vunpack.c.l.b16 %v347
      %v553 = vunpack.c.h.b16 %v347
      %v554 = vunpack.c.l.b16 %v348
      %v555 = vunpack.c.h.b16 %v348
      %v556 = vunpack.c.l.b16 %v349
      %v557 = vunpack.c.h.b16 %v349
      %v558 = vunpack.c.l.b16 %v350
      %v559 = vunpack.c.h.b16 %v350
      %v560 = vunpack.c.l.b16 %v351
      %v561 = vunpack.c.h.b16 %v351
      %v562 = vunpack.c.l.b16 %v352
      %v563 = vunpack.c.h.b16 %v352
      %v564 = vunpack.c.l.b16 %v353
      %v565 = vunpack.c.h.b16 %v353
      %v566 = vunpack.c.l.b16 %v354
      %v567 = vunpack.c.h.b16 %v354
      %v568 = vunpack.c.l.b16 %v355
      %v569 = vunpack.c.h.b16 %v355
      %v570 = vunpack.c.l.b16 %v356
      %v571 = vunpack.c.h.b16 %v356
      %v572 = vunpack.c.l.b16 %v357
      %v573 = vunpack.c.h.b16 %v357
      %v574 = vpack.c.b16 %v450, %v446
      %v575 = vpack.c.b16 %v451, %v447
      %v576 = vpack.c.b16 %v452, %v448
      %v577 = vpack.c.b16 %v453, %v449
      %v578 = vpack.c.b16 %v458, %v454
      %v579 = vpack.c.b16 %v459, %v455
      %v580 = vpack.c.b16 %v460, %v456
      %v581 = vpack.c.b16 %v461, %v457
      %v582 = vpack.c.b16 %v466, %v462
      %v583 = vpack.c.b16 %v467, %v463
      %v584 = vpack.c.b16 %v468, %v464
      %v585 = vpack.c.b16 %v469, %v465
      %v586 = vpack.c.b16 %v474, %v470
      %v587 = vpack.c.b16 %v475, %v471
      %v588 = vpack.c.b16 %v476, %v472
      %v589 = vpack.c.b16 %v477, %v473
      %v590 = vpack.c.b16 %v482, %v478
      %v591 = vpack.c.b16 %v483, %v479
      %v592 = vpack.c.b16 %v484, %v480
      %v593 = vpack.c.b16 %v485, %v481
      %v594 = vpack.c.b16 %v490, %v486
      %v595 = vpack.c.b16 %v491, %v487
      %v596 = vpack.c.b16 %v492, %v488
      %v597 = vpack.c.b16 %v493, %v489
      %v598 = vpack.c.b16 %v498, %v494
      %v599 = vpack.c.b16 %v499, %v495
      %v600 = vpack.c.b16 %v500, %v496
      %v601 = vpack.c.b16 %v501, %v497
      %v602 = vpack.c.b16 %v506, %v502
      %v603 = vpack.c.b16 %v507, %v503
      %v604 = vpack.c.b16 %v508, %v504
      %v605 = vpack.c.b16 %v509, %v505
      %v606 = vpack.c.b16 %v514, %v510
      %v607 = vpack.c.b16 %v515, %v511
      %v608 = vpack.c.b16 %v516, %v512
      %v609 = vpack.c.b16 %v517, %v513
      %v610 = vpack.c.b16 %v522, %v518
      %v611 = vpack.c.b16 %v523, %v519
      %v612 = vpack.c.b16 %v524, %v520
      %v613 = vpack.c.b16 %v525, %v521
      %v614 = vpack.c.b16 %v530, %v526
      %v615 = vpack.c.b16 %v531, %v527
      %v616 = vpack.c.b16 %v532, %v528
      %v617 = vpack.c.b16 %v533, %v529
      %v618 = vpack.c.b16 %v538, %v534
      %v619 = vpack.c.b16 %v539, %v535
      %v620 = vpack.c.b16 %v540, %v536
      %v621 = vpack.c.b16 %v541, %v537
      %v622 = vpack.c.b16 %v546, %v542
      %v623 = vpack.c.b16 %v547, %v543
      %v624 = vpack.c.b16 %v548, %v544
      %v625 = vpack.c.b16 %v549, %v545
      %v626 = vpack.c.b16 %v554, %v550
      %v627 = vpack.c.b16 %v555, %v551
      %v628 = vpack.c.b16 %v556, %v552
      %v629 = vpack.c.b16 %v557, %v553
      %v630 = vpack.c.b16 %v562, %v558
      %v631 = vpack.c.b16 %v563, %v559
      %v632 = vpack.c.b16 %v564, %v560
      %v633 = vpack.c.b16 %v565, %v561
      %v634 = vpack.c.b16 %v570, %v566
      %v635 = vpack.c.b16 %v571, %v567
      %v636 = vpack.c.b16 %v572, %v568
      %v637 = vpack.c.b16 %v573, %v569
      %702 = vmatpush.bf16.msra.mxu0 %v602
      %703 = vmatpush.bf16.msra.mxu0 %v598
      %704 = vmatpush.bf16.msra.mxu0 %v594
      %705 = vmatpush.bf16.msra.mxu0 %v590
      %706 = vmatpush.bf16.msra.mxu0 %v586
      %707 = vmatpush.bf16.msra.mxu0 %v582
      %708 = vmatpush.bf16.msra.mxu0 %v578
      %709 = vmatpush.bf16.msra.mxu0 %v574
      %710 = vmatmul.bf16.gmra.mxu0 %v372
      %v711 = vpop.f32.mrf.mxu0
      %v712 = vadd.f32 0.0, %v711
      %v713 = vpop.f32.mrf.mxu0
      %v714 = vadd.f32 0.0, %v713
      %715 = vdwg.mxu0
      %716 = vmatpush.bf16.msra.mxu0 %v634
      %717 = vmatpush.bf16.msra.mxu0 %v630
      %718 = vmatpush.bf16.msra.mxu0 %v626
      %719 = vmatpush.bf16.msra.mxu0 %v622
      %720 = vmatpush.bf16.msra.mxu0 %v618
      %721 = vmatpush.bf16.msra.mxu0 %v614
      %722 = vmatpush.bf16.msra.mxu0 %v610
      %723 = vmatpush.bf16.msra.mxu0 %v606
      %724 = vmatmul.bf16.gmra.mxu0 %v379
      %v725 = vpop.f32.mrf.mxu0
      %v726 = vadd.f32 %v712, %v725
      %v727 = vpop.f32.mrf.mxu0
      %v728 = vadd.f32 %v714, %v727
      %729 = vdwg.mxu0
      %730 = vmatpush.bf16.msra.mxu0 %v603
      %731 = vmatpush.bf16.msra.mxu0 %v599
      %732 = vmatpush.bf16.msra.mxu0 %v595
      %733 = vmatpush.bf16.msra.mxu0 %v591
      %734 = vmatpush.bf16.msra.mxu0 %v587
      %735 = vmatpush.bf16.msra.mxu0 %v583
      %736 = vmatpush.bf16.msra.mxu0 %v579
      %737 = vmatpush.bf16.msra.mxu0 %v575
      %738 = vmatmul.bf16.gmra.mxu0 %v372
      %v739 = vpop.f32.mrf.mxu0
      %v740 = vadd.f32 0.0, %v739
      %v741 = vpop.f32.mrf.mxu0
      %v742 = vadd.f32 0.0, %v741
      %743 = vdwg.mxu0
      %744 = vmatpush.bf16.msra.mxu0 %v635
      %745 = vmatpush.bf16.msra.mxu0 %v631
      %746 = vmatpush.bf16.msra.mxu0 %v627
      %747 = vmatpush.bf16.msra.mxu0 %v623
      %748 = vmatpush.bf16.msra.mxu0 %v619
      %749 = vmatpush.bf16.msra.mxu0 %v615
      %750 = vmatpush.bf16.msra.mxu0 %v611
      %751 = vmatpush.bf16.msra.mxu0 %v607
      %752 = vmatmul.bf16.gmra.mxu0 %v379
      %v753 = vpop.f32.mrf.mxu0
      %v754 = vadd.f32 %v740, %v753
      %v755 = vpop.f32.mrf.mxu0
      %v756 = vadd.f32 %v742, %v755
      %757 = vdwg.mxu0
      %758 = vmatpush.bf16.msra.mxu0 %v604
      %759 = vmatpush.bf16.msra.mxu0 %v600
      %760 = vmatpush.bf16.msra.mxu0 %v596
      %761 = vmatpush.bf16.msra.mxu0 %v592
      %762 = vmatpush.bf16.msra.mxu0 %v588
      %763 = vmatpush.bf16.msra.mxu0 %v584
      %764 = vmatpush.bf16.msra.mxu0 %v580
      %765 = vmatpush.bf16.msra.mxu0 %v576
      %766 = vmatmul.bf16.gmra.mxu0 %v372
      %v767 = vpop.f32.mrf.mxu0
      %v768 = vadd.f32 0.0, %v767
      %v769 = vpop.f32.mrf.mxu0
      %v770 = vadd.f32 0.0, %v769
      %771 = vdwg.mxu0
      %772 = vmatpush.bf16.msra.mxu0 %v636
      %773 = vmatpush.bf16.msra.mxu0 %v632
      %774 = vmatpush.bf16.msra.mxu0 %v628
      %775 = vmatpush.bf16.msra.mxu0 %v624
      %776 = vmatpush.bf16.msra.mxu0 %v620
      %777 = vmatpush.bf16.msra.mxu0 %v616
      %778 = vmatpush.bf16.msra.mxu0 %v612
      %779 = vmatpush.bf16.msra.mxu0 %v608
      %780 = vmatmul.bf16.gmra.mxu0 %v379
      %v781 = vpop.f32.mrf.mxu0
      %v782 = vadd.f32 %v768, %v781
      %v783 = vpop.f32.mrf.mxu0
      %v784 = vadd.f32 %v770, %v783
      %785 = vdwg.mxu0
      %786 = vmatpush.bf16.msra.mxu0 %v605
      %787 = vmatpush.bf16.msra.mxu0 %v601
      %788 = vmatpush.bf16.msra.mxu0 %v597
      %789 = vmatpush.bf16.msra.mxu0 %v593
      %790 = vmatpush.bf16.msra.mxu0 %v589
      %791 = vmatpush.bf16.msra.mxu0 %v585
      %792 = vmatpush.bf16.msra.mxu0 %v581
      %793 = vmatpush.bf16.msra.mxu0 %v577
      %794 = vmatmul.bf16.gmra.mxu0 %v372
      %v795 = vpop.f32.mrf.mxu0
      %v796 = vadd.f32 0.0, %v795
      %v797 = vpop.f32.mrf.mxu0
      %v798 = vadd.f32 0.0, %v797
      %799 = vdwg.mxu0
      %800 = vmatpush.bf16.msra.mxu0 %v637
      %801 = vmatpush.bf16.msra.mxu0 %v633
      %802 = vmatpush.bf16.msra.mxu0 %v629
      %803 = vmatpush.bf16.msra.mxu0 %v625
      %804 = vmatpush.bf16.msra.mxu0 %v621
      %805 = vmatpush.bf16.msra.mxu0 %v617
      %806 = vmatpush.bf16.msra.mxu0 %v613
      %807 = vmatpush.bf16.msra.mxu0 %v609
      %808 = vmatmul.bf16.gmra.mxu0 %v379
      %v809 = vpop.f32.mrf.mxu0
      %v810 = vadd.f32 %v796, %v809
      %v811 = vpop.f32.mrf.mxu0
      %v812 = vadd.f32 %v798, %v811
      %813 = vdwg.mxu0
      %v815 = vunpack.c.l.b16 %v227
      %v816 = vunpack.c.h.b16 %v227
      %v817 = vpack.c.b16 %v815, %v360
      %v818 = vpack.c.b16 %v816, %v361
      %v885 = vunpack.c.l.b16 %v228
      %v886 = vunpack.c.h.b16 %v228
      %v887 = vunpack.c.l.b16 %v229
      %v888 = vunpack.c.h.b16 %v229
      %v889 = vunpack.c.l.b16 %v230
      %v890 = vunpack.c.h.b16 %v230
      %v891 = vunpack.c.l.b16 %v231
      %v892 = vunpack.c.h.b16 %v231
      %v893 = vunpack.c.l.b16 %v232
      %v894 = vunpack.c.h.b16 %v232
      %v895 = vunpack.c.l.b16 %v233
      %v896 = vunpack.c.h.b16 %v233
      %v897 = vunpack.c.l.b16 %v234
      %v898 = vunpack.c.h.b16 %v234
      %v899 = vunpack.c.l.b16 %v235
      %v900 = vunpack.c.h.b16 %v235
      %v901 = vunpack.c.l.b16 %v236
      %v902 = vunpack.c.h.b16 %v236
      %v903 = vunpack.c.l.b16 %v237
      %v904 = vunpack.c.h.b16 %v237
      %v905 = vunpack.c.l.b16 %v238
      %v906 = vunpack.c.h.b16 %v238
      %v907 = vunpack.c.l.b16 %v239
      %v908 = vunpack.c.h.b16 %v239
      %v909 = vunpack.c.l.b16 %v240
      %v910 = vunpack.c.h.b16 %v240
      %v911 = vunpack.c.l.b16 %v241
      %v912 = vunpack.c.h.b16 %v241
      %v913 = vunpack.c.l.b16 %v242
      %v914 = vunpack.c.h.b16 %v242
      %v915 = vunpack.c.l.b16 %v243
      %v916 = vunpack.c.h.b16 %v243
      %v917 = vunpack.c.l.b16 %v244
      %v918 = vunpack.c.h.b16 %v244
      %v919 = vunpack.c.l.b16 %v245
      %v920 = vunpack.c.h.b16 %v245
      %v921 = vunpack.c.l.b16 %v246
      %v922 = vunpack.c.h.b16 %v246
      %v923 = vunpack.c.l.b16 %v247
      %v924 = vunpack.c.h.b16 %v247
      %v925 = vunpack.c.l.b16 %v248
      %v926 = vunpack.c.h.b16 %v248
      %v927 = vunpack.c.l.b16 %v249
      %v928 = vunpack.c.h.b16 %v249
      %v929 = vunpack.c.l.b16 %v250
      %v930 = vunpack.c.h.b16 %v250
      %v931 = vunpack.c.l.b16 %v251
      %v932 = vunpack.c.h.b16 %v251
      %v933 = vunpack.c.l.b16 %v252
      %v934 = vunpack.c.h.b16 %v252
      %v935 = vunpack.c.l.b16 %v253
      %v936 = vunpack.c.h.b16 %v253
      %v937 = vunpack.c.l.b16 %v254
      %v938 = vunpack.c.h.b16 %v254
      %v939 = vunpack.c.l.b16 %v255
      %v940 = vunpack.c.h.b16 %v255
      %v941 = vunpack.c.l.b16 %v256
      %v942 = vunpack.c.h.b16 %v256
      %v943 = vunpack.c.l.b16 %v257
      %v944 = vunpack.c.h.b16 %v257
      %v945 = vunpack.c.l.b16 %v258
      %v946 = vunpack.c.h.b16 %v258
      %v947 = vunpack.c.l.b16 %v259
      %v948 = vunpack.c.h.b16 %v259
      %v949 = vunpack.c.l.b16 %v260
      %v950 = vunpack.c.h.b16 %v260
      %v951 = vunpack.c.l.b16 %v261
      %v952 = vunpack.c.h.b16 %v261
      %v953 = vunpack.c.l.b16 %v262
      %v954 = vunpack.c.h.b16 %v262
      %v955 = vunpack.c.l.b16 %v263
      %v956 = vunpack.c.h.b16 %v263
      %v957 = vunpack.c.l.b16 %v264
      %v958 = vunpack.c.h.b16 %v264
      %v959 = vunpack.c.l.b16 %v265
      %v960 = vunpack.c.h.b16 %v265
      %v961 = vunpack.c.l.b16 %v266
      %v962 = vunpack.c.h.b16 %v266
      %v963 = vunpack.c.l.b16 %v267
      %v964 = vunpack.c.h.b16 %v267
      %v965 = vunpack.c.l.b16 %v268
      %v966 = vunpack.c.h.b16 %v268
      %v967 = vunpack.c.l.b16 %v269
      %v968 = vunpack.c.h.b16 %v269
      %v969 = vunpack.c.l.b16 %v270
      %v970 = vunpack.c.h.b16 %v270
      %v971 = vunpack.c.l.b16 %v271
      %v972 = vunpack.c.h.b16 %v271
      %v973 = vunpack.c.l.b16 %v272
      %v974 = vunpack.c.h.b16 %v272
      %v975 = vunpack.c.l.b16 %v273
      %v976 = vunpack.c.h.b16 %v273
      %v977 = vunpack.c.l.b16 %v274
      %v978 = vunpack.c.h.b16 %v274
      %v979 = vunpack.c.l.b16 %v275
      %v980 = vunpack.c.h.b16 %v275
      %v981 = vunpack.c.l.b16 %v276
      %v982 = vunpack.c.h.b16 %v276
      %v983 = vunpack.c.l.b16 %v277
      %v984 = vunpack.c.h.b16 %v277
      %v985 = vunpack.c.l.b16 %v278
      %v986 = vunpack.c.h.b16 %v278
      %v987 = vunpack.c.l.b16 %v279
      %v988 = vunpack.c.h.b16 %v279
      %v989 = vunpack.c.l.b16 %v280
      %v990 = vunpack.c.h.b16 %v280
      %v991 = vunpack.c.l.b16 %v281
      %v992 = vunpack.c.h.b16 %v281
      %v993 = vunpack.c.l.b16 %v282
      %v994 = vunpack.c.h.b16 %v282
      %v995 = vunpack.c.l.b16 %v283
      %v996 = vunpack.c.h.b16 %v283
      %v997 = vunpack.c.l.b16 %v284
      %v998 = vunpack.c.h.b16 %v284
      %v999 = vunpack.c.l.b16 %v285
      %v1000 = vunpack.c.h.b16 %v285
      %v1001 = vunpack.c.l.b16 %v286
      %v1002 = vunpack.c.h.b16 %v286
      %v1003 = vunpack.c.l.b16 %v287
      %v1004 = vunpack.c.h.b16 %v287
      %v1005 = vunpack.c.l.b16 %v288
      %v1006 = vunpack.c.h.b16 %v288
      %v1007 = vunpack.c.l.b16 %v289
      %v1008 = vunpack.c.h.b16 %v289
      %v1009 = vunpack.c.l.b16 %v290
      %v1010 = vunpack.c.h.b16 %v290
      %v1011 = vunpack.c.l.b16 %v291
      %v1012 = vunpack.c.h.b16 %v291
      %v1013 = vpack.c.b16 %v889, %v885
      %v1014 = vpack.c.b16 %v890, %v886
      %v1015 = vpack.c.b16 %v891, %v887
      %v1016 = vpack.c.b16 %v892, %v888
      %v1017 = vpack.c.b16 %v897, %v893
      %v1018 = vpack.c.b16 %v898, %v894
      %v1019 = vpack.c.b16 %v899, %v895
      %v1020 = vpack.c.b16 %v900, %v896
      %v1021 = vpack.c.b16 %v905, %v901
      %v1022 = vpack.c.b16 %v906, %v902
      %v1023 = vpack.c.b16 %v907, %v903
      %v1024 = vpack.c.b16 %v908, %v904
      %v1025 = vpack.c.b16 %v913, %v909
      %v1026 = vpack.c.b16 %v914, %v910
      %v1027 = vpack.c.b16 %v915, %v911
      %v1028 = vpack.c.b16 %v916, %v912
      %v1029 = vpack.c.b16 %v921, %v917
      %v1030 = vpack.c.b16 %v922, %v918
      %v1031 = vpack.c.b16 %v923, %v919
      %v1032 = vpack.c.b16 %v924, %v920
      %v1033 = vpack.c.b16 %v929, %v925
      %v1034 = vpack.c.b16 %v930, %v926
      %v1035 = vpack.c.b16 %v931, %v927
      %v1036 = vpack.c.b16 %v932, %v928
      %v1037 = vpack.c.b16 %v937, %v933
      %v1038 = vpack.c.b16 %v938, %v934
      %v1039 = vpack.c.b16 %v939, %v935
      %v1040 = vpack.c.b16 %v940, %v936
      %v1041 = vpack.c.b16 %v945, %v941
      %v1042 = vpack.c.b16 %v946, %v942
      %v1043 = vpack.c.b16 %v947, %v943
      %v1044 = vpack.c.b16 %v948, %v944
      %v1045 = vpack.c.b16 %v953, %v949
      %v1046 = vpack.c.b16 %v954, %v950
      %v1047 = vpack.c.b16 %v955, %v951
      %v1048 = vpack.c.b16 %v956, %v952
      %v1049 = vpack.c.b16 %v961, %v957
      %v1050 = vpack.c.b16 %v962, %v958
      %v1051 = vpack.c.b16 %v963, %v959
      %v1052 = vpack.c.b16 %v964, %v960
      %v1053 = vpack.c.b16 %v969, %v965
      %v1054 = vpack.c.b16 %v970, %v966
      %v1055 = vpack.c.b16 %v971, %v967
      %v1056 = vpack.c.b16 %v972, %v968
      %v1057 = vpack.c.b16 %v977, %v973
      %v1058 = vpack.c.b16 %v978, %v974
      %v1059 = vpack.c.b16 %v979, %v975
      %v1060 = vpack.c.b16 %v980, %v976
      %v1061 = vpack.c.b16 %v985, %v981
      %v1062 = vpack.c.b16 %v986, %v982
      %v1063 = vpack.c.b16 %v987, %v983
      %v1064 = vpack.c.b16 %v988, %v984
      %v1065 = vpack.c.b16 %v993, %v989
      %v1066 = vpack.c.b16 %v994, %v990
      %v1067 = vpack.c.b16 %v995, %v991
      %v1068 = vpack.c.b16 %v996, %v992
      %v1069 = vpack.c.b16 %v1001, %v997
      %v1070 = vpack.c.b16 %v1002, %v998
      %v1071 = vpack.c.b16 %v1003, %v999
      %v1072 = vpack.c.b16 %v1004, %v1000
      %v1073 = vpack.c.b16 %v1009, %v1005
      %v1074 = vpack.c.b16 %v1010, %v1006
      %v1075 = vpack.c.b16 %v1011, %v1007
      %v1076 = vpack.c.b16 %v1012, %v1008
      %1141 = vmatpush.bf16.msra.mxu0 %v1041
      %1142 = vmatpush.bf16.msra.mxu0 %v1037
      %1143 = vmatpush.bf16.msra.mxu0 %v1033
      %1144 = vmatpush.bf16.msra.mxu0 %v1029
      %1145 = vmatpush.bf16.msra.mxu0 %v1025
      %1146 = vmatpush.bf16.msra.mxu0 %v1021
      %1147 = vmatpush.bf16.msra.mxu0 %v1017
      %1148 = vmatpush.bf16.msra.mxu0 %v1013
      %1149 = vmatmul.bf16.gmra.mxu0 %v817
      %v1150 = vpop.f32.mrf.mxu0
      %v1151 = vadd.f32 %v726, %v1150
      %v1152 = vpop.f32.mrf.mxu0
      %v1153 = vadd.f32 %v728, %v1152
      %1154 = vdwg.mxu0
      %1155 = vmatpush.bf16.msra.mxu0 %v1073
      %1156 = vmatpush.bf16.msra.mxu0 %v1069
      %1157 = vmatpush.bf16.msra.mxu0 %v1065
      %1158 = vmatpush.bf16.msra.mxu0 %v1061
      %1159 = vmatpush.bf16.msra.mxu0 %v1057
      %1160 = vmatpush.bf16.msra.mxu0 %v1053
      %1161 = vmatpush.bf16.msra.mxu0 %v1049
      %1162 = vmatpush.bf16.msra.mxu0 %v1045
      %1163 = vmatmul.bf16.gmra.mxu0 %v818
      %v1164 = vpop.f32.mrf.mxu0
      %v1165 = vadd.f32 %v1151, %v1164
      %v1166 = vpop.f32.mrf.mxu0
      %v1167 = vadd.f32 %v1153, %v1166
      %1168 = vdwg.mxu0
      %1169 = vmatpush.bf16.msra.mxu0 %v1042
      %1170 = vmatpush.bf16.msra.mxu0 %v1038
      %1171 = vmatpush.bf16.msra.mxu0 %v1034
      %1172 = vmatpush.bf16.msra.mxu0 %v1030
      %1173 = vmatpush.bf16.msra.mxu0 %v1026
      %1174 = vmatpush.bf16.msra.mxu0 %v1022
      %1175 = vmatpush.bf16.msra.mxu0 %v1018
      %1176 = vmatpush.bf16.msra.mxu0 %v1014
      %1177 = vmatmul.bf16.gmra.mxu0 %v817
      %v1178 = vpop.f32.mrf.mxu0
      %v1179 = vadd.f32 %v754, %v1178
      %v1180 = vpop.f32.mrf.mxu0
      %v1181 = vadd.f32 %v756, %v1180
      %1182 = vdwg.mxu0
      %1183 = vmatpush.bf16.msra.mxu0 %v1074
      %1184 = vmatpush.bf16.msra.mxu0 %v1070
      %1185 = vmatpush.bf16.msra.mxu0 %v1066
      %1186 = vmatpush.bf16.msra.mxu0 %v1062
      %1187 = vmatpush.bf16.msra.mxu0 %v1058
      %1188 = vmatpush.bf16.msra.mxu0 %v1054
      %1189 = vmatpush.bf16.msra.mxu0 %v1050
      %1190 = vmatpush.bf16.msra.mxu0 %v1046
      %1191 = vmatmul.bf16.gmra.mxu0 %v818
      %v1192 = vpop.f32.mrf.mxu0
      %v1193 = vadd.f32 %v1179, %v1192
      %v1194 = vpop.f32.mrf.mxu0
      %v1195 = vadd.f32 %v1181, %v1194
      %1196 = vdwg.mxu0
      %1197 = vmatpush.bf16.msra.mxu0 %v1043
      %1198 = vmatpush.bf16.msra.mxu0 %v1039
      %1199 = vmatpush.bf16.msra.mxu0 %v1035
      %1200 = vmatpush.bf16.msra.mxu0 %v1031
      %1201 = vmatpush.bf16.msra.mxu0 %v1027
      %1202 = vmatpush.bf16.msra.mxu0 %v1023
      %1203 = vmatpush.bf16.msra.mxu0 %v1019
      %1204 = vmatpush.bf16.msra.mxu0 %v1015
      %1205 = vmatmul.bf16.gmra.mxu0 %v817
      %v1206 = vpop.f32.mrf.mxu0
      %v1207 = vadd.f32 %v782, %v1206
      %v1208 = vpop.f32.mrf.mxu0
      %v1209 = vadd.f32 %v784, %v1208
      %1210 = vdwg.mxu0
      %1211 = vmatpush.bf16.msra.mxu0 %v1075
      %1212 = vmatpush.bf16.msra.mxu0 %v1071
      %1213 = vmatpush.bf16.msra.mxu0 %v1067
      %1214 = vmatpush.bf16.msra.mxu0 %v1063
      %1215 = vmatpush.bf16.msra.mxu0 %v1059
      %1216 = vmatpush.bf16.msra.mxu0 %v1055
      %1217 = vmatpush.bf16.msra.mxu0 %v1051
      %1218 = vmatpush.bf16.msra.mxu0 %v1047
      %1219 = vmatmul.bf16.gmra.mxu0 %v818
      %v1220 = vpop.f32.mrf.mxu0
      %v1221 = vadd.f32 %v1207, %v1220
      %v1222 = vpop.f32.mrf.mxu0
      %v1223 = vadd.f32 %v1209, %v1222
      %1224 = vdwg.mxu0
      %1225 = vmatpush.bf16.msra.mxu0 %v1044
      %1226 = vmatpush.bf16.msra.mxu0 %v1040
      %1227 = vmatpush.bf16.msra.mxu0 %v1036
      %1228 = vmatpush.bf16.msra.mxu0 %v1032
      %1229 = vmatpush.bf16.msra.mxu0 %v1028
      %1230 = vmatpush.bf16.msra.mxu0 %v1024
      %1231 = vmatpush.bf16.msra.mxu0 %v1020
      %1232 = vmatpush.bf16.msra.mxu0 %v1016
      %1233 = vmatmul.bf16.gmra.mxu0 %v817
      %v1234 = vpop.f32.mrf.mxu0
      %v1235 = vadd.f32 %v810, %v1234
      %v1236 = vpop.f32.mrf.mxu0
      %v1237 = vadd.f32 %v812, %v1236
      %1238 = vdwg.mxu0
      %1239 = vmatpush.bf16.msra.mxu0 %v1076
      %1240 = vmatpush.bf16.msra.mxu0 %v1072
      %1241 = vmatpush.bf16.msra.mxu0 %v1068
      %1242 = vmatpush.bf16.msra.mxu0 %v1064
      %1243 = vmatpush.bf16.msra.mxu0 %v1060
      %1244 = vmatpush.bf16.msra.mxu0 %v1056
      %1245 = vmatpush.bf16.msra.mxu0 %v1052
      %1246 = vmatpush.bf16.msra.mxu0 %v1048
      %1247 = vmatmul.bf16.gmra.mxu0 %v818
      %v1248 = vpop.f32.mrf.mxu0
      %v1249 = vadd.f32 %v1235, %v1248
      %v1250 = vpop.f32.mrf.mxu0
      %v1251 = vadd.f32 %v1237, %v1250
      %1252 = vdwg.mxu0
      %v1253 = vld [vmem:[%s219] sm:$0xee]
      %s1254 = scalar_lea.vmem %s1, 1024
      %v1255 = vld [vmem:[%s1254] sm:$0xff]
      %v1256 = vld [vmem:[%s1254 + $0x8] sm:$0xff]
      %v1257 = vld [vmem:[%s1254 + $0x10] sm:$0xff]
      %v1258 = vld [vmem:[%s1254 + $0x18] sm:$0xff]
      %v1259 = vld [vmem:[%s1254 + $0x20] sm:$0xff]
      %v1260 = vld [vmem:[%s1254 + $0x28] sm:$0xff]
      %v1261 = vld [vmem:[%s1254 + $0x30] sm:$0xff]
      %v1262 = vld [vmem:[%s1254 + $0x38] sm:$0xff]
      %v1263 = vld [vmem:[%s1254 + $0x40] sm:$0xff]
      %v1264 = vld [vmem:[%s1254 + $0x48] sm:$0xff]
      %v1265 = vld [vmem:[%s1254 + $0x50] sm:$0xff]
      %v1266 = vld [vmem:[%s1254 + $0x58] sm:$0xff]
      %v1267 = vld [vmem:[%s1254 + $0x60] sm:$0xff]
      %v1268 = vld [vmem:[%s1254 + $0x68] sm:$0xff]
      %v1269 = vld [vmem:[%s1254 + $0x70] sm:$0xff]
      %v1270 = vld [vmem:[%s1254 + $0x78] sm:$0xff]
      %v1271 = vld [vmem:[%s1254 + $0x80] sm:$0xff]
      %v1272 = vld [vmem:[%s1254 + $0x88] sm:$0xff]
      %v1273 = vld [vmem:[%s1254 + $0x90] sm:$0xff]
      %v1274 = vld [vmem:[%s1254 + $0x98] sm:$0xff]
      %v1275 = vld [vmem:[%s1254 + $0xa0] sm:$0xff]
      %v1276 = vld [vmem:[%s1254 + $0xa8] sm:$0xff]
      %v1277 = vld [vmem:[%s1254 + $0xb0] sm:$0xff]
      %v1278 = vld [vmem:[%s1254 + $0xb8] sm:$0xff]
      %v1279 = vld [vmem:[%s1254 + $0xc0] sm:$0xff]
      %v1280 = vld [vmem:[%s1254 + $0xc8] sm:$0xff]
      %v1281 = vld [vmem:[%s1254 + $0xd0] sm:$0xff]
      %v1282 = vld [vmem:[%s1254 + $0xd8] sm:$0xff]
      %v1283 = vld [vmem:[%s1254 + $0xe0] sm:$0xff]
      %v1284 = vld [vmem:[%s1254 + $0xe8] sm:$0xff]
      %v1285 = vld [vmem:[%s1254 + $0xf0] sm:$0xff]
      %v1286 = vld [vmem:[%s1254 + $0xf8] sm:$0xff]
      %v1287 = vld [vmem:[%s1254 + $0x100] sm:$0xff]
      %v1288 = vld [vmem:[%s1254 + $0x108] sm:$0xff]
      %v1289 = vld [vmem:[%s1254 + $0x110] sm:$0xff]
      %v1290 = vld [vmem:[%s1254 + $0x118] sm:$0xff]
      %v1291 = vld [vmem:[%s1254 + $0x120] sm:$0xff]
      %v1292 = vld [vmem:[%s1254 + $0x128] sm:$0xff]
      %v1293 = vld [vmem:[%s1254 + $0x130] sm:$0xff]
      %v1294 = vld [vmem:[%s1254 + $0x138] sm:$0xff]
      %v1295 = vld [vmem:[%s1254 + $0x140] sm:$0xff]
      %v1296 = vld [vmem:[%s1254 + $0x148] sm:$0xff]
      %v1297 = vld [vmem:[%s1254 + $0x150] sm:$0xff]
      %v1298 = vld [vmem:[%s1254 + $0x158] sm:$0xff]
      %v1299 = vld [vmem:[%s1254 + $0x160] sm:$0xff]
      %v1300 = vld [vmem:[%s1254 + $0x168] sm:$0xff]
      %v1301 = vld [vmem:[%s1254 + $0x170] sm:$0xff]
      %v1302 = vld [vmem:[%s1254 + $0x178] sm:$0xff]
      %v1303 = vld [vmem:[%s1254 + $0x180] sm:$0xff]
      %v1304 = vld [vmem:[%s1254 + $0x188] sm:$0xff]
      %v1305 = vld [vmem:[%s1254 + $0x190] sm:$0xff]
      %v1306 = vld [vmem:[%s1254 + $0x198] sm:$0xff]
      %v1307 = vld [vmem:[%s1254 + $0x1a0] sm:$0xff]
      %v1308 = vld [vmem:[%s1254 + $0x1a8] sm:$0xff]
      %v1309 = vld [vmem:[%s1254 + $0x1b0] sm:$0xff]
      %v1310 = vld [vmem:[%s1254 + $0x1b8] sm:$0xff]
      %v1311 = vld [vmem:[%s1254 + $0x1c0] sm:$0xff]
      %v1312 = vld [vmem:[%s1254 + $0x1c8] sm:$0xff]
      %v1313 = vld [vmem:[%s1254 + $0x1d0] sm:$0xff]
      %v1314 = vld [vmem:[%s1254 + $0x1d8] sm:$0xff]
      %v1315 = vld [vmem:[%s1254 + $0x1e0] sm:$0xff]
      %v1316 = vld [vmem:[%s1254 + $0x1e8] sm:$0xff]
      %v1317 = vld [vmem:[%s1254 + $0x1f0] sm:$0xff]
      %v1318 = vld [vmem:[%s1254 + $0x1f8] sm:$0xff]
      %v1320 = vunpack.c.l.b16 %v1253
      %v1321 = vunpack.c.h.b16 %v1253
      %v1322 = vpack.c.b16 %v362, %v1320
      %v1323 = vpack.c.b16 %v363, %v1321
      %v1324 = vrot.slane %v1322, 1
      %v1325 = vrot.slane %v1323, 1
      %v1392 = vunpack.c.l.b16 %v1255
      %v1393 = vunpack.c.h.b16 %v1255
      %v1394 = vunpack.c.l.b16 %v1256
      %v1395 = vunpack.c.h.b16 %v1256
      %v1396 = vunpack.c.l.b16 %v1257
      %v1397 = vunpack.c.h.b16 %v1257
      %v1398 = vunpack.c.l.b16 %v1258
      %v1399 = vunpack.c.h.b16 %v1258
      %v1400 = vunpack.c.l.b16 %v1259
      %v1401 = vunpack.c.h.b16 %v1259
      %v1402 = vunpack.c.l.b16 %v1260
      %v1403 = vunpack.c.h.b16 %v1260
      %v1404 = vunpack.c.l.b16 %v1261
      %v1405 = vunpack.c.h.b16 %v1261
      %v1406 = vunpack.c.l.b16 %v1262
      %v1407 = vunpack.c.h.b16 %v1262
      %v1408 = vunpack.c.l.b16 %v1263
      %v1409 = vunpack.c.h.b16 %v1263
      %v1410 = vunpack.c.l.b16 %v1264
      %v1411 = vunpack.c.h.b16 %v1264
      %v1412 = vunpack.c.l.b16 %v1265
      %v1413 = vunpack.c.h.b16 %v1265
      %v1414 = vunpack.c.l.b16 %v1266
      %v1415 = vunpack.c.h.b16 %v1266
      %v1416 = vunpack.c.l.b16 %v1267
      %v1417 = vunpack.c.h.b16 %v1267
      %v1418 = vunpack.c.l.b16 %v1268
      %v1419 = vunpack.c.h.b16 %v1268
      %v1420 = vunpack.c.l.b16 %v1269
      %v1421 = vunpack.c.h.b16 %v1269
      %v1422 = vunpack.c.l.b16 %v1270
      %v1423 = vunpack.c.h.b16 %v1270
      %v1424 = vunpack.c.l.b16 %v1271
      %v1425 = vunpack.c.h.b16 %v1271
      %v1426 = vunpack.c.l.b16 %v1272
      %v1427 = vunpack.c.h.b16 %v1272
      %v1428 = vunpack.c.l.b16 %v1273
      %v1429 = vunpack.c.h.b16 %v1273
      %v1430 = vunpack.c.l.b16 %v1274
      %v1431 = vunpack.c.h.b16 %v1274
      %v1432 = vunpack.c.l.b16 %v1275
      %v1433 = vunpack.c.h.b16 %v1275
      %v1434 = vunpack.c.l.b16 %v1276
      %v1435 = vunpack.c.h.b16 %v1276
      %v1436 = vunpack.c.l.b16 %v1277
      %v1437 = vunpack.c.h.b16 %v1277
      %v1438 = vunpack.c.l.b16 %v1278
      %v1439 = vunpack.c.h.b16 %v1278
      %v1440 = vunpack.c.l.b16 %v1279
      %v1441 = vunpack.c.h.b16 %v1279
      %v1442 = vunpack.c.l.b16 %v1280
      %v1443 = vunpack.c.h.b16 %v1280
      %v1444 = vunpack.c.l.b16 %v1281
      %v1445 = vunpack.c.h.b16 %v1281
      %v1446 = vunpack.c.l.b16 %v1282
      %v1447 = vunpack.c.h.b16 %v1282
      %v1448 = vunpack.c.l.b16 %v1283
      %v1449 = vunpack.c.h.b16 %v1283
      %v1450 = vunpack.c.l.b16 %v1284
      %v1451 = vunpack.c.h.b16 %v1284
      %v1452 = vunpack.c.l.b16 %v1285
      %v1453 = vunpack.c.h.b16 %v1285
      %v1454 = vunpack.c.l.b16 %v1286
      %v1455 = vunpack.c.h.b16 %v1286
      %v1456 = vunpack.c.l.b16 %v1287
      %v1457 = vunpack.c.h.b16 %v1287
      %v1458 = vunpack.c.l.b16 %v1288
      %v1459 = vunpack.c.h.b16 %v1288
      %v1460 = vunpack.c.l.b16 %v1289
      %v1461 = vunpack.c.h.b16 %v1289
      %v1462 = vunpack.c.l.b16 %v1290
      %v1463 = vunpack.c.h.b16 %v1290
      %v1464 = vunpack.c.l.b16 %v1291
      %v1465 = vunpack.c.h.b16 %v1291
      %v1466 = vunpack.c.l.b16 %v1292
      %v1467 = vunpack.c.h.b16 %v1292
      %v1468 = vunpack.c.l.b16 %v1293
      %v1469 = vunpack.c.h.b16 %v1293
      %v1470 = vunpack.c.l.b16 %v1294
      %v1471 = vunpack.c.h.b16 %v1294
      %v1472 = vunpack.c.l.b16 %v1295
      %v1473 = vunpack.c.h.b16 %v1295
      %v1474 = vunpack.c.l.b16 %v1296
      %v1475 = vunpack.c.h.b16 %v1296
      %v1476 = vunpack.c.l.b16 %v1297
      %v1477 = vunpack.c.h.b16 %v1297
      %v1478 = vunpack.c.l.b16 %v1298
      %v1479 = vunpack.c.h.b16 %v1298
      %v1480 = vunpack.c.l.b16 %v1299
      %v1481 = vunpack.c.h.b16 %v1299
      %v1482 = vunpack.c.l.b16 %v1300
      %v1483 = vunpack.c.h.b16 %v1300
      %v1484 = vunpack.c.l.b16 %v1301
      %v1485 = vunpack.c.h.b16 %v1301
      %v1486 = vunpack.c.l.b16 %v1302
      %v1487 = vunpack.c.h.b16 %v1302
      %v1488 = vunpack.c.l.b16 %v1303
      %v1489 = vunpack.c.h.b16 %v1303
      %v1490 = vunpack.c.l.b16 %v1304
      %v1491 = vunpack.c.h.b16 %v1304
      %v1492 = vunpack.c.l.b16 %v1305
      %v1493 = vunpack.c.h.b16 %v1305
      %v1494 = vunpack.c.l.b16 %v1306
      %v1495 = vunpack.c.h.b16 %v1306
      %v1496 = vunpack.c.l.b16 %v1307
      %v1497 = vunpack.c.h.b16 %v1307
      %v1498 = vunpack.c.l.b16 %v1308
      %v1499 = vunpack.c.h.b16 %v1308
      %v1500 = vunpack.c.l.b16 %v1309
      %v1501 = vunpack.c.h.b16 %v1309
      %v1502 = vunpack.c.l.b16 %v1310
      %v1503 = vunpack.c.h.b16 %v1310
      %v1504 = vunpack.c.l.b16 %v1311
      %v1505 = vunpack.c.h.b16 %v1311
      %v1506 = vunpack.c.l.b16 %v1312
      %v1507 = vunpack.c.h.b16 %v1312
      %v1508 = vunpack.c.l.b16 %v1313
      %v1509 = vunpack.c.h.b16 %v1313
      %v1510 = vunpack.c.l.b16 %v1314
      %v1511 = vunpack.c.h.b16 %v1314
      %v1512 = vunpack.c.l.b16 %v1315
      %v1513 = vunpack.c.h.b16 %v1315
      %v1514 = vunpack.c.l.b16 %v1316
      %v1515 = vunpack.c.h.b16 %v1316
      %v1516 = vunpack.c.l.b16 %v1317
      %v1517 = vunpack.c.h.b16 %v1317
      %v1518 = vunpack.c.l.b16 %v1318
      %v1519 = vunpack.c.h.b16 %v1318
      %v1520 = vpack.c.b16 %v1396, %v1392
      %v1521 = vpack.c.b16 %v1397, %v1393
      %v1522 = vpack.c.b16 %v1398, %v1394
      %v1523 = vpack.c.b16 %v1399, %v1395
      %v1524 = vpack.c.b16 %v1404, %v1400
      %v1525 = vpack.c.b16 %v1405, %v1401
      %v1526 = vpack.c.b16 %v1406, %v1402
      %v1527 = vpack.c.b16 %v1407, %v1403
      %v1528 = vpack.c.b16 %v1412, %v1408
      %v1529 = vpack.c.b16 %v1413, %v1409
      %v1530 = vpack.c.b16 %v1414, %v1410
      %v1531 = vpack.c.b16 %v1415, %v1411
      %v1532 = vpack.c.b16 %v1420, %v1416
      %v1533 = vpack.c.b16 %v1421, %v1417
      %v1534 = vpack.c.b16 %v1422, %v1418
      %v1535 = vpack.c.b16 %v1423, %v1419
      %v1536 = vpack.c.b16 %v1428, %v1424
      %v1537 = vpack.c.b16 %v1429, %v1425
      %v1538 = vpack.c.b16 %v1430, %v1426
      %v1539 = vpack.c.b16 %v1431, %v1427
      %v1540 = vpack.c.b16 %v1436, %v1432
      %v1541 = vpack.c.b16 %v1437, %v1433
      %v1542 = vpack.c.b16 %v1438, %v1434
      %v1543 = vpack.c.b16 %v1439, %v1435
      %v1544 = vpack.c.b16 %v1444, %v1440
      %v1545 = vpack.c.b16 %v1445, %v1441
      %v1546 = vpack.c.b16 %v1446, %v1442
      %v1547 = vpack.c.b16 %v1447, %v1443
      %v1548 = vpack.c.b16 %v1452, %v1448
      %v1549 = vpack.c.b16 %v1453, %v1449
      %v1550 = vpack.c.b16 %v1454, %v1450
      %v1551 = vpack.c.b16 %v1455, %v1451
      %v1552 = vpack.c.b16 %v1460, %v1456
      %v1553 = vpack.c.b16 %v1461, %v1457
      %v1554 = vpack.c.b16 %v1462, %v1458
      %v1555 = vpack.c.b16 %v1463, %v1459
      %v1556 = vpack.c.b16 %v1468, %v1464
      %v1557 = vpack.c.b16 %v1469, %v1465
      %v1558 = vpack.c.b16 %v1470, %v1466
      %v1559 = vpack.c.b16 %v1471, %v1467
      %v1560 = vpack.c.b16 %v1476, %v1472
      %v1561 = vpack.c.b16 %v1477, %v1473
      %v1562 = vpack.c.b16 %v1478, %v1474
      %v1563 = vpack.c.b16 %v1479, %v1475
      %v1564 = vpack.c.b16 %v1484, %v1480
      %v1565 = vpack.c.b16 %v1485, %v1481
      %v1566 = vpack.c.b16 %v1486, %v1482
      %v1567 = vpack.c.b16 %v1487, %v1483
      %v1568 = vpack.c.b16 %v1492, %v1488
      %v1569 = vpack.c.b16 %v1493, %v1489
      %v1570 = vpack.c.b16 %v1494, %v1490
      %v1571 = vpack.c.b16 %v1495, %v1491
      %v1572 = vpack.c.b16 %v1500, %v1496
      %v1573 = vpack.c.b16 %v1501, %v1497
      %v1574 = vpack.c.b16 %v1502, %v1498
      %v1575 = vpack.c.b16 %v1503, %v1499
      %v1576 = vpack.c.b16 %v1508, %v1504
      %v1577 = vpack.c.b16 %v1509, %v1505
      %v1578 = vpack.c.b16 %v1510, %v1506
      %v1579 = vpack.c.b16 %v1511, %v1507
      %v1580 = vpack.c.b16 %v1516, %v1512
      %v1581 = vpack.c.b16 %v1517, %v1513
      %v1582 = vpack.c.b16 %v1518, %v1514
      %v1583 = vpack.c.b16 %v1519, %v1515
      %1648 = vmatpush.bf16.msra.mxu0 %v1548
      %1649 = vmatpush.bf16.msra.mxu0 %v1544
      %1650 = vmatpush.bf16.msra.mxu0 %v1540
      %1651 = vmatpush.bf16.msra.mxu0 %v1536
      %1652 = vmatpush.bf16.msra.mxu0 %v1532
      %1653 = vmatpush.bf16.msra.mxu0 %v1528
      %1654 = vmatpush.bf16.msra.mxu0 %v1524
      %1655 = vmatpush.bf16.msra.mxu0 %v1520
      %1656 = vmatmul.bf16.gmra.mxu0 %v1324
      %v1657 = vpop.f32.mrf.mxu0
      %v1658 = vadd.f32 0.0, %v1657
      %v1659 = vpop.f32.mrf.mxu0
      %v1660 = vadd.f32 0.0, %v1659
      %1661 = vdwg.mxu0
      %1662 = vmatpush.bf16.msra.mxu0 %v1580
      %1663 = vmatpush.bf16.msra.mxu0 %v1576
      %1664 = vmatpush.bf16.msra.mxu0 %v1572
      %1665 = vmatpush.bf16.msra.mxu0 %v1568
      %1666 = vmatpush.bf16.msra.mxu0 %v1564
      %1667 = vmatpush.bf16.msra.mxu0 %v1560
      %1668 = vmatpush.bf16.msra.mxu0 %v1556
      %1669 = vmatpush.bf16.msra.mxu0 %v1552
      %1670 = vmatmul.bf16.gmra.mxu0 %v1325
      %v1671 = vpop.f32.mrf.mxu0
      %v1672 = vadd.f32 %v1658, %v1671
      %v1673 = vpop.f32.mrf.mxu0
      %v1674 = vadd.f32 %v1660, %v1673
      %1675 = vdwg.mxu0
      %1676 = vmatpush.bf16.msra.mxu0 %v1549
      %1677 = vmatpush.bf16.msra.mxu0 %v1545
      %1678 = vmatpush.bf16.msra.mxu0 %v1541
      %1679 = vmatpush.bf16.msra.mxu0 %v1537
      %1680 = vmatpush.bf16.msra.mxu0 %v1533
      %1681 = vmatpush.bf16.msra.mxu0 %v1529
      %1682 = vmatpush.bf16.msra.mxu0 %v1525
      %1683 = vmatpush.bf16.msra.mxu0 %v1521
      %1684 = vmatmul.bf16.gmra.mxu0 %v1324
      %v1685 = vpop.f32.mrf.mxu0
      %v1686 = vadd.f32 0.0, %v1685
      %v1687 = vpop.f32.mrf.mxu0
      %v1688 = vadd.f32 0.0, %v1687
      %1689 = vdwg.mxu0
      %1690 = vmatpush.bf16.msra.mxu0 %v1581
      %1691 = vmatpush.bf16.msra.mxu0 %v1577
      %1692 = vmatpush.bf16.msra.mxu0 %v1573
      %1693 = vmatpush.bf16.msra.mxu0 %v1569
      %1694 = vmatpush.bf16.msra.mxu0 %v1565
      %1695 = vmatpush.bf16.msra.mxu0 %v1561
      %1696 = vmatpush.bf16.msra.mxu0 %v1557
      %1697 = vmatpush.bf16.msra.mxu0 %v1553
      %1698 = vmatmul.bf16.gmra.mxu0 %v1325
      %v1699 = vpop.f32.mrf.mxu0
      %v1700 = vadd.f32 %v1686, %v1699
      %v1701 = vpop.f32.mrf.mxu0
      %v1702 = vadd.f32 %v1688, %v1701
      %1703 = vdwg.mxu0
      %1704 = vmatpush.bf16.msra.mxu0 %v1550
      %1705 = vmatpush.bf16.msra.mxu0 %v1546
      %1706 = vmatpush.bf16.msra.mxu0 %v1542
      %1707 = vmatpush.bf16.msra.mxu0 %v1538
      %1708 = vmatpush.bf16.msra.mxu0 %v1534
      %1709 = vmatpush.bf16.msra.mxu0 %v1530
      %1710 = vmatpush.bf16.msra.mxu0 %v1526
      %1711 = vmatpush.bf16.msra.mxu0 %v1522
      %1712 = vmatmul.bf16.gmra.mxu0 %v1324
      %v1713 = vpop.f32.mrf.mxu0
      %v1714 = vadd.f32 0.0, %v1713
      %v1715 = vpop.f32.mrf.mxu0
      %v1716 = vadd.f32 0.0, %v1715
      %1717 = vdwg.mxu0
      %1718 = vmatpush.bf16.msra.mxu0 %v1582
      %1719 = vmatpush.bf16.msra.mxu0 %v1578
      %1720 = vmatpush.bf16.msra.mxu0 %v1574
      %1721 = vmatpush.bf16.msra.mxu0 %v1570
      %1722 = vmatpush.bf16.msra.mxu0 %v1566
      %1723 = vmatpush.bf16.msra.mxu0 %v1562
      %1724 = vmatpush.bf16.msra.mxu0 %v1558
      %1725 = vmatpush.bf16.msra.mxu0 %v1554
      %1726 = vmatmul.bf16.gmra.mxu0 %v1325
      %v1727 = vpop.f32.mrf.mxu0
      %v1728 = vadd.f32 %v1714, %v1727
      %v1729 = vpop.f32.mrf.mxu0
      %v1730 = vadd.f32 %v1716, %v1729
      %1731 = vdwg.mxu0
      %1732 = vmatpush.bf16.msra.mxu0 %v1551
      %1733 = vmatpush.bf16.msra.mxu0 %v1547
      %1734 = vmatpush.bf16.msra.mxu0 %v1543
      %1735 = vmatpush.bf16.msra.mxu0 %v1539
      %1736 = vmatpush.bf16.msra.mxu0 %v1535
      %1737 = vmatpush.bf16.msra.mxu0 %v1531
      %1738 = vmatpush.bf16.msra.mxu0 %v1527
      %1739 = vmatpush.bf16.msra.mxu0 %v1523
      %1740 = vmatmul.bf16.gmra.mxu0 %v1324
      %v1741 = vpop.f32.mrf.mxu0
      %v1742 = vadd.f32 0.0, %v1741
      %v1743 = vpop.f32.mrf.mxu0
      %v1744 = vadd.f32 0.0, %v1743
      %1745 = vdwg.mxu0
      %1746 = vmatpush.bf16.msra.mxu0 %v1583
      %1747 = vmatpush.bf16.msra.mxu0 %v1579
      %1748 = vmatpush.bf16.msra.mxu0 %v1575
      %1749 = vmatpush.bf16.msra.mxu0 %v1571
      %1750 = vmatpush.bf16.msra.mxu0 %v1567
      %1751 = vmatpush.bf16.msra.mxu0 %v1563
      %1752 = vmatpush.bf16.msra.mxu0 %v1559
      %1753 = vmatpush.bf16.msra.mxu0 %v1555
      %1754 = vmatmul.bf16.gmra.mxu0 %v1325
      %v1755 = vpop.f32.mrf.mxu0
      %v1756 = vadd.f32 %v1742, %v1755
      %v1757 = vpop.f32.mrf.mxu0
      %v1758 = vadd.f32 %v1744, %v1757
      %1759 = vdwg.mxu0
      %v1760 = vadd.f32 %v1165, %v1672
      %v1761 = vadd.f32 %v1193, %v1700
      %v1762 = vadd.f32 %v1221, %v1728
      %v1763 = vadd.f32 %v1249, %v1756
      %v1764 = vadd.f32 %v1167, %v1674
      %v1765 = vadd.f32 %v1195, %v1702
      %v1766 = vadd.f32 %v1223, %v1730
      %v1767 = vadd.f32 %v1251, %v1758
      %v1768 = vld [vmem:[%s2] sm:$0xf]
      %v1770 = vperm.slane %v1768, 0
      %v1771 = vperm.slane %v1768, 1
      %v1772 = vperm.slane %v1768, 2
      %v1773 = vperm.slane %v1768, 3
      %v1778 = vadd.f32 %v1760, %v1770
      %v1779 = vadd.f32 %v1761, %v1771
      %v1780 = vadd.f32 %v1762, %v1772
      %v1781 = vadd.f32 %v1763, %v1773
      %v1782 = vadd.f32 %v1764, %v1770
      %v1783 = vadd.f32 %v1765, %v1771
      %v1784 = vadd.f32 %v1766, %v1772
      %v1785 = vadd.f32 %v1767, %v1773
      %v1786 = vmax.f32 %v1778, 0.0
      %v1787 = vmax.f32 %v1779, 0.0
      %v1788 = vmax.f32 %v1780, 0.0
      %v1789 = vmax.f32 %v1781, 0.0
      %v1790 = vmax.f32 %v1782, 0.0
      %v1791 = vmax.f32 %v1783, 0.0
      %v1792 = vmax.f32 %v1784, 0.0
      %v1793 = vmax.f32 %v1785, 0.0
      %v1794 = vpack.c.bf16 %v1790, %v1786
      %v1795 = vpack.c.bf16 %v1791, %v1787
      %v1796 = vpack.c.bf16 %v1792, %v1788
      %v1797 = vpack.c.bf16 %v1793, %v1789
      %v1798 = vld [vmem:[%s3] sm:$0xf]
      %vm1799 = vcmask 113664
      %v1801 = vsel %vm1799, %v1798, 0
      %vm1803 = vcmask 1046528
      %v1805 = vsel %vm1803, %v1794, 0
      %v1808 = vsel %vm1803, %v1795, 0
      %v1811 = vsel %vm1803, %v1796, 0
      %v1814 = vsel %vm1803, %v1797, 0
      %1816 = vmatpush.bf16.msra.mxu0 0
      %1817 = vmatpush.bf16.msra.mxu0 0
      %1818 = vmatpush.bf16.msra.mxu0 0
      %1819 = vmatpush.bf16.msra.mxu0 0
      %1820 = vmatpush.bf16.msra.mxu0 0
      %1821 = vmatpush.bf16.msra.mxu0 0
      %1822 = vmatpush.bf16.msra.mxu0 0
      %1823 = vmatpush.bf16.msra.mxu0 %v1805
      %1824 = vmatmul.bf16.gmra.mxu0 %v1801
      %v1825 = vpop.f32.mrf.mxu0
      %v1826 = vadd.f32 0.0, %v1825
      %v1827 = vpop.f32.mrf.mxu0
      %1828 = vdwg.mxu0
      %1829 = vmatpush.bf16.msra.mxu0 0
      %1830 = vmatpush.bf16.msra.mxu0 0
      %1831 = vmatpush.bf16.msra.mxu0 0
      %1832 = vmatpush.bf16.msra.mxu0 0
      %1833 = vmatpush.bf16.msra.mxu0 0
      %1834 = vmatpush.bf16.msra.mxu0 0
      %1835 = vmatpush.bf16.msra.mxu0 0
      %1836 = vmatpush.bf16.msra.mxu0 %v1808
      %1837 = vmatmul.bf16.gmra.mxu0 %v1801
      %v1838 = vpop.f32.mrf.mxu0
      %v1839 = vadd.f32 0.0, %v1838
      %v1840 = vpop.f32.mrf.mxu0
      %1841 = vdwg.mxu0
      %1842 = vmatpush.bf16.msra.mxu0 0
      %1843 = vmatpush.bf16.msra.mxu0 0
      %1844 = vmatpush.bf16.msra.mxu0 0
      %1845 = vmatpush.bf16.msra.mxu0 0
      %1846 = vmatpush.bf16.msra.mxu0 0
      %1847 = vmatpush.bf16.msra.mxu0 0
      %1848 = vmatpush.bf16.msra.mxu0 0
      %1849 = vmatpush.bf16.msra.mxu0 %v1811
      %1850 = vmatmul.bf16.gmra.mxu0 %v1801
      %v1851 = vpop.f32.mrf.mxu0
      %v1852 = vadd.f32 0.0, %v1851
      %v1853 = vpop.f32.mrf.mxu0
      %1854 = vdwg.mxu0
      %1855 = vmatpush.bf16.msra.mxu0 0
      %1856 = vmatpush.bf16.msra.mxu0 0
      %1857 = vmatpush.bf16.msra.mxu0 0
      %1858 = vmatpush.bf16.msra.mxu0 0
      %1859 = vmatpush.bf16.msra.mxu0 0
      %1860 = vmatpush.bf16.msra.mxu0 0
      %1861 = vmatpush.bf16.msra.mxu0 0
      %1862 = vmatpush.bf16.msra.mxu0 %v1814
      %1863 = vmatmul.bf16.gmra.mxu0 %v1801
      %v1864 = vpop.f32.mrf.mxu0
      %v1865 = vadd.f32 0.0, %v1864
      %v1866 = vpop.f32.mrf.mxu0
      %1867 = vdwg.mxu0
      %s1868 = scalar_lea.vmem %s3, 4
      %v1869 = vld [vmem:[%s1868] sm:$0xf]
      %v1871 = vsel %vm1799, %v1869, 0
      %1873 = vmatpush.bf16.msra.mxu0 0
      %1874 = vmatpush.bf16.msra.mxu0 0
      %1875 = vmatpush.bf16.msra.mxu0 0
      %1876 = vmatpush.bf16.msra.mxu0 0
      %1877 = vmatpush.bf16.msra.mxu0 0
      %1878 = vmatpush.bf16.msra.mxu0 0
      %1879 = vmatpush.bf16.msra.mxu0 0
      %1880 = vmatpush.bf16.msra.mxu0 %v1805
      %1881 = vmatmul.bf16.gmra.mxu0 %v1871
      %v1882 = vpop.f32.mrf.mxu0
      %v1883 = vadd.f32 0.0, %v1882
      %v1884 = vpop.f32.mrf.mxu0
      %1885 = vdwg.mxu0
      %1886 = vmatpush.bf16.msra.mxu0 0
      %1887 = vmatpush.bf16.msra.mxu0 0
      %1888 = vmatpush.bf16.msra.mxu0 0
      %1889 = vmatpush.bf16.msra.mxu0 0
      %1890 = vmatpush.bf16.msra.mxu0 0
      %1891 = vmatpush.bf16.msra.mxu0 0
      %1892 = vmatpush.bf16.msra.mxu0 0
      %1893 = vmatpush.bf16.msra.mxu0 %v1808
      %1894 = vmatmul.bf16.gmra.mxu0 %v1871
      %v1895 = vpop.f32.mrf.mxu0
      %v1896 = vadd.f32 0.0, %v1895
      %v1897 = vpop.f32.mrf.mxu0
      %1898 = vdwg.mxu0
      %1899 = vmatpush.bf16.msra.mxu0 0
      %1900 = vmatpush.bf16.msra.mxu0 0
      %1901 = vmatpush.bf16.msra.mxu0 0
      %1902 = vmatpush.bf16.msra.mxu0 0
      %1903 = vmatpush.bf16.msra.mxu0 0
      %1904 = vmatpush.bf16.msra.mxu0 0
      %1905 = vmatpush.bf16.msra.mxu0 0
      %1906 = vmatpush.bf16.msra.mxu0 %v1811
      %1907 = vmatmul.bf16.gmra.mxu0 %v1871
      %v1908 = vpop.f32.mrf.mxu0
      %v1909 = vadd.f32 0.0, %v1908
      %v1910 = vpop.f32.mrf.mxu0
      %1911 = vdwg.mxu0
      %1912 = vmatpush.bf16.msra.mxu0 0
      %1913 = vmatpush.bf16.msra.mxu0 0
      %1914 = vmatpush.bf16.msra.mxu0 0
      %1915 = vmatpush.bf16.msra.mxu0 0
      %1916 = vmatpush.bf16.msra.mxu0 0
      %1917 = vmatpush.bf16.msra.mxu0 0
      %1918 = vmatpush.bf16.msra.mxu0 0
      %1919 = vmatpush.bf16.msra.mxu0 %v1814
      %1920 = vmatmul.bf16.gmra.mxu0 %v1871
      %v1921 = vpop.f32.mrf.mxu0
      %v1922 = vadd.f32 0.0, %v1921
      %v1923 = vpop.f32.mrf.mxu0
      %1924 = vdwg.mxu0
      %v1925 = vmax.f32 %v1826, %v1883
      %v1926 = vmax.f32 %v1839, %v1896
      %v1927 = vmax.f32 %v1852, %v1909
      %v1928 = vmax.f32 %v1865, %v1922
      %v1929 = vpack.c.bf16 %v1925, %v1925
      %v1930 = vpack.c.bf16 %v1926, %v1926
      %v1931 = vpack.c.bf16 %v1927, %v1927
      %v1932 = vpack.c.bf16 %v1928, %v1928
      %v1933 = vld [vmem:[%s4] sm:$0xff]
      %v1934 = vld [vmem:[%s4 + $0x8] sm:$0xff]
      %v1935 = vld [vmem:[%s4 + $0x10] sm:$0xff]
      %v1936 = vld [vmem:[%s4 + $0x18] sm:$0xff]
      %v1937 = vld [vmem:[%s4 + $0x20] sm:$0xff]
      %v1938 = vld [vmem:[%s4 + $0x28] sm:$0xff]
      %v1939 = vld [vmem:[%s4 + $0x30] sm:$0xff]
      %v1940 = vld [vmem:[%s4 + $0x38] sm:$0xff]
      %v1941 = vld [vmem:[%s4 + $0x40] sm:$0xff]
      %v1942 = vld [vmem:[%s4 + $0x48] sm:$0xff]
      %v1943 = vld [vmem:[%s4 + $0x50] sm:$0xff]
      %v1944 = vld [vmem:[%s4 + $0x58] sm:$0xff]
      %v1945 = vld [vmem:[%s4 + $0x60] sm:$0xff]
      %v1946 = vld [vmem:[%s4 + $0x68] sm:$0xff]
      %v1947 = vld [vmem:[%s4 + $0x70] sm:$0xff]
      %v1948 = vld [vmem:[%s4 + $0x78] sm:$0xff]
      %v1949 = vld [vmem:[%s4 + $0x80] sm:$0xff]
      %v1950 = vld [vmem:[%s4 + $0x88] sm:$0xff]
      %v1951 = vld [vmem:[%s4 + $0x90] sm:$0xff]
      %v1952 = vld [vmem:[%s4 + $0x98] sm:$0xff]
      %v1953 = vld [vmem:[%s4 + $0xa0] sm:$0xff]
      %v1954 = vld [vmem:[%s4 + $0xa8] sm:$0xff]
      %v1955 = vld [vmem:[%s4 + $0xb0] sm:$0xff]
      %v1956 = vld [vmem:[%s4 + $0xb8] sm:$0xff]
      %v1957 = vld [vmem:[%s4 + $0xc0] sm:$0xff]
      %v1958 = vld [vmem:[%s4 + $0xc8] sm:$0xff]
      %v1959 = vld [vmem:[%s4 + $0xd0] sm:$0xff]
      %v1960 = vld [vmem:[%s4 + $0xd8] sm:$0xff]
      %v1961 = vld [vmem:[%s4 + $0xe0] sm:$0xff]
      %v1962 = vld [vmem:[%s4 + $0xe8] sm:$0xff]
      %v1963 = vld [vmem:[%s4 + $0xf0] sm:$0xff]
      %v1964 = vld [vmem:[%s4 + $0xf8] sm:$0xff]
      %v1965 = vld [vmem:[%s4 + $0x100] sm:$0xff]
      %v1966 = vld [vmem:[%s4 + $0x108] sm:$0xff]
      %v1967 = vld [vmem:[%s4 + $0x110] sm:$0xff]
      %v1968 = vld [vmem:[%s4 + $0x118] sm:$0xff]
      %v1969 = vld [vmem:[%s4 + $0x120] sm:$0xff]
      %v1970 = vld [vmem:[%s4 + $0x128] sm:$0xff]
      %v1971 = vld [vmem:[%s4 + $0x130] sm:$0xff]
      %v1972 = vld [vmem:[%s4 + $0x138] sm:$0xff]
      %v1973 = vld [vmem:[%s4 + $0x140] sm:$0xff]
      %v1974 = vld [vmem:[%s4 + $0x148] sm:$0xff]
      %v1975 = vld [vmem:[%s4 + $0x150] sm:$0xff]
      %v1976 = vld [vmem:[%s4 + $0x158] sm:$0xff]
      %v1977 = vld [vmem:[%s4 + $0x160] sm:$0xff]
      %v1978 = vld [vmem:[%s4 + $0x168] sm:$0xff]
      %v1979 = vld [vmem:[%s4 + $0x170] sm:$0xff]
      %v1980 = vld [vmem:[%s4 + $0x178] sm:$0xff]
      %v1981 = vld [vmem:[%s4 + $0x180] sm:$0xff]
      %v1982 = vld [vmem:[%s4 + $0x188] sm:$0xff]
      %v1983 = vld [vmem:[%s4 + $0x190] sm:$0xff]
      %v1984 = vld [vmem:[%s4 + $0x198] sm:$0xff]
      %v1985 = vld [vmem:[%s4 + $0x1a0] sm:$0xff]
      %v1986 = vld [vmem:[%s4 + $0x1a8] sm:$0xff]
      %v1987 = vld [vmem:[%s4 + $0x1b0] sm:$0xff]
      %v1988 = vld [vmem:[%s4 + $0x1b8] sm:$0xff]
      %v2045 = vunpack.c.l.b16 %v1933
      %v2046 = vunpack.c.h.b16 %v1933
      %v2047 = vunpack.c.l.b16 %v1934
      %v2048 = vunpack.c.h.b16 %v1934
      %v2049 = vunpack.c.l.b16 %v1935
      %v2050 = vunpack.c.h.b16 %v1935
      %v2051 = vunpack.c.l.b16 %v1936
      %v2052 = vunpack.c.h.b16 %v1936
      %v2053 = vunpack.c.l.b16 %v1937
      %v2054 = vunpack.c.h.b16 %v1937
      %v2055 = vunpack.c.l.b16 %v1938
      %v2056 = vunpack.c.h.b16 %v1938
      %v2057 = vunpack.c.l.b16 %v1939
      %v2058 = vunpack.c.h.b16 %v1939
      %v2059 = vunpack.c.l.b16 %v1940
      %v2060 = vunpack.c.h.b16 %v1940
      %v2061 = vunpack.c.l.b16 %v1941
      %v2062 = vunpack.c.h.b16 %v1941
      %v2063 = vunpack.c.l.b16 %v1942
      %v2064 = vunpack.c.h.b16 %v1942
      %v2065 = vunpack.c.l.b16 %v1943
      %v2066 = vunpack.c.h.b16 %v1943
      %v2067 = vunpack.c.l.b16 %v1944
      %v2068 = vunpack.c.h.b16 %v1944
      %v2069 = vunpack.c.l.b16 %v1945
      %v2070 = vunpack.c.h.b16 %v1945
      %v2071 = vunpack.c.l.b16 %v1946
      %v2072 = vunpack.c.h.b16 %v1946
      %v2073 = vunpack.c.l.b16 %v1947
      %v2074 = vunpack.c.h.b16 %v1947
      %v2075 = vunpack.c.l.b16 %v1948
      %v2076 = vunpack.c.h.b16 %v1948
      %v2077 = vunpack.c.l.b16 %v1949
      %v2078 = vunpack.c.h.b16 %v1949
      %v2079 = vunpack.c.l.b16 %v1950
      %v2080 = vunpack.c.h.b16 %v1950
      %v2081 = vunpack.c.l.b16 %v1951
      %v2082 = vunpack.c.h.b16 %v1951
      %v2083 = vunpack.c.l.b16 %v1952
      %v2084 = vunpack.c.h.b16 %v1952
      %v2085 = vunpack.c.l.b16 %v1953
      %v2086 = vunpack.c.h.b16 %v1953
      %v2087 = vunpack.c.l.b16 %v1954
      %v2088 = vunpack.c.h.b16 %v1954
      %v2089 = vunpack.c.l.b16 %v1955
      %v2090 = vunpack.c.h.b16 %v1955
      %v2091 = vunpack.c.l.b16 %v1956
      %v2092 = vunpack.c.h.b16 %v1956
      %v2093 = vunpack.c.l.b16 %v1957
      %v2094 = vunpack.c.h.b16 %v1957
      %v2095 = vunpack.c.l.b16 %v1958
      %v2096 = vunpack.c.h.b16 %v1958
      %v2097 = vunpack.c.l.b16 %v1959
      %v2098 = vunpack.c.h.b16 %v1959
      %v2099 = vunpack.c.l.b16 %v1960
      %v2100 = vunpack.c.h.b16 %v1960
      %v2101 = vunpack.c.l.b16 %v1961
      %v2102 = vunpack.c.h.b16 %v1961
      %v2103 = vunpack.c.l.b16 %v1962
      %v2104 = vunpack.c.h.b16 %v1962
      %v2105 = vunpack.c.l.b16 %v1963
      %v2106 = vunpack.c.h.b16 %v1963
      %v2107 = vunpack.c.l.b16 %v1964
      %v2108 = vunpack.c.h.b16 %v1964
      %v2109 = vunpack.c.l.b16 %v1965
      %v2110 = vunpack.c.h.b16 %v1965
      %v2111 = vunpack.c.l.b16 %v1966
      %v2112 = vunpack.c.h.b16 %v1966
      %v2113 = vunpack.c.l.b16 %v1967
      %v2114 = vunpack.c.h.b16 %v1967
      %v2115 = vunpack.c.l.b16 %v1968
      %v2116 = vunpack.c.h.b16 %v1968
      %v2117 = vunpack.c.l.b16 %v1969
      %v2118 = vunpack.c.h.b16 %v1969
      %v2119 = vunpack.c.l.b16 %v1970
      %v2120 = vunpack.c.h.b16 %v1970
      %v2121 = vunpack.c.l.b16 %v1971
      %v2122 = vunpack.c.h.b16 %v1971
      %v2123 = vunpack.c.l.b16 %v1972
      %v2124 = vunpack.c.h.b16 %v1972
      %v2125 = vunpack.c.l.b16 %v1973
      %v2126 = vunpack.c.h.b16 %v1973
      %v2127 = vunpack.c.l.b16 %v1974
      %v2128 = vunpack.c.h.b16 %v1974
      %v2129 = vunpack.c.l.b16 %v1975
      %v2130 = vunpack.c.h.b16 %v1975
      %v2131 = vunpack.c.l.b16 %v1976
      %v2132 = vunpack.c.h.b16 %v1976
      %v2133 = vunpack.c.l.b16 %v1977
      %v2134 = vunpack.c.h.b16 %v1977
      %v2135 = vunpack.c.l.b16 %v1978
      %v2136 = vunpack.c.h.b16 %v1978
      %v2137 = vunpack.c.l.b16 %v1979
      %v2138 = vunpack.c.h.b16 %v1979
      %v2139 = vunpack.c.l.b16 %v1980
      %v2140 = vunpack.c.h.b16 %v1980
      %v2141 = vunpack.c.l.b16 %v1981
      %v2142 = vunpack.c.h.b16 %v1981
      %v2143 = vunpack.c.l.b16 %v1982
      %v2144 = vunpack.c.h.b16 %v1982
      %v2145 = vunpack.c.l.b16 %v1983
      %v2146 = vunpack.c.h.b16 %v1983
      %v2147 = vunpack.c.l.b16 %v1984
      %v2148 = vunpack.c.h.b16 %v1984
      %v2149 = vunpack.c.l.b16 %v1985
      %v2150 = vunpack.c.h.b16 %v1985
      %v2151 = vunpack.c.l.b16 %v1986
      %v2152 = vunpack.c.h.b16 %v1986
      %v2153 = vunpack.c.l.b16 %v1987
      %v2154 = vunpack.c.h.b16 %v1987
      %v2155 = vunpack.c.l.b16 %v1988
      %v2156 = vunpack.c.h.b16 %v1988
      %v2157 = vpack.c.b16 %v2047, %v2045
      %v2158 = vpack.c.b16 %v2048, %v2046
      %v2159 = vpack.c.b16 %v2051, %v2049
      %v2160 = vpack.c.b16 %v2052, %v2050
      %v2161 = vpack.c.b16 %v2055, %v2053
      %v2162 = vpack.c.b16 %v2056, %v2054
      %v2163 = vpack.c.b16 %v2059, %v2057
      %v2164 = vpack.c.b16 %v2060, %v2058
      %v2165 = vpack.c.b16 %v2063, %v2061
      %v2166 = vpack.c.b16 %v2064, %v2062
      %v2167 = vpack.c.b16 %v2067, %v2065
      %v2168 = vpack.c.b16 %v2068, %v2066
      %v2169 = vpack.c.b16 %v2071, %v2069
      %v2170 = vpack.c.b16 %v2072, %v2070
      %v2171 = vpack.c.b16 %v2075, %v2073
      %v2172 = vpack.c.b16 %v2076, %v2074
      %v2173 = vpack.c.b16 %v2079, %v2077
      %v2174 = vpack.c.b16 %v2080, %v2078
      %v2175 = vpack.c.b16 %v2083, %v2081
      %v2176 = vpack.c.b16 %v2084, %v2082
      %v2177 = vpack.c.b16 %v2087, %v2085
      %v2178 = vpack.c.b16 %v2088, %v2086
      %v2179 = vpack.c.b16 %v2091, %v2089
      %v2180 = vpack.c.b16 %v2092, %v2090
      %v2181 = vpack.c.b16 %v2095, %v2093
      %v2182 = vpack.c.b16 %v2096, %v2094
      %v2183 = vpack.c.b16 %v2099, %v2097
      %v2184 = vpack.c.b16 %v2100, %v2098
      %v2185 = vpack.c.b16 %v2103, %v2101
      %v2186 = vpack.c.b16 %v2104, %v2102
      %v2187 = vpack.c.b16 %v2107, %v2105
      %v2188 = vpack.c.b16 %v2108, %v2106
      %v2189 = vpack.c.b16 %v2111, %v2109
      %v2190 = vpack.c.b16 %v2112, %v2110
      %v2191 = vpack.c.b16 %v2115, %v2113
      %v2192 = vpack.c.b16 %v2116, %v2114
      %v2193 = vpack.c.b16 %v2119, %v2117
      %v2194 = vpack.c.b16 %v2120, %v2118
      %v2195 = vpack.c.b16 %v2123, %v2121
      %v2196 = vpack.c.b16 %v2124, %v2122
      %v2197 = vpack.c.b16 %v2127, %v2125
      %v2198 = vpack.c.b16 %v2128, %v2126
      %v2199 = vpack.c.b16 %v2131, %v2129
      %v2200 = vpack.c.b16 %v2132, %v2130
      %v2201 = vpack.c.b16 %v2135, %v2133
      %v2202 = vpack.c.b16 %v2136, %v2134
      %v2203 = vpack.c.b16 %v2139, %v2137
      %v2204 = vpack.c.b16 %v2140, %v2138
      %v2205 = vpack.c.b16 %v2143, %v2141
      %v2206 = vpack.c.b16 %v2144, %v2142
      %v2207 = vpack.c.b16 %v2147, %v2145
      %v2208 = vpack.c.b16 %v2148, %v2146
      %v2209 = vpack.c.b16 %v2151, %v2149
      %v2210 = vpack.c.b16 %v2152, %v2150
      %v2211 = vpack.c.b16 %v2155, %v2153
      %v2212 = vpack.c.b16 %v2156, %v2154
      %vm2269 = vcmask 523264
      %v2271 = vsel %vm2269, %v1932, 0
      %2273 = vmatpush.bf16.msra.mxu0 %v2171
      %2274 = vmatpush.bf16.msra.mxu0 %v2169
      %2275 = vmatpush.bf16.msra.mxu0 %v2167
      %2276 = vmatpush.bf16.msra.mxu0 %v2165
      %2277 = vmatpush.bf16.msra.mxu0 %v2163
      %2278 = vmatpush.bf16.msra.mxu0 %v2161
      %2279 = vmatpush.bf16.msra.mxu0 %v2159
      %2280 = vmatpush.bf16.msra.mxu0 %v2157
      %2281 = vmatmul.bf16.gmra.mxu0 %v1929
      %v2282 = vpop.f32.mrf.mxu0
      %v2283 = vadd.f32 0.0, %v2282
      %v2284 = vpop.f32.mrf.mxu0
      %2285 = vdwg.mxu0
      %2286 = vmatpush.bf16.msra.mxu0 %v2187
      %2287 = vmatpush.bf16.msra.mxu0 %v2185
      %2288 = vmatpush.bf16.msra.mxu0 %v2183
      %2289 = vmatpush.bf16.msra.mxu0 %v2181
      %2290 = vmatpush.bf16.msra.mxu0 %v2179
      %2291 = vmatpush.bf16.msra.mxu0 %v2177
      %2292 = vmatpush.bf16.msra.mxu0 %v2175
      %2293 = vmatpush.bf16.msra.mxu0 %v2173
      %2294 = vmatmul.bf16.gmra.mxu0 %v1930
      %v2295 = vpop.f32.mrf.mxu0
      %v2296 = vadd.f32 %v2283, %v2295
      %v2297 = vpop.f32.mrf.mxu0
      %2298 = vdwg.mxu0
      %2299 = vmatpush.bf16.msra.mxu0 %v2203
      %2300 = vmatpush.bf16.msra.mxu0 %v2201
      %2301 = vmatpush.bf16.msra.mxu0 %v2199
      %2302 = vmatpush.bf16.msra.mxu0 %v2197
      %2303 = vmatpush.bf16.msra.mxu0 %v2195
      %2304 = vmatpush.bf16.msra.mxu0 %v2193
      %2305 = vmatpush.bf16.msra.mxu0 %v2191
      %2306 = vmatpush.bf16.msra.mxu0 %v2189
      %2307 = vmatmul.bf16.gmra.mxu0 %v1931
      %v2308 = vpop.f32.mrf.mxu0
      %v2309 = vadd.f32 %v2296, %v2308
      %v2310 = vpop.f32.mrf.mxu0
      %2311 = vdwg.mxu0
      %2312 = vmatpush.bf16.msra.mxu0 0
      %2313 = vmatpush.bf16.msra.mxu0 0
      %2314 = vmatpush.bf16.msra.mxu0 0
      %2315 = vmatpush.bf16.msra.mxu0 0
      %2316 = vmatpush.bf16.msra.mxu0 %v2211
      %2317 = vmatpush.bf16.msra.mxu0 %v2209
      %2318 = vmatpush.bf16.msra.mxu0 %v2207
      %2319 = vmatpush.bf16.msra.mxu0 %v2205
      %2320 = vmatmul.bf16.gmra.mxu0 %v2271
      %v2321 = vpop.f32.mrf.mxu0
      %v2322 = vadd.f32 %v2309, %v2321
      %v2323 = vpop.f32.mrf.mxu0
      %2324 = vdwg.mxu0
      %2325 = vmatpush.bf16.msra.mxu0 %v2172
      %2326 = vmatpush.bf16.msra.mxu0 %v2170
      %2327 = vmatpush.bf16.msra.mxu0 %v2168
      %2328 = vmatpush.bf16.msra.mxu0 %v2166
      %2329 = vmatpush.bf16.msra.mxu0 %v2164
      %2330 = vmatpush.bf16.msra.mxu0 %v2162
      %2331 = vmatpush.bf16.msra.mxu0 %v2160
      %2332 = vmatpush.bf16.msra.mxu0 %v2158
      %2333 = vmatmul.bf16.gmra.mxu0 %v1929
      %v2334 = vpop.f32.mrf.mxu0
      %v2335 = vadd.f32 0.0, %v2334
      %v2336 = vpop.f32.mrf.mxu0
      %2337 = vdwg.mxu0
      %2338 = vmatpush.bf16.msra.mxu0 %v2188
      %2339 = vmatpush.bf16.msra.mxu0 %v2186
      %2340 = vmatpush.bf16.msra.mxu0 %v2184
      %2341 = vmatpush.bf16.msra.mxu0 %v2182
      %2342 = vmatpush.bf16.msra.mxu0 %v2180
      %2343 = vmatpush.bf16.msra.mxu0 %v2178
      %2344 = vmatpush.bf16.msra.mxu0 %v2176
      %2345 = vmatpush.bf16.msra.mxu0 %v2174
      %2346 = vmatmul.bf16.gmra.mxu0 %v1930
      %v2347 = vpop.f32.mrf.mxu0
      %v2348 = vadd.f32 %v2335, %v2347
      %v2349 = vpop.f32.mrf.mxu0
      %2350 = vdwg.mxu0
      %2351 = vmatpush.bf16.msra.mxu0 %v2204
      %2352 = vmatpush.bf16.msra.mxu0 %v2202
      %2353 = vmatpush.bf16.msra.mxu0 %v2200
      %2354 = vmatpush.bf16.msra.mxu0 %v2198
      %2355 = vmatpush.bf16.msra.mxu0 %v2196
      %2356 = vmatpush.bf16.msra.mxu0 %v2194
      %2357 = vmatpush.bf16.msra.mxu0 %v2192
      %2358 = vmatpush.bf16.msra.mxu0 %v2190
      %2359 = vmatmul.bf16.gmra.mxu0 %v1931
      %v2360 = vpop.f32.mrf.mxu0
      %v2361 = vadd.f32 %v2348, %v2360
      %v2362 = vpop.f32.mrf.mxu0
      %2363 = vdwg.mxu0
      %2364 = vmatpush.bf16.msra.mxu0 0
      %2365 = vmatpush.bf16.msra.mxu0 0
      %2366 = vmatpush.bf16.msra.mxu0 0
      %2367 = vmatpush.bf16.msra.mxu0 0
      %2368 = vmatpush.bf16.msra.mxu0 %v2212
      %2369 = vmatpush.bf16.msra.mxu0 %v2210
      %2370 = vmatpush.bf16.msra.mxu0 %v2208
      %2371 = vmatpush.bf16.msra.mxu0 %v2206
      %2372 = vmatmul.bf16.gmra.mxu0 %v2271
      %v2373 = vpop.f32.mrf.mxu0
      %v2374 = vadd.f32 %v2361, %v2373
      %v2375 = vpop.f32.mrf.mxu0
      %2376 = vdwg.mxu0
      %s2377 = scalar_lea.vmem %s4, 448
      %v2378 = vld [vmem:[%s2377] sm:$0xff]
      %v2379 = vld [vmem:[%s2377 + $0x8] sm:$0xff]
      %v2380 = vld [vmem:[%s2377 + $0x10] sm:$0xff]
      %v2381 = vld [vmem:[%s2377 + $0x18] sm:$0xff]
      %v2382 = vld [vmem:[%s2377 + $0x20] sm:$0xff]
      %v2383 = vld [vmem:[%s2377 + $0x28] sm:$0xff]
      %v2384 = vld [vmem:[%s2377 + $0x30] sm:$0xff]
      %v2385 = vld [vmem:[%s2377 + $0x38] sm:$0xff]
      %v2386 = vld [vmem:[%s2377 + $0x40] sm:$0xff]
      %v2387 = vld [vmem:[%s2377 + $0x48] sm:$0xff]
      %v2388 = vld [vmem:[%s2377 + $0x50] sm:$0xff]
      %v2389 = vld [vmem:[%s2377 + $0x58] sm:$0xff]
      %v2390 = vld [vmem:[%s2377 + $0x60] sm:$0xff]
      %v2391 = vld [vmem:[%s2377 + $0x68] sm:$0xff]
      %v2392 = vld [vmem:[%s2377 + $0x70] sm:$0xff]
      %v2393 = vld [vmem:[%s2377 + $0x78] sm:$0xff]
      %v2394 = vld [vmem:[%s2377 + $0x80] sm:$0xff]
      %v2395 = vld [vmem:[%s2377 + $0x88] sm:$0xff]
      %v2396 = vld [vmem:[%s2377 + $0x90] sm:$0xff]
      %v2397 = vld [vmem:[%s2377 + $0x98] sm:$0xff]
      %v2398 = vld [vmem:[%s2377 + $0xa0] sm:$0xff]
      %v2399 = vld [vmem:[%s2377 + $0xa8] sm:$0xff]
      %v2400 = vld [vmem:[%s2377 + $0xb0] sm:$0xff]
      %v2401 = vld [vmem:[%s2377 + $0xb8] sm:$0xff]
      %v2402 = vld [vmem:[%s2377 + $0xc0] sm:$0xff]
      %v2403 = vld [vmem:[%s2377 + $0xc8] sm:$0xff]
      %v2404 = vld [vmem:[%s2377 + $0xd0] sm:$0xff]
      %v2405 = vld [vmem:[%s2377 + $0xd8] sm:$0xff]
      %v2406 = vld [vmem:[%s2377 + $0xe0] sm:$0xff]
      %v2407 = vld [vmem:[%s2377 + $0xe8] sm:$0xff]
      %v2408 = vld [vmem:[%s2377 + $0xf0] sm:$0xff]
      %v2409 = vld [vmem:[%s2377 + $0xf8] sm:$0xff]
      %v2410 = vld [vmem:[%s2377 + $0x100] sm:$0xff]
      %v2411 = vld [vmem:[%s2377 + $0x108] sm:$0xff]
      %v2412 = vld [vmem:[%s2377 + $0x110] sm:$0xff]
      %v2413 = vld [vmem:[%s2377 + $0x118] sm:$0xff]
      %v2414 = vld [vmem:[%s2377 + $0x120] sm:$0xff]
      %v2415 = vld [vmem:[%s2377 + $0x128] sm:$0xff]
      %v2416 = vld [vmem:[%s2377 + $0x130] sm:$0xff]
      %v2417 = vld [vmem:[%s2377 + $0x138] sm:$0xff]
      %v2418 = vld [vmem:[%s2377 + $0x140] sm:$0xff]
      %v2419 = vld [vmem:[%s2377 + $0x148] sm:$0xff]
      %v2420 = vld [vmem:[%s2377 + $0x150] sm:$0xff]
      %v2421 = vld [vmem:[%s2377 + $0x158] sm:$0xff]
      %v2422 = vld [vmem:[%s2377 + $0x160] sm:$0xff]
      %v2423 = vld [vmem:[%s2377 + $0x168] sm:$0xff]
      %v2424 = vld [vmem:[%s2377 + $0x170] sm:$0xff]
      %v2425 = vld [vmem:[%s2377 + $0x178] sm:$0xff]
      %v2426 = vld [vmem:[%s2377 + $0x180] sm:$0xff]
      %v2427 = vld [vmem:[%s2377 + $0x188] sm:$0xff]
      %v2428 = vld [vmem:[%s2377 + $0x190] sm:$0xff]
      %v2429 = vld [vmem:[%s2377 + $0x198] sm:$0xff]
      %v2430 = vld [vmem:[%s2377 + $0x1a0] sm:$0xff]
      %v2431 = vld [vmem:[%s2377 + $0x1a8] sm:$0xff]
      %v2432 = vld [vmem:[%s2377 + $0x1b0] sm:$0xff]
      %v2433 = vld [vmem:[%s2377 + $0x1b8] sm:$0xff]
      %v2490 = vunpack.c.l.b16 %v2378
      %v2491 = vunpack.c.h.b16 %v2378
      %v2492 = vunpack.c.l.b16 %v2379
      %v2493 = vunpack.c.h.b16 %v2379
      %v2494 = vunpack.c.l.b16 %v2380
      %v2495 = vunpack.c.h.b16 %v2380
      %v2496 = vunpack.c.l.b16 %v2381
      %v2497 = vunpack.c.h.b16 %v2381
      %v2498 = vunpack.c.l.b16 %v2382
      %v2499 = vunpack.c.h.b16 %v2382
      %v2500 = vunpack.c.l.b16 %v2383
      %v2501 = vunpack.c.h.b16 %v2383
      %v2502 = vunpack.c.l.b16 %v2384
      %v2503 = vunpack.c.h.b16 %v2384
      %v2504 = vunpack.c.l.b16 %v2385
      %v2505 = vunpack.c.h.b16 %v2385
      %v2506 = vunpack.c.l.b16 %v2386
      %v2507 = vunpack.c.h.b16 %v2386
      %v2508 = vunpack.c.l.b16 %v2387
      %v2509 = vunpack.c.h.b16 %v2387
      %v2510 = vunpack.c.l.b16 %v2388
      %v2511 = vunpack.c.h.b16 %v2388
      %v2512 = vunpack.c.l.b16 %v2389
      %v2513 = vunpack.c.h.b16 %v2389
      %v2514 = vunpack.c.l.b16 %v2390
      %v2515 = vunpack.c.h.b16 %v2390
      %v2516 = vunpack.c.l.b16 %v2391
      %v2517 = vunpack.c.h.b16 %v2391
      %v2518 = vunpack.c.l.b16 %v2392
      %v2519 = vunpack.c.h.b16 %v2392
      %v2520 = vunpack.c.l.b16 %v2393
      %v2521 = vunpack.c.h.b16 %v2393
      %v2522 = vunpack.c.l.b16 %v2394
      %v2523 = vunpack.c.h.b16 %v2394
      %v2524 = vunpack.c.l.b16 %v2395
      %v2525 = vunpack.c.h.b16 %v2395
      %v2526 = vunpack.c.l.b16 %v2396
      %v2527 = vunpack.c.h.b16 %v2396
      %v2528 = vunpack.c.l.b16 %v2397
      %v2529 = vunpack.c.h.b16 %v2397
      %v2530 = vunpack.c.l.b16 %v2398
      %v2531 = vunpack.c.h.b16 %v2398
      %v2532 = vunpack.c.l.b16 %v2399
      %v2533 = vunpack.c.h.b16 %v2399
      %v2534 = vunpack.c.l.b16 %v2400
      %v2535 = vunpack.c.h.b16 %v2400
      %v2536 = vunpack.c.l.b16 %v2401
      %v2537 = vunpack.c.h.b16 %v2401
      %v2538 = vunpack.c.l.b16 %v2402
      %v2539 = vunpack.c.h.b16 %v2402
      %v2540 = vunpack.c.l.b16 %v2403
      %v2541 = vunpack.c.h.b16 %v2403
      %v2542 = vunpack.c.l.b16 %v2404
      %v2543 = vunpack.c.h.b16 %v2404
      %v2544 = vunpack.c.l.b16 %v2405
      %v2545 = vunpack.c.h.b16 %v2405
      %v2546 = vunpack.c.l.b16 %v2406
      %v2547 = vunpack.c.h.b16 %v2406
      %v2548 = vunpack.c.l.b16 %v2407
      %v2549 = vunpack.c.h.b16 %v2407
      %v2550 = vunpack.c.l.b16 %v2408
      %v2551 = vunpack.c.h.b16 %v2408
      %v2552 = vunpack.c.l.b16 %v2409
      %v2553 = vunpack.c.h.b16 %v2409
      %v2554 = vunpack.c.l.b16 %v2410
      %v2555 = vunpack.c.h.b16 %v2410
      %v2556 = vunpack.c.l.b16 %v2411
      %v2557 = vunpack.c.h.b16 %v2411
      %v2558 = vunpack.c.l.b16 %v2412
      %v2559 = vunpack.c.h.b16 %v2412
      %v2560 = vunpack.c.l.b16 %v2413
      %v2561 = vunpack.c.h.b16 %v2413
      %v2562 = vunpack.c.l.b16 %v2414
      %v2563 = vunpack.c.h.b16 %v2414
      %v2564 = vunpack.c.l.b16 %v2415
      %v2565 = vunpack.c.h.b16 %v2415
      %v2566 = vunpack.c.l.b16 %v2416
      %v2567 = vunpack.c.h.b16 %v2416
      %v2568 = vunpack.c.l.b16 %v2417
      %v2569 = vunpack.c.h.b16 %v2417
      %v2570 = vunpack.c.l.b16 %v2418
      %v2571 = vunpack.c.h.b16 %v2418
      %v2572 = vunpack.c.l.b16 %v2419
      %v2573 = vunpack.c.h.b16 %v2419
      %v2574 = vunpack.c.l.b16 %v2420
      %v2575 = vunpack.c.h.b16 %v2420
      %v2576 = vunpack.c.l.b16 %v2421
      %v2577 = vunpack.c.h.b16 %v2421
      %v2578 = vunpack.c.l.b16 %v2422
      %v2579 = vunpack.c.h.b16 %v2422
      %v2580 = vunpack.c.l.b16 %v2423
      %v2581 = vunpack.c.h.b16 %v2423
      %v2582 = vunpack.c.l.b16 %v2424
      %v2583 = vunpack.c.h.b16 %v2424
      %v2584 = vunpack.c.l.b16 %v2425
      %v2585 = vunpack.c.h.b16 %v2425
      %v2586 = vunpack.c.l.b16 %v2426
      %v2587 = vunpack.c.h.b16 %v2426
      %v2588 = vunpack.c.l.b16 %v2427
      %v2589 = vunpack.c.h.b16 %v2427
      %v2590 = vunpack.c.l.b16 %v2428
      %v2591 = vunpack.c.h.b16 %v2428
      %v2592 = vunpack.c.l.b16 %v2429
      %v2593 = vunpack.c.h.b16 %v2429
      %v2594 = vunpack.c.l.b16 %v2430
      %v2595 = vunpack.c.h.b16 %v2430
      %v2596 = vunpack.c.l.b16 %v2431
      %v2597 = vunpack.c.h.b16 %v2431
      %v2598 = vunpack.c.l.b16 %v2432
      %v2599 = vunpack.c.h.b16 %v2432
      %v2600 = vunpack.c.l.b16 %v2433
      %v2601 = vunpack.c.h.b16 %v2433
      %v2602 = vpack.c.b16 %v2492, %v2490
      %v2603 = vpack.c.b16 %v2493, %v2491
      %v2604 = vpack.c.b16 %v2496, %v2494
      %v2605 = vpack.c.b16 %v2497, %v2495
      %v2606 = vpack.c.b16 %v2500, %v2498
      %v2607 = vpack.c.b16 %v2501, %v2499
      %v2608 = vpack.c.b16 %v2504, %v2502
      %v2609 = vpack.c.b16 %v2505, %v2503
      %v2610 = vpack.c.b16 %v2508, %v2506
      %v2611 = vpack.c.b16 %v2509, %v2507
      %v2612 = vpack.c.b16 %v2512, %v2510
      %v2613 = vpack.c.b16 %v2513, %v2511
      %v2614 = vpack.c.b16 %v2516, %v2514
      %v2615 = vpack.c.b16 %v2517, %v2515
      %v2616 = vpack.c.b16 %v2520, %v2518
      %v2617 = vpack.c.b16 %v2521, %v2519
      %v2618 = vpack.c.b16 %v2524, %v2522
      %v2619 = vpack.c.b16 %v2525, %v2523
      %v2620 = vpack.c.b16 %v2528, %v2526
      %v2621 = vpack.c.b16 %v2529, %v2527
      %v2622 = vpack.c.b16 %v2532, %v2530
      %v2623 = vpack.c.b16 %v2533, %v2531
      %v2624 = vpack.c.b16 %v2536, %v2534
      %v2625 = vpack.c.b16 %v2537, %v2535
      %v2626 = vpack.c.b16 %v2540, %v2538
      %v2627 = vpack.c.b16 %v2541, %v2539
      %v2628 = vpack.c.b16 %v2544, %v2542
      %v2629 = vpack.c.b16 %v2545, %v2543
      %v2630 = vpack.c.b16 %v2548, %v2546
      %v2631 = vpack.c.b16 %v2549, %v2547
      %v2632 = vpack.c.b16 %v2552, %v2550
      %v2633 = vpack.c.b16 %v2553, %v2551
      %v2634 = vpack.c.b16 %v2556, %v2554
      %v2635 = vpack.c.b16 %v2557, %v2555
      %v2636 = vpack.c.b16 %v2560, %v2558
      %v2637 = vpack.c.b16 %v2561, %v2559
      %v2638 = vpack.c.b16 %v2564, %v2562
      %v2639 = vpack.c.b16 %v2565, %v2563
      %v2640 = vpack.c.b16 %v2568, %v2566
      %v2641 = vpack.c.b16 %v2569, %v2567
      %v2642 = vpack.c.b16 %v2572, %v2570
      %v2643 = vpack.c.b16 %v2573, %v2571
      %v2644 = vpack.c.b16 %v2576, %v2574
      %v2645 = vpack.c.b16 %v2577, %v2575
      %v2646 = vpack.c.b16 %v2580, %v2578
      %v2647 = vpack.c.b16 %v2581, %v2579
      %v2648 = vpack.c.b16 %v2584, %v2582
      %v2649 = vpack.c.b16 %v2585, %v2583
      %v2650 = vpack.c.b16 %v2588, %v2586
      %v2651 = vpack.c.b16 %v2589, %v2587
      %v2652 = vpack.c.b16 %v2592, %v2590
      %v2653 = vpack.c.b16 %v2593, %v2591
      %v2654 = vpack.c.b16 %v2596, %v2594
      %v2655 = vpack.c.b16 %v2597, %v2595
      %v2656 = vpack.c.b16 %v2600, %v2598
      %v2657 = vpack.c.b16 %v2601, %v2599
      %2714 = vmatpush.bf16.msra.mxu0 %v2616
      %2715 = vmatpush.bf16.msra.mxu0 %v2614
      %2716 = vmatpush.bf16.msra.mxu0 %v2612
      %2717 = vmatpush.bf16.msra.mxu0 %v2610
      %2718 = vmatpush.bf16.msra.mxu0 %v2608
      %2719 = vmatpush.bf16.msra.mxu0 %v2606
      %2720 = vmatpush.bf16.msra.mxu0 %v2604
      %2721 = vmatpush.bf16.msra.mxu0 %v2602
      %2722 = vmatmul.bf16.gmra.mxu0 %v1929
      %v2723 = vpop.f32.mrf.mxu0
      %v2724 = vadd.f32 0.0, %v2723
      %v2725 = vpop.f32.mrf.mxu0
      %2726 = vdwg.mxu0
      %2727 = vmatpush.bf16.msra.mxu0 %v2632
      %2728 = vmatpush.bf16.msra.mxu0 %v2630
      %2729 = vmatpush.bf16.msra.mxu0 %v2628
      %2730 = vmatpush.bf16.msra.mxu0 %v2626
      %2731 = vmatpush.bf16.msra.mxu0 %v2624
      %2732 = vmatpush.bf16.msra.mxu0 %v2622
      %2733 = vmatpush.bf16.msra.mxu0 %v2620
      %2734 = vmatpush.bf16.msra.mxu0 %v2618
      %2735 = vmatmul.bf16.gmra.mxu0 %v1930
      %v2736 = vpop.f32.mrf.mxu0
      %v2737 = vadd.f32 %v2724, %v2736
      %v2738 = vpop.f32.mrf.mxu0
      %2739 = vdwg.mxu0
      %2740 = vmatpush.bf16.msra.mxu0 %v2648
      %2741 = vmatpush.bf16.msra.mxu0 %v2646
      %2742 = vmatpush.bf16.msra.mxu0 %v2644
      %2743 = vmatpush.bf16.msra.mxu0 %v2642
      %2744 = vmatpush.bf16.msra.mxu0 %v2640
      %2745 = vmatpush.bf16.msra.mxu0 %v2638
      %2746 = vmatpush.bf16.msra.mxu0 %v2636
      %2747 = vmatpush.bf16.msra.mxu0 %v2634
      %2748 = vmatmul.bf16.gmra.mxu0 %v1931
      %v2749 = vpop.f32.mrf.mxu0
      %v2750 = vadd.f32 %v2737, %v2749
      %v2751 = vpop.f32.mrf.mxu0
      %2752 = vdwg.mxu0
      %2753 = vmatpush.bf16.msra.mxu0 0
      %2754 = vmatpush.bf16.msra.mxu0 0
      %2755 = vmatpush.bf16.msra.mxu0 0
      %2756 = vmatpush.bf16.msra.mxu0 0
      %2757 = vmatpush.bf16.msra.mxu0 %v2656
      %2758 = vmatpush.bf16.msra.mxu0 %v2654
      %2759 = vmatpush.bf16.msra.mxu0 %v2652
      %2760 = vmatpush.bf16.msra.mxu0 %v2650
      %2761 = vmatmul.bf16.gmra.mxu0 %v2271
      %v2762 = vpop.f32.mrf.mxu0
      %v2763 = vadd.f32 %v2750, %v2762
      %v2764 = vpop.f32.mrf.mxu0
      %2765 = vdwg.mxu0
      %2766 = vmatpush.bf16.msra.mxu0 %v2617
      %2767 = vmatpush.bf16.msra.mxu0 %v2615
      %2768 = vmatpush.bf16.msra.mxu0 %v2613
      %2769 = vmatpush.bf16.msra.mxu0 %v2611
      %2770 = vmatpush.bf16.msra.mxu0 %v2609
      %2771 = vmatpush.bf16.msra.mxu0 %v2607
      %2772 = vmatpush.bf16.msra.mxu0 %v2605
      %2773 = vmatpush.bf16.msra.mxu0 %v2603
      %2774 = vmatmul.bf16.gmra.mxu0 %v1929
      %v2775 = vpop.f32.mrf.mxu0
      %v2776 = vadd.f32 0.0, %v2775
      %v2777 = vpop.f32.mrf.mxu0
      %2778 = vdwg.mxu0
      %2779 = vmatpush.bf16.msra.mxu0 %v2633
      %2780 = vmatpush.bf16.msra.mxu0 %v2631
      %2781 = vmatpush.bf16.msra.mxu0 %v2629
      %2782 = vmatpush.bf16.msra.mxu0 %v2627
      %2783 = vmatpush.bf16.msra.mxu0 %v2625
      %2784 = vmatpush.bf16.msra.mxu0 %v2623
      %2785 = vmatpush.bf16.msra.mxu0 %v2621
      %2786 = vmatpush.bf16.msra.mxu0 %v2619
      %2787 = vmatmul.bf16.gmra.mxu0 %v1930
      %v2788 = vpop.f32.mrf.mxu0
      %v2789 = vadd.f32 %v2776, %v2788
      %v2790 = vpop.f32.mrf.mxu0
      %2791 = vdwg.mxu0
      %2792 = vmatpush.bf16.msra.mxu0 %v2649
      %2793 = vmatpush.bf16.msra.mxu0 %v2647
      %2794 = vmatpush.bf16.msra.mxu0 %v2645
      %2795 = vmatpush.bf16.msra.mxu0 %v2643
      %2796 = vmatpush.bf16.msra.mxu0 %v2641
      %2797 = vmatpush.bf16.msra.mxu0 %v2639
      %2798 = vmatpush.bf16.msra.mxu0 %v2637
      %2799 = vmatpush.bf16.msra.mxu0 %v2635
      %2800 = vmatmul.bf16.gmra.mxu0 %v1931
      %v2801 = vpop.f32.mrf.mxu0
      %v2802 = vadd.f32 %v2789, %v2801
      %v2803 = vpop.f32.mrf.mxu0
      %2804 = vdwg.mxu0
      %2805 = vmatpush.bf16.msra.mxu0 0
      %2806 = vmatpush.bf16.msra.mxu0 0
      %2807 = vmatpush.bf16.msra.mxu0 0
      %2808 = vmatpush.bf16.msra.mxu0 0
      %2809 = vmatpush.bf16.msra.mxu0 %v2657
      %2810 = vmatpush.bf16.msra.mxu0 %v2655
      %2811 = vmatpush.bf16.msra.mxu0 %v2653
      %2812 = vmatpush.bf16.msra.mxu0 %v2651
      %2813 = vmatmul.bf16.gmra.mxu0 %v2271
      %v2814 = vpop.f32.mrf.mxu0
      %v2815 = vadd.f32 %v2802, %v2814
      %v2816 = vpop.f32.mrf.mxu0
      %2817 = vdwg.mxu0
      %v2818 = vmax.f32 %v2322, %v2763
      %v2819 = vmax.f32 %v2374, %v2815
      %v2820 = vpack.c.bf16 %v2819, %v2818
      %vm2821 = vcmask 1043456
      %vm2822 = vsmask.f32 3328
      %vm2823 = vmand %vm2821, %vm2822
      %vm2824 = vcmask 785412
      %vm2825 = vsmask.f32 7424
      %vm2826 = vmand %vm2824, %vm2825
      %vm2827 = vmor %vm2826, %vm2823
      %v2828 = vld [vmem:[%s224] sm:$0xff]
      %v2829 = vsel %vm2827, %v2820, %v2828
      %2830 = vst [vmem:[%s224] sm:$0xff] %v2829
      %p2831 = scmp.lt.s32.totalorder %s16, 1
      %s2832 = scalar_select %p2831, %s16, 1
      %s2833 = smul.addr %s2832, 2
      %s2834 = smul.addr %s2833, 4
      %s2835 = scalar_lea.vmem %s5, %s2834
      // Predicated region
      $region41: #{mycnn_forward.4} parent=39 // pred_check
        %p2836 = pneg %p144
      $region42: #{mycnn_forward.4} parent=39 // pred_check_branch
        %2838 = sbr.rel (%p2836) target = $region44
      $region43: #{mycnn_forward.4} parent=39 // pred_region
        _
      $region44: #{mycnn_forward.4} parent=39 // pred_fallthru
        _
    $region40: #{mycnn_forward.4} parent=5 // pred_fallthru
      _
    %p2839 = scmp.le.s32.totalorder 2, %s11
    // Predicated region
    $region45: #{mycnn_forward.4} parent=5 // pred_check
      %p2840 = pneg %p2839
    $region46: #{mycnn_forward.4} parent=5 // pred_check_branch
      %2842 = sbr.rel (%p2840) target = $region48
    $region47: #{mycnn_forward.4} parent=5 // pred_region
      %s2843 = ssub.s32 %s11, 2
      // Predicated region
      $region49: #{mycnn_forward.4} parent=47 // pred_check
        %p2844 = pneg %p150
      $region50: #{mycnn_forward.4} parent=47 // pred_check_branch
        %2846 = sbr.rel (%p2844) target = $region52
      $region51: #{mycnn_forward.4} parent=47 // pred_region
        %p2847 = scmp.lt.s32.totalorder %s17, 1
        %s2848 = scalar_select %p2847, %s17, 1
        %s2849 = smul.addr %s2848, 2
        %s2850 = smul.addr %s2849, 4
        %s2851 = scalar_lea.vmem %s5, %s2850
      $region52: #{mycnn_forward.4} parent=47 // pred_fallthru
        _
    $region48: #{mycnn_forward.4} parent=5 // pred_fallthru
      _
  $region6: #{mycnn_forward.4} parent=0 // loop_footer
    %s15 = sadd.s32 1, %s11
  $region7: #{mycnn_forward.4} parent=0 // loop_footer_branch
    %10 = sbr.rel target = $region3
  $region8: #{mycnn_forward.4} parent=0 // loop_exit
    _

// kernel: mycnn_forward.5
$region0: #{mycnn_forward.5}
  #allocation0 [shape = 'u32[]', space=smem, size = 0x4, offset = 0x4, fixed_abs, tag = 'smem constant byte address 0x4 - core index']
  #allocation1 [shape = 'u32[72,128]{1,0:T(1,128)}', space=vmem, size = 0x9000, scoped, tag = 'internal scratch']
  %s0 = inlined_call_operand.vmem [shape: bf16[2,1568], index: 0, kind: input, shape index: {}]
  %s1 = inlined_call_operand.vmem [shape: bf16[1568,64], index: 1, kind: input, shape index: {}]
  %s2 = inlined_call_operand.vmem [shape: f32[1,64], index: 2, kind: input, shape index: {}]
  %s3 = inlined_call_operand.vmem [shape: bf16[64,3], index: 3, kind: input, shape index: {}]
  %s4 = inlined_call_operand.vmem [shape: f32[1,3], index: 4, kind: input, shape index: {}]
  %s5 = inlined_call_operand.hbm [shape: f32[2,3], index: 5, kind: output, shape index: {}]
  %s6 = sld [smem:[#allocation0]]
  $region30: #{mycnn_forward.5} parent=0
    _
  %s8 = ssub.s32 1, %s6
  %s9 = scalar_select 0, %s8, %s6
  $region1: #{mycnn_forward.5} parent=0
    #allocation2 [shape = 'u8[1024]{0}', space=vmem, size = 0x400, scoped, tag = 'output window, operand 0, single buffered']
    #allocation3 [shape = 's32[1]{0}', space=sflag, size = 0x4, scoped, tag = 'scoped memory for mycnn_forward.5']
    %10 = vsyncpa [#allocation3], 0
    // Predicated region
    $region2: #{mycnn_forward.5} parent=1 // pred_check
      _
    $region3: #{mycnn_forward.5} parent=1 // pred_check_branch
      %12 = sbr.rel (0) target = $region5
    $region4: #{mycnn_forward.5} parent=1 // pred_region
      _
    $region5: #{mycnn_forward.5} parent=1 // pred_fallthru
      _
    // Predicated region
    $region6: #{mycnn_forward.5} parent=1 // pred_check
      _
    $region7: #{mycnn_forward.5} parent=1 // pred_check_branch
      %14 = sbr.rel (0) target = $region9
    $region8: #{mycnn_forward.5} parent=1 // pred_region
      _
    $region9: #{mycnn_forward.5} parent=1 // pred_fallthru
      _
    // Predicated region
    $region10: #{mycnn_forward.5} parent=1 // pred_check
      _
    $region11: #{mycnn_forward.5} parent=1 // pred_check_branch
      %16 = sbr.rel (0) target = $region13
    $region12: #{mycnn_forward.5} parent=1 // pred_region
      _
    $region13: #{mycnn_forward.5} parent=1 // pred_fallthru
      _
    // Predicated region
    $region14: #{mycnn_forward.5} parent=1 // pred_check
      _
    $region15: #{mycnn_forward.5} parent=1 // pred_check_branch
      %18 = sbr.rel (0) target = $region17
    $region16: #{mycnn_forward.5} parent=1 // pred_region
      _
    $region17: #{mycnn_forward.5} parent=1 // pred_fallthru
      _
    // Predicated region
    $region18: #{mycnn_forward.5} parent=1 // pred_check
      _
    $region19: #{mycnn_forward.5} parent=1 // pred_check_branch
      %20 = sbr.rel (0) target = $region21
    $region20: #{mycnn_forward.5} parent=1 // pred_region
      _
    $region21: #{mycnn_forward.5} parent=1 // pred_fallthru
      _
    %v22 = vld [vmem:[%s0] sm:$0xff]
    %v23 = vld [vmem:[%s0 + $0x8] sm:$0x1f]
    %v24 = vld [vmem:[%s1] sm:$0xf]
    %v25 = vld [vmem:[%s1 + $0x4] sm:$0xf]
    %v26 = vld [vmem:[%s1 + $0x8] sm:$0xf]
    %v27 = vld [vmem:[%s1 + $0xc] sm:$0xf]
    %v28 = vld [vmem:[%s1 + $0x10] sm:$0xf]
    %v29 = vld [vmem:[%s1 + $0x14] sm:$0xf]
    %v30 = vld [vmem:[%s1 + $0x18] sm:$0xf]
    %v31 = vld [vmem:[%s1 + $0x1c] sm:$0xf]
    %v32 = vld [vmem:[%s1 + $0x20] sm:$0xf]
    %v33 = vld [vmem:[%s1 + $0x24] sm:$0xf]
    %v34 = vld [vmem:[%s1 + $0x28] sm:$0xf]
    %v35 = vld [vmem:[%s1 + $0x2c] sm:$0xf]
    %v36 = vld [vmem:[%s1 + $0x30] sm:$0xf]
    %v37 = vld [vmem:[%s1 + $0x34] sm:$0xf]
    %v38 = vld [vmem:[%s1 + $0x38] sm:$0xf]
    %v39 = vld [vmem:[%s1 + $0x3c] sm:$0xf]
    %v40 = vld [vmem:[%s1 + $0x40] sm:$0xf]
    %v41 = vld [vmem:[%s1 + $0x44] sm:$0xf]
    %v42 = vld [vmem:[%s1 + $0x48] sm:$0xf]
    %v43 = vld [vmem:[%s1 + $0x4c] sm:$0xf]
    %v44 = vld [vmem:[%s1 + $0x50] sm:$0xf]
    %v45 = vld [vmem:[%s1 + $0x54] sm:$0xf]
    %v46 = vld [vmem:[%s1 + $0x58] sm:$0xf]
    %v47 = vld [vmem:[%s1 + $0x5c] sm:$0xf]
    %v48 = vld [vmem:[%s1 + $0x60] sm:$0xf]
    %v49 = vld [vmem:[%s1 + $0x64] sm:$0xf]
    %v50 = vld [vmem:[%s1 + $0x68] sm:$0xf]
    %v51 = vld [vmem:[%s1 + $0x6c] sm:$0xf]
    %v52 = vld [vmem:[%s1 + $0x70] sm:$0xf]
    %v53 = vld [vmem:[%s1 + $0x74] sm:$0xf]
    %v54 = vld [vmem:[%s1 + $0x78] sm:$0xf]
    %v55 = vld [vmem:[%s1 + $0x7c] sm:$0xf]
    %v56 = vld [vmem:[%s1 + $0x80] sm:$0xf]
    %v57 = vld [vmem:[%s1 + $0x84] sm:$0xf]
    %v58 = vld [vmem:[%s1 + $0x88] sm:$0xf]
    %v59 = vld [vmem:[%s1 + $0x8c] sm:$0xf]
    %v60 = vld [vmem:[%s1 + $0x90] sm:$0xf]
    %v61 = vld [vmem:[%s1 + $0x94] sm:$0xf]
    %v62 = vld [vmem:[%s1 + $0x98] sm:$0xf]
    %v63 = vld [vmem:[%s1 + $0x9c] sm:$0xf]
    %v64 = vld [vmem:[%s1 + $0xa0] sm:$0xf]
    %v65 = vld [vmem:[%s1 + $0xa4] sm:$0xf]
    %v66 = vld [vmem:[%s1 + $0xa8] sm:$0xf]
    %v67 = vld [vmem:[%s1 + $0xac] sm:$0xf]
    %v68 = vld [vmem:[%s1 + $0xb0] sm:$0xf]
    %v69 = vld [vmem:[%s1 + $0xb4] sm:$0xf]
    %v70 = vld [vmem:[%s1 + $0xb8] sm:$0xf]
    %v71 = vld [vmem:[%s1 + $0xbc] sm:$0xf]
    %v72 = vld [vmem:[%s1 + $0xc0] sm:$0xf]
    %v73 = vld [vmem:[%s1 + $0xc4] sm:$0xf]
    %v74 = vld [vmem:[%s1 + $0xc8] sm:$0xf]
    %v75 = vld [vmem:[%s1 + $0xcc] sm:$0xf]
    %v76 = vld [vmem:[%s1 + $0xd0] sm:$0xf]
    %v77 = vld [vmem:[%s1 + $0xd4] sm:$0xf]
    %v78 = vld [vmem:[%s1 + $0xd8] sm:$0xf]
    %v79 = vld [vmem:[%s1 + $0xdc] sm:$0xf]
    %v80 = vld [vmem:[%s1 + $0xe0] sm:$0xf]
    %v81 = vld [vmem:[%s1 + $0xe4] sm:$0xf]
    %v82 = vld [vmem:[%s1 + $0xe8] sm:$0xf]
    %v83 = vld [vmem:[%s1 + $0xec] sm:$0xf]
    %v84 = vld [vmem:[%s1 + $0xf0] sm:$0xf]
    %v85 = vld [vmem:[%s1 + $0xf4] sm:$0xf]
    %v86 = vld [vmem:[%s1 + $0xf8] sm:$0xf]
    %v87 = vld [vmem:[%s1 + $0xfc] sm:$0xf]
    %v88 = vld [vmem:[%s1 + $0x100] sm:$0xf]
    %v89 = vld [vmem:[%s1 + $0x104] sm:$0xf]
    %v90 = vld [vmem:[%s1 + $0x108] sm:$0xf]
    %v91 = vld [vmem:[%s1 + $0x10c] sm:$0xf]
    %v92 = vld [vmem:[%s1 + $0x110] sm:$0xf]
    %v93 = vld [vmem:[%s1 + $0x114] sm:$0xf]
    %v94 = vld [vmem:[%s1 + $0x118] sm:$0xf]
    %v95 = vld [vmem:[%s1 + $0x11c] sm:$0xf]
    %v96 = vld [vmem:[%s1 + $0x120] sm:$0xf]
    %v97 = vld [vmem:[%s1 + $0x124] sm:$0xf]
    %v98 = vld [vmem:[%s1 + $0x128] sm:$0xf]
    %v99 = vld [vmem:[%s1 + $0x12c] sm:$0xf]
    %v100 = vld [vmem:[%s1 + $0x130] sm:$0xf]
    %v101 = vld [vmem:[%s1 + $0x134] sm:$0xf]
    %v102 = vld [vmem:[%s1 + $0x138] sm:$0xf]
    %v103 = vld [vmem:[%s1 + $0x13c] sm:$0xf]
    %v104 = vld [vmem:[%s1 + $0x140] sm:$0xf]
    %v105 = vld [vmem:[%s1 + $0x144] sm:$0xf]
    %v106 = vld [vmem:[%s1 + $0x148] sm:$0xf]
    %v107 = vld [vmem:[%s1 + $0x14c] sm:$0xf]
    %v108 = vld [vmem:[%s1 + $0x150] sm:$0xf]
    %v109 = vld [vmem:[%s1 + $0x154] sm:$0xf]
    %v110 = vld [vmem:[%s1 + $0x158] sm:$0xf]
    %v111 = vld [vmem:[%s1 + $0x15c] sm:$0xf]
    %v112 = vld [vmem:[%s1 + $0x160] sm:$0xf]
    %v113 = vld [vmem:[%s1 + $0x164] sm:$0xf]
    %v114 = vld [vmem:[%s1 + $0x168] sm:$0xf]
    %v115 = vld [vmem:[%s1 + $0x16c] sm:$0xf]
    %v116 = vld [vmem:[%s1 + $0x170] sm:$0xf]
    %v117 = vld [vmem:[%s1 + $0x174] sm:$0xf]
    %v118 = vld [vmem:[%s1 + $0x178] sm:$0xf]
    %v119 = vld [vmem:[%s1 + $0x17c] sm:$0xf]
    %v120 = vld [vmem:[%s1 + $0x180] sm:$0xf]
    %v121 = vld [vmem:[%s1 + $0x184] sm:$0xf]
    %v122 = vld [vmem:[%s1 + $0x188] sm:$0xf]
    %v123 = vld [vmem:[%s1 + $0x18c] sm:$0xf]
    %v124 = vld [vmem:[%s1 + $0x190] sm:$0xf]
    %v125 = vld [vmem:[%s1 + $0x194] sm:$0xf]
    %v126 = vld [vmem:[%s1 + $0x198] sm:$0xf]
    %v127 = vld [vmem:[%s1 + $0x19c] sm:$0xf]
    %v128 = vld [vmem:[%s1 + $0x1a0] sm:$0xf]
    %v129 = vld [vmem:[%s1 + $0x1a4] sm:$0xf]
    %v130 = vld [vmem:[%s1 + $0x1a8] sm:$0xf]
    %v131 = vld [vmem:[%s1 + $0x1ac] sm:$0xf]
    %v132 = vld [vmem:[%s1 + $0x1b0] sm:$0xf]
    %v133 = vld [vmem:[%s1 + $0x1b4] sm:$0xf]
    %v134 = vld [vmem:[%s1 + $0x1b8] sm:$0xf]
    %v135 = vld [vmem:[%s1 + $0x1bc] sm:$0xf]
    %v136 = vld [vmem:[%s1 + $0x1c0] sm:$0xf]
    %v137 = vld [vmem:[%s1 + $0x1c4] sm:$0xf]
    %v138 = vld [vmem:[%s1 + $0x1c8] sm:$0xf]
    %v139 = vld [vmem:[%s1 + $0x1cc] sm:$0xf]
    %v140 = vld [vmem:[%s1 + $0x1d0] sm:$0xf]
    %v141 = vld [vmem:[%s1 + $0x1d4] sm:$0xf]
    %v142 = vld [vmem:[%s1 + $0x1d8] sm:$0xf]
    %v143 = vld [vmem:[%s1 + $0x1dc] sm:$0xf]
    %v144 = vld [vmem:[%s1 + $0x1e0] sm:$0xf]
    %v145 = vld [vmem:[%s1 + $0x1e4] sm:$0xf]
    %v146 = vld [vmem:[%s1 + $0x1e8] sm:$0xf]
    %v147 = vld [vmem:[%s1 + $0x1ec] sm:$0xf]
    %v148 = vld [vmem:[%s1 + $0x1f0] sm:$0xf]
    %v149 = vld [vmem:[%s1 + $0x1f4] sm:$0xf]
    %v150 = vld [vmem:[%s1 + $0x1f8] sm:$0xf]
    %v151 = vld [vmem:[%s1 + $0x1fc] sm:$0xf]
    %v152 = vld [vmem:[%s1 + $0x200] sm:$0xf]
    %v153 = vld [vmem:[%s1 + $0x204] sm:$0xf]
    %v154 = vld [vmem:[%s1 + $0x208] sm:$0xf]
    %v155 = vld [vmem:[%s1 + $0x20c] sm:$0xf]
    %v156 = vld [vmem:[%s1 + $0x210] sm:$0xf]
    %v157 = vld [vmem:[%s1 + $0x214] sm:$0xf]
    %v158 = vld [vmem:[%s1 + $0x218] sm:$0xf]
    %v159 = vld [vmem:[%s1 + $0x21c] sm:$0xf]
    %v160 = vld [vmem:[%s1 + $0x220] sm:$0xf]
    %v161 = vld [vmem:[%s1 + $0x224] sm:$0xf]
    %v162 = vld [vmem:[%s1 + $0x228] sm:$0xf]
    %v163 = vld [vmem:[%s1 + $0x22c] sm:$0xf]
    %v164 = vld [vmem:[%s1 + $0x230] sm:$0xf]
    %v165 = vld [vmem:[%s1 + $0x234] sm:$0xf]
    %v166 = vld [vmem:[%s1 + $0x238] sm:$0xf]
    %v167 = vld [vmem:[%s1 + $0x23c] sm:$0xf]
    %v168 = vld [vmem:[%s1 + $0x240] sm:$0xf]
    %v169 = vld [vmem:[%s1 + $0x244] sm:$0xf]
    %v170 = vld [vmem:[%s1 + $0x248] sm:$0xf]
    %v171 = vld [vmem:[%s1 + $0x24c] sm:$0xf]
    %v172 = vld [vmem:[%s1 + $0x250] sm:$0xf]
    %v173 = vld [vmem:[%s1 + $0x254] sm:$0xf]
    %v174 = vld [vmem:[%s1 + $0x258] sm:$0xf]
    %v175 = vld [vmem:[%s1 + $0x25c] sm:$0xf]
    %v176 = vld [vmem:[%s1 + $0x260] sm:$0xf]
    %v177 = vld [vmem:[%s1 + $0x264] sm:$0xf]
    %v178 = vld [vmem:[%s1 + $0x268] sm:$0xf]
    %v179 = vld [vmem:[%s1 + $0x26c] sm:$0xf]
    %v180 = vld [vmem:[%s1 + $0x270] sm:$0xf]
    %v181 = vld [vmem:[%s1 + $0x274] sm:$0xf]
    %v182 = vld [vmem:[%s1 + $0x278] sm:$0xf]
    %v183 = vld [vmem:[%s1 + $0x27c] sm:$0xf]
    %v184 = vld [vmem:[%s1 + $0x280] sm:$0xf]
    %v185 = vld [vmem:[%s1 + $0x284] sm:$0xf]
    %v186 = vld [vmem:[%s1 + $0x288] sm:$0xf]
    %v187 = vld [vmem:[%s1 + $0x28c] sm:$0xf]
    %v188 = vld [vmem:[%s1 + $0x290] sm:$0xf]
    %v189 = vld [vmem:[%s1 + $0x294] sm:$0xf]
    %v190 = vld [vmem:[%s1 + $0x298] sm:$0xf]
    %v191 = vld [vmem:[%s1 + $0x29c] sm:$0xf]
    %v192 = vld [vmem:[%s1 + $0x2a0] sm:$0xf]
    %v193 = vld [vmem:[%s1 + $0x2a4] sm:$0xf]
    %v194 = vld [vmem:[%s1 + $0x2a8] sm:$0xf]
    %v195 = vld [vmem:[%s1 + $0x2ac] sm:$0xf]
    %v196 = vld [vmem:[%s1 + $0x2b0] sm:$0xf]
    %v197 = vld [vmem:[%s1 + $0x2b4] sm:$0xf]
    %v198 = vld [vmem:[%s1 + $0x2b8] sm:$0xf]
    %v199 = vld [vmem:[%s1 + $0x2bc] sm:$0xf]
    %v200 = vld [vmem:[%s1 + $0x2c0] sm:$0xf]
    %v201 = vld [vmem:[%s1 + $0x2c4] sm:$0xf]
    %v202 = vld [vmem:[%s1 + $0x2c8] sm:$0xf]
    %v203 = vld [vmem:[%s1 + $0x2cc] sm:$0xf]
    %v204 = vld [vmem:[%s1 + $0x2d0] sm:$0xf]
    %v205 = vld [vmem:[%s1 + $0x2d4] sm:$0xf]
    %v206 = vld [vmem:[%s1 + $0x2d8] sm:$0xf]
    %v207 = vld [vmem:[%s1 + $0x2dc] sm:$0xf]
    %v208 = vld [vmem:[%s1 + $0x2e0] sm:$0xf]
    %v209 = vld [vmem:[%s1 + $0x2e4] sm:$0xf]
    %v210 = vld [vmem:[%s1 + $0x2e8] sm:$0xf]
    %v211 = vld [vmem:[%s1 + $0x2ec] sm:$0xf]
    %v212 = vld [vmem:[%s1 + $0x2f0] sm:$0xf]
    %v213 = vld [vmem:[%s1 + $0x2f4] sm:$0xf]
    %v214 = vld [vmem:[%s1 + $0x2f8] sm:$0xf]
    %v215 = vld [vmem:[%s1 + $0x2fc] sm:$0xf]
    %v216 = vld [vmem:[%s1 + $0x300] sm:$0xf]
    %v217 = vld [vmem:[%s1 + $0x304] sm:$0xf]
    %v218 = vld [vmem:[%s1 + $0x308] sm:$0xf]
    %v219 = vld [vmem:[%s1 + $0x30c] sm:$0xf]
    %v220 = vld [vmem:[%s2] sm:$0x1]
    %v222 = vperm.slane %v220, 0
    %225 = vst [vmem:[#allocation1] ss:$9 sm:$0xff] %v22
    %v226 = vld [vmem:[#allocation1] sm:$0xff]
    %v227 = vld [vmem:[#allocation1 + $0x9] sm:$0xff]
    %v228 = vld [vmem:[#allocation1 + $0x12] sm:$0xff]
    %v229 = vld [vmem:[#allocation1 + $0x1b] sm:$0xff]
    %v230 = vld [vmem:[#allocation1 + $0x24] sm:$0xff]
    %v231 = vld [vmem:[#allocation1 + $0x2d] sm:$0xff]
    %v232 = vld [vmem:[#allocation1 + $0x36] sm:$0xff]
    %v233 = vld [vmem:[#allocation1 + $0x3f] sm:$0xff]
    %235 = vst [vmem:[#allocation1] ss:$9 sm:$0xff] %v23
    %v236 = vld [vmem:[#allocation1] sm:$0xff]
    %v237 = vld [vmem:[#allocation1 + $0x9] sm:$0xff]
    %v238 = vld [vmem:[#allocation1 + $0x12] sm:$0xff]
    %v239 = vld [vmem:[#allocation1 + $0x1b] sm:$0xff]
    %v240 = vld [vmem:[#allocation1 + $0x24] sm:$0xff]
    %v449 = vunpack.c.l.b16 %v24
    %v450 = vunpack.c.l.b16 %v25
    %v451 = vunpack.c.l.b16 %v26
    %v452 = vunpack.c.l.b16 %v27
    %v453 = vunpack.c.l.b16 %v28
    %v454 = vunpack.c.l.b16 %v29
    %v455 = vunpack.c.l.b16 %v30
    %v456 = vunpack.c.l.b16 %v31
    %v457 = vunpack.c.l.b16 %v32
    %v458 = vunpack.c.l.b16 %v33
    %v459 = vunpack.c.l.b16 %v34
    %v460 = vunpack.c.l.b16 %v35
    %v461 = vunpack.c.l.b16 %v36
    %v462 = vunpack.c.l.b16 %v37
    %v463 = vunpack.c.l.b16 %v38
    %v464 = vunpack.c.l.b16 %v39
    %v465 = vunpack.c.l.b16 %v40
    %v466 = vunpack.c.l.b16 %v41
    %v467 = vunpack.c.l.b16 %v42
    %v468 = vunpack.c.l.b16 %v43
    %v469 = vunpack.c.l.b16 %v44
    %v470 = vunpack.c.l.b16 %v45
    %v471 = vunpack.c.l.b16 %v46
    %v472 = vunpack.c.l.b16 %v47
    %v473 = vunpack.c.l.b16 %v48
    %v474 = vunpack.c.l.b16 %v49
    %v475 = vunpack.c.l.b16 %v50
    %v476 = vunpack.c.l.b16 %v51
    %v477 = vunpack.c.l.b16 %v52
    %v478 = vunpack.c.l.b16 %v53
    %v479 = vunpack.c.l.b16 %v54
    %v480 = vunpack.c.l.b16 %v55
    %v481 = vunpack.c.l.b16 %v56
    %v482 = vunpack.c.l.b16 %v57
    %v483 = vunpack.c.l.b16 %v58
    %v484 = vunpack.c.l.b16 %v59
    %v485 = vunpack.c.l.b16 %v60
    %v486 = vunpack.c.l.b16 %v61
    %v487 = vunpack.c.l.b16 %v62
    %v488 = vunpack.c.l.b16 %v63
    %v489 = vunpack.c.l.b16 %v64
    %v490 = vunpack.c.l.b16 %v65
    %v491 = vunpack.c.l.b16 %v66
    %v492 = vunpack.c.l.b16 %v67
    %v493 = vunpack.c.l.b16 %v68
    %v494 = vunpack.c.l.b16 %v69
    %v495 = vunpack.c.l.b16 %v70
    %v496 = vunpack.c.l.b16 %v71
    %v497 = vunpack.c.l.b16 %v72
    %v498 = vunpack.c.l.b16 %v73
    %v499 = vunpack.c.l.b16 %v74
    %v500 = vunpack.c.l.b16 %v75
    %v501 = vunpack.c.l.b16 %v76
    %v502 = vunpack.c.l.b16 %v77
    %v503 = vunpack.c.l.b16 %v78
    %v504 = vunpack.c.l.b16 %v79
    %v505 = vunpack.c.l.b16 %v80
    %v506 = vunpack.c.l.b16 %v81
    %v507 = vunpack.c.l.b16 %v82
    %v508 = vunpack.c.l.b16 %v83
    %v509 = vunpack.c.l.b16 %v84
    %v510 = vunpack.c.l.b16 %v85
    %v511 = vunpack.c.l.b16 %v86
    %v512 = vunpack.c.l.b16 %v87
    %v513 = vunpack.c.l.b16 %v88
    %v514 = vunpack.c.l.b16 %v89
    %v515 = vunpack.c.l.b16 %v90
    %v516 = vunpack.c.l.b16 %v91
    %v517 = vunpack.c.l.b16 %v92
    %v518 = vunpack.c.l.b16 %v93
    %v519 = vunpack.c.l.b16 %v94
    %v520 = vunpack.c.l.b16 %v95
    %v521 = vunpack.c.l.b16 %v96
    %v522 = vunpack.c.l.b16 %v97
    %v523 = vunpack.c.l.b16 %v98
    %v524 = vunpack.c.l.b16 %v99
    %v525 = vunpack.c.l.b16 %v100
    %v526 = vunpack.c.l.b16 %v101
    %v527 = vunpack.c.l.b16 %v102
    %v528 = vunpack.c.l.b16 %v103
    %v529 = vunpack.c.l.b16 %v104
    %v530 = vunpack.c.l.b16 %v105
    %v531 = vunpack.c.l.b16 %v106
    %v532 = vunpack.c.l.b16 %v107
    %v533 = vunpack.c.l.b16 %v108
    %v534 = vunpack.c.l.b16 %v109
    %v535 = vunpack.c.l.b16 %v110
    %v536 = vunpack.c.l.b16 %v111
    %v537 = vunpack.c.l.b16 %v112
    %v538 = vunpack.c.l.b16 %v113
    %v539 = vunpack.c.l.b16 %v114
    %v540 = vunpack.c.l.b16 %v115
    %v541 = vunpack.c.l.b16 %v116
    %v542 = vunpack.c.l.b16 %v117
    %v543 = vunpack.c.l.b16 %v118
    %v544 = vunpack.c.l.b16 %v119
    %v545 = vunpack.c.l.b16 %v120
    %v546 = vunpack.c.l.b16 %v121
    %v547 = vunpack.c.l.b16 %v122
    %v548 = vunpack.c.l.b16 %v123
    %v549 = vunpack.c.l.b16 %v124
    %v550 = vunpack.c.l.b16 %v125
    %v551 = vunpack.c.l.b16 %v126
    %v552 = vunpack.c.l.b16 %v127
    %v553 = vunpack.c.l.b16 %v128
    %v554 = vunpack.c.l.b16 %v129
    %v555 = vunpack.c.l.b16 %v130
    %v556 = vunpack.c.l.b16 %v131
    %v557 = vunpack.c.l.b16 %v132
    %v558 = vunpack.c.l.b16 %v133
    %v559 = vunpack.c.l.b16 %v134
    %v560 = vunpack.c.l.b16 %v135
    %v561 = vunpack.c.l.b16 %v136
    %v562 = vunpack.c.l.b16 %v137
    %v563 = vunpack.c.l.b16 %v138
    %v564 = vunpack.c.l.b16 %v139
    %v565 = vunpack.c.l.b16 %v140
    %v566 = vunpack.c.l.b16 %v141
    %v567 = vunpack.c.l.b16 %v142
    %v568 = vunpack.c.l.b16 %v143
    %v569 = vunpack.c.l.b16 %v144
    %v570 = vunpack.c.l.b16 %v145
    %v571 = vunpack.c.l.b16 %v146
    %v572 = vunpack.c.l.b16 %v147
    %v573 = vunpack.c.l.b16 %v148
    %v574 = vunpack.c.l.b16 %v149
    %v575 = vunpack.c.l.b16 %v150
    %v576 = vunpack.c.l.b16 %v151
    %v577 = vunpack.c.l.b16 %v152
    %v578 = vunpack.c.l.b16 %v153
    %v579 = vunpack.c.l.b16 %v154
    %v580 = vunpack.c.l.b16 %v155
    %v581 = vunpack.c.l.b16 %v156
    %v582 = vunpack.c.l.b16 %v157
    %v583 = vunpack.c.l.b16 %v158
    %v584 = vunpack.c.l.b16 %v159
    %v585 = vunpack.c.l.b16 %v160
    %v586 = vunpack.c.l.b16 %v161
    %v587 = vunpack.c.l.b16 %v162
    %v588 = vunpack.c.l.b16 %v163
    %v589 = vunpack.c.l.b16 %v164
    %v590 = vunpack.c.l.b16 %v165
    %v591 = vunpack.c.l.b16 %v166
    %v592 = vunpack.c.l.b16 %v167
    %v593 = vunpack.c.l.b16 %v168
    %v594 = vunpack.c.l.b16 %v169
    %v595 = vunpack.c.l.b16 %v170
    %v596 = vunpack.c.l.b16 %v171
    %v597 = vunpack.c.l.b16 %v172
    %v598 = vunpack.c.l.b16 %v173
    %v599 = vunpack.c.l.b16 %v174
    %v600 = vunpack.c.l.b16 %v175
    %v601 = vunpack.c.l.b16 %v176
    %v602 = vunpack.c.l.b16 %v177
    %v603 = vunpack.c.l.b16 %v178
    %v604 = vunpack.c.l.b16 %v179
    %v605 = vunpack.c.l.b16 %v180
    %v606 = vunpack.c.l.b16 %v181
    %v607 = vunpack.c.l.b16 %v182
    %v608 = vunpack.c.l.b16 %v183
    %v609 = vunpack.c.l.b16 %v184
    %v610 = vunpack.c.l.b16 %v185
    %v611 = vunpack.c.l.b16 %v186
    %v612 = vunpack.c.l.b16 %v187
    %v613 = vunpack.c.l.b16 %v188
    %v614 = vunpack.c.l.b16 %v189
    %v615 = vunpack.c.l.b16 %v190
    %v616 = vunpack.c.l.b16 %v191
    %v617 = vunpack.c.l.b16 %v192
    %v618 = vunpack.c.l.b16 %v193
    %v619 = vunpack.c.l.b16 %v194
    %v620 = vunpack.c.l.b16 %v195
    %v621 = vunpack.c.l.b16 %v196
    %v622 = vunpack.c.l.b16 %v197
    %v623 = vunpack.c.l.b16 %v198
    %v624 = vunpack.c.l.b16 %v199
    %v625 = vunpack.c.l.b16 %v200
    %v626 = vunpack.c.l.b16 %v201
    %v627 = vunpack.c.l.b16 %v202
    %v628 = vunpack.c.l.b16 %v203
    %v629 = vunpack.c.l.b16 %v204
    %v630 = vunpack.c.l.b16 %v205
    %v631 = vunpack.c.l.b16 %v206
    %v632 = vunpack.c.l.b16 %v207
    %v633 = vunpack.c.l.b16 %v208
    %v634 = vunpack.c.l.b16 %v209
    %v635 = vunpack.c.l.b16 %v210
    %v636 = vunpack.c.l.b16 %v211
    %v637 = vunpack.c.l.b16 %v212
    %v638 = vunpack.c.l.b16 %v213
    %v639 = vunpack.c.l.b16 %v214
    %v640 = vunpack.c.l.b16 %v215
    %v641 = vunpack.c.l.b16 %v216
    %v642 = vunpack.c.l.b16 %v217
    %v643 = vunpack.c.l.b16 %v218
    %v644 = vunpack.c.l.b16 %v219
    %v645 = vpack.c.b16 %v450, %v449
    %v646 = vpack.c.b16 %v452, %v451
    %v647 = vpack.c.b16 %v454, %v453
    %v648 = vpack.c.b16 %v456, %v455
    %v649 = vpack.c.b16 %v458, %v457
    %v650 = vpack.c.b16 %v460, %v459
    %v651 = vpack.c.b16 %v462, %v461
    %v652 = vpack.c.b16 %v464, %v463
    %v653 = vpack.c.b16 %v466, %v465
    %v654 = vpack.c.b16 %v468, %v467
    %v655 = vpack.c.b16 %v470, %v469
    %v656 = vpack.c.b16 %v472, %v471
    %v657 = vpack.c.b16 %v474, %v473
    %v658 = vpack.c.b16 %v476, %v475
    %v659 = vpack.c.b16 %v478, %v477
    %v660 = vpack.c.b16 %v480, %v479
    %v661 = vpack.c.b16 %v482, %v481
    %v662 = vpack.c.b16 %v484, %v483
    %v663 = vpack.c.b16 %v486, %v485
    %v664 = vpack.c.b16 %v488, %v487
    %v665 = vpack.c.b16 %v490, %v489
    %v666 = vpack.c.b16 %v492, %v491
    %v667 = vpack.c.b16 %v494, %v493
    %v668 = vpack.c.b16 %v496, %v495
    %v669 = vpack.c.b16 %v498, %v497
    %v670 = vpack.c.b16 %v500, %v499
    %v671 = vpack.c.b16 %v502, %v501
    %v672 = vpack.c.b16 %v504, %v503
    %v673 = vpack.c.b16 %v506, %v505
    %v674 = vpack.c.b16 %v508, %v507
    %v675 = vpack.c.b16 %v510, %v509
    %v676 = vpack.c.b16 %v512, %v511
    %v677 = vpack.c.b16 %v514, %v513
    %v678 = vpack.c.b16 %v516, %v515
    %v679 = vpack.c.b16 %v518, %v517
    %v680 = vpack.c.b16 %v520, %v519
    %v681 = vpack.c.b16 %v522, %v521
    %v682 = vpack.c.b16 %v524, %v523
    %v683 = vpack.c.b16 %v526, %v525
    %v684 = vpack.c.b16 %v528, %v527
    %v685 = vpack.c.b16 %v530, %v529
    %v686 = vpack.c.b16 %v532, %v531
    %v687 = vpack.c.b16 %v534, %v533
    %v688 = vpack.c.b16 %v536, %v535
    %v689 = vpack.c.b16 %v538, %v537
    %v690 = vpack.c.b16 %v540, %v539
    %v691 = vpack.c.b16 %v542, %v541
    %v692 = vpack.c.b16 %v544, %v543
    %v693 = vpack.c.b16 %v546, %v545
    %v694 = vpack.c.b16 %v548, %v547
    %v695 = vpack.c.b16 %v550, %v549
    %v696 = vpack.c.b16 %v552, %v551
    %v697 = vpack.c.b16 %v554, %v553
    %v698 = vpack.c.b16 %v556, %v555
    %v699 = vpack.c.b16 %v558, %v557
    %v700 = vpack.c.b16 %v560, %v559
    %v701 = vpack.c.b16 %v562, %v561
    %v702 = vpack.c.b16 %v564, %v563
    %v703 = vpack.c.b16 %v566, %v565
    %v704 = vpack.c.b16 %v568, %v567
    %v705 = vpack.c.b16 %v570, %v569
    %v706 = vpack.c.b16 %v572, %v571
    %v707 = vpack.c.b16 %v574, %v573
    %v708 = vpack.c.b16 %v576, %v575
    %v709 = vpack.c.b16 %v578, %v577
    %v710 = vpack.c.b16 %v580, %v579
    %v711 = vpack.c.b16 %v582, %v581
    %v712 = vpack.c.b16 %v584, %v583
    %v713 = vpack.c.b16 %v586, %v585
    %v714 = vpack.c.b16 %v588, %v587
    %v715 = vpack.c.b16 %v590, %v589
    %v716 = vpack.c.b16 %v592, %v591
    %v717 = vpack.c.b16 %v594, %v593
    %v718 = vpack.c.b16 %v596, %v595
    %v719 = vpack.c.b16 %v598, %v597
    %v720 = vpack.c.b16 %v600, %v599
    %v721 = vpack.c.b16 %v602, %v601
    %v722 = vpack.c.b16 %v604, %v603
    %v723 = vpack.c.b16 %v606, %v605
    %v724 = vpack.c.b16 %v608, %v607
    %v725 = vpack.c.b16 %v610, %v609
    %v726 = vpack.c.b16 %v612, %v611
    %v727 = vpack.c.b16 %v614, %v613
    %v728 = vpack.c.b16 %v616, %v615
    %v729 = vpack.c.b16 %v618, %v617
    %v730 = vpack.c.b16 %v620, %v619
    %v731 = vpack.c.b16 %v622, %v621
    %v732 = vpack.c.b16 %v624, %v623
    %v733 = vpack.c.b16 %v626, %v625
    %v734 = vpack.c.b16 %v628, %v627
    %v735 = vpack.c.b16 %v630, %v629
    %v736 = vpack.c.b16 %v632, %v631
    %v737 = vpack.c.b16 %v634, %v633
    %v738 = vpack.c.b16 %v636, %v635
    %v739 = vpack.c.b16 %v638, %v637
    %v740 = vpack.c.b16 %v640, %v639
    %v741 = vpack.c.b16 %v642, %v641
    %v742 = vpack.c.b16 %v644, %v643
    %vm841 = vcmask 261120
    %v842 = vsel %vm841, %v240, 0
    %844 = vmatpush.bf16.msra.mxu0 %v652
    %845 = vmatpush.bf16.msra.mxu0 %v651
    %846 = vmatpush.bf16.msra.mxu0 %v650
    %847 = vmatpush.bf16.msra.mxu0 %v649
    %848 = vmatpush.bf16.msra.mxu0 %v648
    %849 = vmatpush.bf16.msra.mxu0 %v647
    %850 = vmatpush.bf16.msra.mxu0 %v646
    %851 = vmatpush.bf16.msra.mxu0 %v645
    %852 = vmatmul.bf16.gmra.mxu0 %v226
    %v853 = vpop.f32.mrf.mxu0
    %v854 = vadd.f32 %v222, %v853
    %v855 = vpop.f32.mrf.mxu0
    %856 = vdwg.mxu0
    %857 = vmatpush.bf16.msra.mxu0 %v660
    %858 = vmatpush.bf16.msra.mxu0 %v659
    %859 = vmatpush.bf16.msra.mxu0 %v658
    %860 = vmatpush.bf16.msra.mxu0 %v657
    %861 = vmatpush.bf16.msra.mxu0 %v656
    %862 = vmatpush.bf16.msra.mxu0 %v655
    %863 = vmatpush.bf16.msra.mxu0 %v654
    %864 = vmatpush.bf16.msra.mxu0 %v653
    %865 = vmatmul.bf16.gmra.mxu0 %v227
    %v866 = vpop.f32.mrf.mxu0
    %v867 = vadd.f32 %v854, %v866
    %v868 = vpop.f32.mrf.mxu0
    %869 = vdwg.mxu0
    %870 = vmatpush.bf16.msra.mxu0 %v668
    %871 = vmatpush.bf16.msra.mxu0 %v667
    %872 = vmatpush.bf16.msra.mxu0 %v666
    %873 = vmatpush.bf16.msra.mxu0 %v665
    %874 = vmatpush.bf16.msra.mxu0 %v664
    %875 = vmatpush.bf16.msra.mxu0 %v663
    %876 = vmatpush.bf16.msra.mxu0 %v662
    %877 = vmatpush.bf16.msra.mxu0 %v661
    %878 = vmatmul.bf16.gmra.mxu0 %v228
    %v879 = vpop.f32.mrf.mxu0
    %v880 = vadd.f32 %v867, %v879
    %v881 = vpop.f32.mrf.mxu0
    %882 = vdwg.mxu0
    %883 = vmatpush.bf16.msra.mxu0 %v676
    %884 = vmatpush.bf16.msra.mxu0 %v675
    %885 = vmatpush.bf16.msra.mxu0 %v674
    %886 = vmatpush.bf16.msra.mxu0 %v673
    %887 = vmatpush.bf16.msra.mxu0 %v672
    %888 = vmatpush.bf16.msra.mxu0 %v671
    %889 = vmatpush.bf16.msra.mxu0 %v670
    %890 = vmatpush.bf16.msra.mxu0 %v669
    %891 = vmatmul.bf16.gmra.mxu0 %v229
    %v892 = vpop.f32.mrf.mxu0
    %v893 = vadd.f32 %v880, %v892
    %v894 = vpop.f32.mrf.mxu0
    %895 = vdwg.mxu0
    %896 = vmatpush.bf16.msra.mxu0 %v684
    %897 = vmatpush.bf16.msra.mxu0 %v683
    %898 = vmatpush.bf16.msra.mxu0 %v682
    %899 = vmatpush.bf16.msra.mxu0 %v681
    %900 = vmatpush.bf16.msra.mxu0 %v680
    %901 = vmatpush.bf16.msra.mxu0 %v679
    %902 = vmatpush.bf16.msra.mxu0 %v678
    %903 = vmatpush.bf16.msra.mxu0 %v677
    %904 = vmatmul.bf16.gmra.mxu0 %v230
    %v905 = vpop.f32.mrf.mxu0
    %v906 = vadd.f32 %v893, %v905
    %v907 = vpop.f32.mrf.mxu0
    %908 = vdwg.mxu0
    %909 = vmatpush.bf16.msra.mxu0 %v692
    %910 = vmatpush.bf16.msra.mxu0 %v691
    %911 = vmatpush.bf16.msra.mxu0 %v690
    %912 = vmatpush.bf16.msra.mxu0 %v689
    %913 = vmatpush.bf16.msra.mxu0 %v688
    %914 = vmatpush.bf16.msra.mxu0 %v687
    %915 = vmatpush.bf16.msra.mxu0 %v686
    %916 = vmatpush.bf16.msra.mxu0 %v685
    %917 = vmatmul.bf16.gmra.mxu0 %v231
    %v918 = vpop.f32.mrf.mxu0
    %v919 = vadd.f32 %v906, %v918
    %v920 = vpop.f32.mrf.mxu0
    %921 = vdwg.mxu0
    %922 = vmatpush.bf16.msra.mxu0 %v700
    %923 = vmatpush.bf16.msra.mxu0 %v699
    %924 = vmatpush.bf16.msra.mxu0 %v698
    %925 = vmatpush.bf16.msra.mxu0 %v697
    %926 = vmatpush.bf16.msra.mxu0 %v696
    %927 = vmatpush.bf16.msra.mxu0 %v695
    %928 = vmatpush.bf16.msra.mxu0 %v694
    %929 = vmatpush.bf16.msra.mxu0 %v693
    %930 = vmatmul.bf16.gmra.mxu0 %v232
    %v931 = vpop.f32.mrf.mxu0
    %v932 = vadd.f32 %v919, %v931
    %v933 = vpop.f32.mrf.mxu0
    %934 = vdwg.mxu0
    %935 = vmatpush.bf16.msra.mxu0 %v708
    %936 = vmatpush.bf16.msra.mxu0 %v707
    %937 = vmatpush.bf16.msra.mxu0 %v706
    %938 = vmatpush.bf16.msra.mxu0 %v705
    %939 = vmatpush.bf16.msra.mxu0 %v704
    %940 = vmatpush.bf16.msra.mxu0 %v703
    %941 = vmatpush.bf16.msra.mxu0 %v702
    %942 = vmatpush.bf16.msra.mxu0 %v701
    %943 = vmatmul.bf16.gmra.mxu0 %v233
    %v944 = vpop.f32.mrf.mxu0
    %v945 = vadd.f32 %v932, %v944
    %v946 = vpop.f32.mrf.mxu0
    %947 = vdwg.mxu0
    %948 = vmatpush.bf16.msra.mxu0 %v716
    %949 = vmatpush.bf16.msra.mxu0 %v715
    %950 = vmatpush.bf16.msra.mxu0 %v714
    %951 = vmatpush.bf16.msra.mxu0 %v713
    %952 = vmatpush.bf16.msra.mxu0 %v712
    %953 = vmatpush.bf16.msra.mxu0 %v711
    %954 = vmatpush.bf16.msra.mxu0 %v710
    %955 = vmatpush.bf16.msra.mxu0 %v709
    %956 = vmatmul.bf16.gmra.mxu0 %v236
    %v957 = vpop.f32.mrf.mxu0
    %v958 = vadd.f32 %v945, %v957
    %v959 = vpop.f32.mrf.mxu0
    %960 = vdwg.mxu0
    %961 = vmatpush.bf16.msra.mxu0 %v724
    %962 = vmatpush.bf16.msra.mxu0 %v723
    %963 = vmatpush.bf16.msra.mxu0 %v722
    %964 = vmatpush.bf16.msra.mxu0 %v721
    %965 = vmatpush.bf16.msra.mxu0 %v720
    %966 = vmatpush.bf16.msra.mxu0 %v719
    %967 = vmatpush.bf16.msra.mxu0 %v718
    %968 = vmatpush.bf16.msra.mxu0 %v717
    %969 = vmatmul.bf16.gmra.mxu0 %v237
    %v970 = vpop.f32.mrf.mxu0
    %v971 = vadd.f32 %v958, %v970
    %v972 = vpop.f32.mrf.mxu0
    %973 = vdwg.mxu0
    %974 = vmatpush.bf16.msra.mxu0 %v732
    %975 = vmatpush.bf16.msra.mxu0 %v731
    %976 = vmatpush.bf16.msra.mxu0 %v730
    %977 = vmatpush.bf16.msra.mxu0 %v729
    %978 = vmatpush.bf16.msra.mxu0 %v728
    %979 = vmatpush.bf16.msra.mxu0 %v727
    %980 = vmatpush.bf16.msra.mxu0 %v726
    %981 = vmatpush.bf16.msra.mxu0 %v725
    %982 = vmatmul.bf16.gmra.mxu0 %v238
    %v983 = vpop.f32.mrf.mxu0
    %v984 = vadd.f32 %v971, %v983
    %v985 = vpop.f32.mrf.mxu0
    %986 = vdwg.mxu0
    %987 = vmatpush.bf16.msra.mxu0 %v740
    %988 = vmatpush.bf16.msra.mxu0 %v739
    %989 = vmatpush.bf16.msra.mxu0 %v738
    %990 = vmatpush.bf16.msra.mxu0 %v737
    %991 = vmatpush.bf16.msra.mxu0 %v736
    %992 = vmatpush.bf16.msra.mxu0 %v735
    %993 = vmatpush.bf16.msra.mxu0 %v734
    %994 = vmatpush.bf16.msra.mxu0 %v733
    %995 = vmatmul.bf16.gmra.mxu0 %v239
    %v996 = vpop.f32.mrf.mxu0
    %v997 = vadd.f32 %v984, %v996
    %v998 = vpop.f32.mrf.mxu0
    %999 = vdwg.mxu0
    %1000 = vmatpush.bf16.msra.mxu0 0
    %1001 = vmatpush.bf16.msra.mxu0 0
    %1002 = vmatpush.bf16.msra.mxu0 0
    %1003 = vmatpush.bf16.msra.mxu0 0
    %1004 = vmatpush.bf16.msra.mxu0 0
    %1005 = vmatpush.bf16.msra.mxu0 0
    %1006 = vmatpush.bf16.msra.mxu0 %v742
    %1007 = vmatpush.bf16.msra.mxu0 %v741
    %1008 = vmatmul.bf16.gmra.mxu0 %v842
    %v1009 = vpop.f32.mrf.mxu0
    %v1010 = vadd.f32 %v997, %v1009
    %v1011 = vpop.f32.mrf.mxu0
    %1012 = vdwg.mxu0
    %v1013 = vmax.f32 %v1010, 0.0
    %v1014 = vpack.c.bf16 %v1013, %v1013
    %v1015 = vld [vmem:[%s3] sm:$0xf]
    %v1016 = vld [vmem:[%s3 + $0x4] sm:$0xf]
    %v1017 = vld [vmem:[%s3 + $0x8] sm:$0xf]
    %v1018 = vld [vmem:[%s3 + $0xc] sm:$0xf]
    %v1019 = vld [vmem:[%s3 + $0x10] sm:$0xf]
    %v1020 = vld [vmem:[%s3 + $0x14] sm:$0xf]
    %v1021 = vld [vmem:[%s3 + $0x18] sm:$0xf]
    %v1022 = vld [vmem:[%s3 + $0x1c] sm:$0xf]
    %v1023 = vld [vmem:[%s4] sm:$0x1]
    %v1025 = vperm.slane %v1023, 0
    %v1035 = vunpack.c.l.b16 %v1015
    %v1036 = vunpack.c.l.b16 %v1016
    %v1037 = vunpack.c.l.b16 %v1017
    %v1038 = vunpack.c.l.b16 %v1018
    %v1039 = vunpack.c.l.b16 %v1019
    %v1040 = vunpack.c.l.b16 %v1020
    %v1041 = vunpack.c.l.b16 %v1021
    %v1042 = vunpack.c.l.b16 %v1022
    %v1043 = vpack.c.b16 %v1036, %v1035
    %v1044 = vpack.c.b16 %v1038, %v1037
    %v1045 = vpack.c.b16 %v1040, %v1039
    %v1046 = vpack.c.b16 %v1042, %v1041
    %vm1051 = vcmask 523264
    %v1053 = vsel %vm1051, %v1014, 0
    %1055 = vmatpush.bf16.msra.mxu0 0
    %1056 = vmatpush.bf16.msra.mxu0 0
    %1057 = vmatpush.bf16.msra.mxu0 0
    %1058 = vmatpush.bf16.msra.mxu0 0
    %1059 = vmatpush.bf16.msra.mxu0 %v1046
    %1060 = vmatpush.bf16.msra.mxu0 %v1045
    %1061 = vmatpush.bf16.msra.mxu0 %v1044
    %1062 = vmatpush.bf16.msra.mxu0 %v1043
    %1063 = vmatmul.bf16.gmra.mxu0 %v1053
    %v1064 = vpop.f32.mrf.mxu0
    %v1065 = vadd.f32 %v1025, %v1064
    %v1066 = vpop.f32.mrf.mxu0
    %1067 = vdwg.mxu0
    %vm1068 = vcmask 17408
    %1069 = vst.msk [vmem:[#allocation2] sm:$0x3] %vm1068, %v1065
    // Predicated region
    $region22: #{mycnn_forward.5} parent=1 // pred_check
      _
    $region23: #{mycnn_forward.5} parent=1 // pred_check_branch
      %1071 = sbr.rel (0) target = $region25
    $region24: #{mycnn_forward.5} parent=1 // pred_region
      %1073 = vsyncadd [#allocation3], 0
      %s1075 = sshll.u32 [#allocation2], 4
      %s1076 = int_to_ptr.vmem [resolvable:$true] %s1075
      %s1077 = sshll.u32 %s5, 4
      %s1078 = int_to_ptr.hbm [resolvable:$true] %s1077
      %1080 = dma.vmem_to_hbm [thread:$0]  %s1076, 32, %s1078, [#allocation3]
    $region25: #{mycnn_forward.5} parent=1 // pred_fallthru
      _
    // Predicated region
    $region26: #{mycnn_forward.5} parent=1 // pred_check
      _
    $region27: #{mycnn_forward.5} parent=1 // pred_check_branch
      %1082 = sbr.rel (0) target = $region29
    $region28: #{mycnn_forward.5} parent=1 // pred_region
      %1084 = dma.done [#allocation3], 32
    $region29: #{mycnn_forward.5} parent=1 // pred_fallthru
      _
    %1085 = vsyncpa [#allocation3], 1

</llo_original>
